<compile_context>
chip_gen: v7x
topology: tpu7x:2x2x1
jax: 0.10.0
libtpu: 0.0.40
codegen_flags: <defaults>
</compile_context>

<pallas_src>
import jax
import jax.numpy as jnp
from jax.experimental import pallas as pl
from jax.experimental.pallas import tpu as pltpu


def _round_up(n, m):
    return ((n + m - 1) // m) * m


def _bf16_elementwise_ok():
    """bf16 VALU exists on v6e/v7x; keep f32 elementwise elsewhere (v5e & older)."""
    try:
        kind = jax.devices()[0].device_kind.lower()
    except Exception:
        return False
    return any(s in kind for s in ("v6", "v7", "7x"))


def _choose_batch_tile(B, block_batch):
    TB = min(block_batch, _round_up(B, 8))
    # Ensure >= 2 grid steps once B is large enough so both v7x TCs get work.
    if B >= 256:
        TB = min(TB, max(128, _round_up(pl.cdiv(B, 2), 128)))
    return max(TB, 8)


def _make_kernel(use_bf16_ew):
    ew = jnp.bfloat16 if use_bf16_ew else jnp.float32

    def kernel(x_ref,
               w0_ref, b0_ref,
               w1_ref, b1_ref,
               w2_ref, b2_ref,
               w3_ref, b3_ref,
               o_ref):
        # Cast the f32 x tile to bf16 once, in-VMEM (no wrapper-side HBM pass).
        h = x_ref[...].astype(jnp.bfloat16)

        def layer(h_in, w_ref, b_ref):
            # Linear + LeakyReLU(0.2); Dropout = identity (inference).
            d = jnp.dot(h_in, w_ref[...], preferred_element_type=jnp.float32)
            d = d.astype(ew) + b_ref[...].astype(ew)
            d = jnp.maximum(d, 0.2 * d)          # LeakyReLU via max (2 VPU ops)
            return d.astype(jnp.bfloat16)        # operand dtype for next MXU dot

        h = layer(h, w0_ref, b0_ref)   # 784  -> 1024
        h = layer(h, w1_ref, b1_ref)   # 1024 -> 512
        h = layer(h, w2_ref, b2_ref)   # 512  -> 256

        # out: Linear(256 -> 1) + Sigmoid.  N=1 matmul would waste the MXU, so
        # do a VPU multiply + XLU lane reduction instead (w3 is a (1,256) row).
        hf = h.astype(jnp.float32)
        w3_row = w3_ref[...].astype(jnp.float32)                 # (1, 256)
        z = jnp.sum(hf * w3_row, axis=-1, keepdims=True) + b3_ref[...]
        o_ref[...] = jax.nn.sigmoid(z).astype(o_ref.dtype)

    return kernel


def discriminator_forward(x, params, *, block_batch=512, use_bf16_ew=None):
    """x: (B, 784) float32.  params: 4 x (W bf16 (in,out) [W3 as (1,256)], b f32 (1,out)).

    Returns (B, 1) float32 probabilities.
    """
    (w0, b0), (w1, b1), (w2, b2), (w3, b3) = params
    B = x.shape[0]
    if use_bf16_ew is None:
        use_bf16_ew = _bf16_elementwise_ok()

    TB = _choose_batch_tile(B, block_batch)
    grid = (pl.cdiv(B, TB),)

    # Constant-index weight/bias specs: fetched once, VMEM-resident across the
    # whole batch loop.
    def const_spec(shape):
        return pl.BlockSpec(shape, lambda i: (0, 0))

    in_specs = [
        pl.BlockSpec((TB, 784), lambda i: (i, 0)),            # x tile (f32)
        const_spec((784, 1024)), const_spec((1, 1024)),       # w0, b0
        const_spec((1024, 512)), const_spec((1, 512)),        # w1, b1
        const_spec((512, 256)),  const_spec((1, 256)),        # w2, b2
        const_spec((1, 256)),    const_spec((1, 1)),          # w3 (row), b3
    ]
    out_specs = pl.BlockSpec((TB, 1), lambda i: (i, 0))

    flops = 2 * B * (784 * 1024 + 1024 * 512 + 512 * 256 + 256)
    weight_bytes = 2 * (784 * 1024 + 1024 * 512 + 512 * 256 + 256)  # bf16
    bytes_accessed = B * 784 * 4 + weight_bytes + B * 1 * 4

    out = pl.pallas_call(
        _make_kernel(use_bf16_ew),
        out_shape=jax.ShapeDtypeStruct((B, 1), jnp.float32),
        grid_spec=pltpu.PrefetchScalarGridSpec(
            num_scalar_prefetch=0,
            grid=grid,
            in_specs=in_specs,
            out_specs=out_specs,
        ),
        compiler_params=pltpu.CompilerParams(
            dimension_semantics=("parallel",),
            vmem_limit_bytes=48 * 1024 * 1024,
        ),
        cost_estimate=pl.CostEstimate(
            flops=flops, transcendentals=B, bytes_accessed=bytes_accessed),
    )(x, w0, b0, w1, b1, w2, b2, w3, b3)

    return out


def init_params(key):
    """PyTorch nn.Linear-style init (U(-k, k), k=1/sqrt(fan_in)).

    Weights stored bf16 (matmul operands), biases f32.  The last layer's
    weight is stored as a (1, 256) row for the VPU reduce.
    """
    dims = [(784, 1024), (1024, 512), (512, 256), (256, 1)]
    params = []
    for i, (fan_in, fan_out) in enumerate(dims):
        kw, kb, key = jax.random.split(key, 3)
        bound = 1.0 / (fan_in ** 0.5)
        w = jax.random.uniform(kw, (fan_in, fan_out), jnp.float32, -bound, bound)
        b = jax.random.uniform(kb, (1, fan_out), jnp.float32, -bound, bound)
        if i == 3:
            w = w.T  # (1, 256) row for the final VPU dot
        params.append((w.astype(jnp.bfloat16), b))
    return params


def _ref_forward(x, params, use_bf16_ew):
    """Pure-JAX reference mirroring the kernel's numerics."""
    (w0, b0), (w1, b1), (w2, b2), (w3, b3) = params
    ew = jnp.bfloat16 if use_bf16_ew else jnp.float32
    hp = jax.lax.Precision.HIGHEST

    def layer(h, w, b):
        hb = h.astype(jnp.bfloat16).astype(jnp.float32)
        d = jnp.dot(hb, w.astype(jnp.float32), precision=hp)
        d = d.astype(ew) + b.astype(ew)
        return jnp.maximum(d, 0.2 * d)

    h = layer(x, w0, b0)
    h = layer(h, w1, b1)
    h = layer(h, w2, b2)
    hf = h.astype(jnp.bfloat16).astype(jnp.float32)
    z = jnp.sum(hf * w3.astype(jnp.float32), axis=-1, keepdims=True) + b3
    return jax.nn.sigmoid(z)


if __name__ == "__main__":
    key = jax.random.PRNGKey(0)
    k_x, k_p = jax.random.split(key)

    B = 8  # small batch for the demo
    x = jax.random.normal(k_x, (B, 784), dtype=jnp.float32)
    params = init_params(k_p)

    use_bf16_ew = _bf16_elementwise_ok()
    out = discriminator_forward(x, params, use_bf16_ew=use_bf16_ew)
    out = jax.block_until_ready(out)

    assert out.shape == (B, 1), out.shape
    assert bool(jnp.all((out >= 0.0) & (out <= 1.0))), "sigmoid range violated"

    ref_out = _ref_forward(x, params, use_bf16_ew)
    max_err = float(jnp.max(jnp.abs(out - ref_out)))
    assert jnp.allclose(out, ref_out, atol=2e-2, rtol=2e-2), max_err

    print("KERNEL_OK")
</pallas_src>

<mosaic_0001>
module attributes {stable_mosaic.version = 11 : i64} {
  func.func @kernel(%arg0: i32, %arg1: memref<8x784xf32, #tpu.memory_space<vmem>>, %arg2: memref<784x1024xbf16, #tpu.memory_space<vmem>>, %arg3: memref<1x1024xf32, #tpu.memory_space<vmem>>, %arg4: memref<1024x512xbf16, #tpu.memory_space<vmem>>, %arg5: memref<1x512xf32, #tpu.memory_space<vmem>>, %arg6: memref<512x256xbf16, #tpu.memory_space<vmem>>, %arg7: memref<1x256xf32, #tpu.memory_space<vmem>>, %arg8: memref<1x256xbf16, #tpu.memory_space<vmem>>, %arg9: memref<1x1xf32, #tpu.memory_space<vmem>>, %arg10: memref<8x1xf32, #tpu.memory_space<vmem>>) attributes {dimension_semantics = [#tpu.dimension_semantics<parallel>], iteration_bounds = array<i64: 1>, scalar_prefetch = 0 : i64, scratch_operands = 0 : i64, tpu.core_type = #tpu.core_type<tc>, window_params = [{transform_indices = @transform_0, window_bounds = array<i64: 8, 784>}, {pipeline_mode = #tpu.pipeline_mode<synchronous>, transform_indices = @transform_1, window_bounds = array<i64: 784, 1024>}, {pipeline_mode = #tpu.pipeline_mode<synchronous>, transform_indices = @transform_2, window_bounds = array<i64: 1, 1024>}, {pipeline_mode = #tpu.pipeline_mode<synchronous>, transform_indices = @transform_3, window_bounds = array<i64: 1024, 512>}, {pipeline_mode = #tpu.pipeline_mode<synchronous>, transform_indices = @transform_4, window_bounds = array<i64: 1, 512>}, {pipeline_mode = #tpu.pipeline_mode<synchronous>, transform_indices = @transform_5, window_bounds = array<i64: 512, 256>}, {pipeline_mode = #tpu.pipeline_mode<synchronous>, transform_indices = @transform_6, window_bounds = array<i64: 1, 256>}, {pipeline_mode = #tpu.pipeline_mode<synchronous>, transform_indices = @transform_7, window_bounds = array<i64: 1, 256>}, {pipeline_mode = #tpu.pipeline_mode<synchronous>, transform_indices = @transform_8, window_bounds = array<i64: 1, 1>}, {transform_indices = @transform_9, window_bounds = array<i64: 8, 1>}]} {
    %c0 = arith.constant 0 : index
    %c0_0 = arith.constant 0 : index
    %0 = vector.load %arg1[%c0, %c0_0] : memref<8x784xf32, #tpu.memory_space<vmem>>, vector<8x784xf32>
    %1 = arith.truncf %0 : vector<8x784xf32> to vector<8x784xbf16>
    %c0_1 = arith.constant 0 : index
    %c0_2 = arith.constant 0 : index
    %2 = vector.load %arg2[%c0_1, %c0_2] : memref<784x1024xbf16, #tpu.memory_space<vmem>>, vector<784x1024xbf16>
    %cst = arith.constant dense<0.000000e+00> : vector<8x1024xf32>
    %3 = tpu.matmul %1, %2, %cst {dimension_numbers = #tpu.dot_dimension_numbers<[1], [0], [0], [1], [0, 0, 1, 1], [], []>} : vector<8x784xbf16>, vector<784x1024xbf16>, vector<8x1024xf32> -> vector<8x1024xf32>
    %c0_3 = arith.constant 0 : index
    %c0_4 = arith.constant 0 : index
    %4 = vector.load %arg3[%c0_3, %c0_4] : memref<1x1024xf32, #tpu.memory_space<vmem>>, vector<1x1024xf32>
    %5 = vector.broadcast %4 : vector<1x1024xf32> to vector<8x1024xf32>
    %6 = arith.addf %3, %5 : vector<8x1024xf32>
    %cst_5 = arith.constant 2.000000e-01 : f32
    %7 = vector.broadcast %cst_5 : f32 to vector<8x1024xf32>
    %8 = arith.mulf %7, %6 : vector<8x1024xf32>
    %9 = arith.maximumf %6, %8 : vector<8x1024xf32>
    %10 = arith.truncf %9 : vector<8x1024xf32> to vector<8x1024xbf16>
    %c0_6 = arith.constant 0 : index
    %c0_7 = arith.constant 0 : index
    %11 = vector.load %arg4[%c0_6, %c0_7] : memref<1024x512xbf16, #tpu.memory_space<vmem>>, vector<1024x512xbf16>
    %cst_8 = arith.constant dense<0.000000e+00> : vector<8x512xf32>
    %12 = tpu.matmul %10, %11, %cst_8 {dimension_numbers = #tpu.dot_dimension_numbers<[1], [0], [0], [1], [0, 0, 1, 1], [], []>} : vector<8x1024xbf16>, vector<1024x512xbf16>, vector<8x512xf32> -> vector<8x512xf32>
    %c0_9 = arith.constant 0 : index
    %c0_10 = arith.constant 0 : index
    %13 = vector.load %arg5[%c0_9, %c0_10] : memref<1x512xf32, #tpu.memory_space<vmem>>, vector<1x512xf32>
    %14 = vector.broadcast %13 : vector<1x512xf32> to vector<8x512xf32>
    %15 = arith.addf %12, %14 : vector<8x512xf32>
    %cst_11 = arith.constant 2.000000e-01 : f32
    %16 = vector.broadcast %cst_11 : f32 to vector<8x512xf32>
    %17 = arith.mulf %16, %15 : vector<8x512xf32>
    %18 = arith.maximumf %15, %17 : vector<8x512xf32>
    %19 = arith.truncf %18 : vector<8x512xf32> to vector<8x512xbf16>
    %c0_12 = arith.constant 0 : index
    %c0_13 = arith.constant 0 : index
    %20 = vector.load %arg6[%c0_12, %c0_13] : memref<512x256xbf16, #tpu.memory_space<vmem>>, vector<512x256xbf16>
    %cst_14 = arith.constant dense<0.000000e+00> : vector<8x256xf32>
    %21 = tpu.matmul %19, %20, %cst_14 {dimension_numbers = #tpu.dot_dimension_numbers<[1], [0], [0], [1], [0, 0, 1, 1], [], []>} : vector<8x512xbf16>, vector<512x256xbf16>, vector<8x256xf32> -> vector<8x256xf32>
    %c0_15 = arith.constant 0 : index
    %c0_16 = arith.constant 0 : index
    %22 = vector.load %arg7[%c0_15, %c0_16] : memref<1x256xf32, #tpu.memory_space<vmem>>, vector<1x256xf32>
    %23 = vector.broadcast %22 : vector<1x256xf32> to vector<8x256xf32>
    %24 = arith.addf %21, %23 : vector<8x256xf32>
    %cst_17 = arith.constant 2.000000e-01 : f32
    %25 = vector.broadcast %cst_17 : f32 to vector<8x256xf32>
    %26 = arith.mulf %25, %24 : vector<8x256xf32>
    %27 = arith.maximumf %24, %26 : vector<8x256xf32>
    %28 = arith.truncf %27 : vector<8x256xf32> to vector<8x256xbf16>
    %29 = arith.extf %28 : vector<8x256xbf16> to vector<8x256xf32>
    %c0_18 = arith.constant 0 : index
    %c0_19 = arith.constant 0 : index
    %30 = vector.load %arg8[%c0_18, %c0_19] : memref<1x256xbf16, #tpu.memory_space<vmem>>, vector<1x256xbf16>
    %31 = arith.extf %30 : vector<1x256xbf16> to vector<1x256xf32>
    %32 = vector.broadcast %31 : vector<1x256xf32> to vector<8x256xf32>
    %33 = arith.mulf %29, %32 : vector<8x256xf32>
    %cst_20 = arith.constant dense<0.000000e+00> : vector<8xf32>
    %34 = vector.multi_reduction <add>, %33, %cst_20 [1] : vector<8x256xf32> to vector<8xf32>
    %35 = vector.shape_cast %34 : vector<8xf32> to vector<8x1xf32>
    %c0_21 = arith.constant 0 : index
    %c0_22 = arith.constant 0 : index
    %36 = vector.load %arg9[%c0_21, %c0_22] : memref<1x1xf32, #tpu.memory_space<vmem>>, vector<1x1xf32>
    %37 = vector.broadcast %36 : vector<1x1xf32> to vector<8x1xf32>
    %38 = arith.addf %35, %37 : vector<8x1xf32>
    %39 = arith.negf %38 : vector<8x1xf32>
    %40 = math.exp %39 : vector<8x1xf32>
    %cst_23 = arith.constant 1.000000e+00 : f32
    %41 = vector.broadcast %cst_23 : f32 to vector<8x1xf32>
    %42 = arith.addf %41, %40 : vector<8x1xf32>
    %43 = arith.divf %41, %42 : vector<8x1xf32>
    %c0_24 = arith.constant 0 : index
    %c0_25 = arith.constant 0 : index
    %44 = vector.load %arg10[%c0_24, %c0_25] : memref<8x1xf32, #tpu.memory_space<vmem>>, vector<8x1xf32>
    tpu.vector_store %arg10[%c0_24, %c0_25], %43 {strides = array<i32>} : memref<8x1xf32, #tpu.memory_space<vmem>>, vector<8x1xf32>,
    return
  }
  func.func @transform_0(%arg0: i32) -> (i32, i32) {
    %c0_i32 = arith.constant 0 : i32
    %c0_i32_0 = arith.constant 0 : i32
    return %arg0, %c0_i32 : i32, i32
  }
  func.func @transform_1(%arg0: i32) -> (i32, i32) {
    %c0_i32 = arith.constant 0 : i32
    %c0_i32_0 = arith.constant 0 : i32
    %c0_i32_1 = arith.constant 0 : i32
    return %c0_i32, %c0_i32_0 : i32, i32
  }
  func.func @transform_2(%arg0: i32) -> (i32, i32) {
    %c0_i32 = arith.constant 0 : i32
    %c0_i32_0 = arith.constant 0 : i32
    %c0_i32_1 = arith.constant 0 : i32
    return %c0_i32, %c0_i32_0 : i32, i32
  }
  func.func @transform_3(%arg0: i32) -> (i32, i32) {
    %c0_i32 = arith.constant 0 : i32
    %c0_i32_0 = arith.constant 0 : i32
    %c0_i32_1 = arith.constant 0 : i32
    return %c0_i32, %c0_i32_0 : i32, i32
  }
  func.func @transform_4(%arg0: i32) -> (i32, i32) {
    %c0_i32 = arith.constant 0 : i32
    %c0_i32_0 = arith.constant 0 : i32
    %c0_i32_1 = arith.constant 0 : i32
    return %c0_i32, %c0_i32_0 : i32, i32
  }
  func.func @transform_5(%arg0: i32) -> (i32, i32) {
    %c0_i32 = arith.constant 0 : i32
    %c0_i32_0 = arith.constant 0 : i32
    %c0_i32_1 = arith.constant 0 : i32
    return %c0_i32, %c0_i32_0 : i32, i32
  }
  func.func @transform_6(%arg0: i32) -> (i32, i32) {
    %c0_i32 = arith.constant 0 : i32
    %c0_i32_0 = arith.constant 0 : i32
    %c0_i32_1 = arith.constant 0 : i32
    return %c0_i32, %c0_i32_0 : i32, i32
  }
  func.func @transform_7(%arg0: i32) -> (i32, i32) {
    %c0_i32 = arith.constant 0 : i32
    %c0_i32_0 = arith.constant 0 : i32
    %c0_i32_1 = arith.constant 0 : i32
    return %c0_i32, %c0_i32_0 : i32, i32
  }
  func.func @transform_8(%arg0: i32) -> (i32, i32) {
    %c0_i32 = arith.constant 0 : i32
    %c0_i32_0 = arith.constant 0 : i32
    %c0_i32_1 = arith.constant 0 : i32
    return %c0_i32, %c0_i32_0 : i32, i32
  }
  func.func @transform_9(%arg0: i32) -> (i32, i32) {
    %c0_i32 = arith.constant 0 : i32
    %c0_i32_0 = arith.constant 0 : i32
    return %arg0, %c0_i32 : i32, i32
  }
}

</mosaic_0001>

<llo_original>
// kernel: tpu_custom_call.1
$region0: #{tpu_custom_call.1}
  #allocation0 [shape = 'u32[]', space=smem, size = 0x4, offset = 0x4, fixed_abs, tag = 'smem constant byte address 0x4 - core index']
  #allocation1 [shape = 'u32[144,128]{1,0:T(1,128)}', space=vmem, size = 0x12000, scoped, tag = 'internal scratch']
  #allocation2 [shape = 'f32[1,1]{1,0:T(1,128)S(1)}', space=vmem, size = 0x200, scoped, tag = 'scoped memory for tpu_custom_call.1']
  %s0 = inlined_call_operand.hbm [shape: f32[8,784], index: 0, kind: input, shape index: {}]
  %s1 = inlined_call_operand.hbm [shape: bf16[784,1024], index: 1, kind: input, shape index: {}]
  %s2 = inlined_call_operand.hbm [shape: f32[1,1024], index: 2, kind: input, shape index: {}]
  %s3 = inlined_call_operand.hbm [shape: bf16[1024,512], index: 3, kind: input, shape index: {}]
  %s4 = inlined_call_operand.hbm [shape: f32[1,512], index: 4, kind: input, shape index: {}]
  %s5 = inlined_call_operand.hbm [shape: bf16[512,256], index: 5, kind: input, shape index: {}]
  %s6 = inlined_call_operand.hbm [shape: f32[1,256], index: 6, kind: input, shape index: {}]
  %s7 = inlined_call_operand.hbm [shape: bf16[1,256], index: 7, kind: input, shape index: {}]
  %s8 = inlined_call_operand.<no memory space> [shape: f32[1,1], index: 8, kind: input, shape index: {}]
  %s9 = inlined_call_operand.vmem [shape: f32[8,1], index: 9, kind: output, shape index: {}]
  %s10 = sld [smem:[#allocation0]]
  $region78: #{tpu_custom_call.1} parent=0
    _
  %s12 = ssub.s32 1, %s10
  %s13 = scalar_select 0, %s12, %s10
  %v14 = vstv %s8
  %15 = vst [vmem:[#allocation2] sm:$0x1] %v14
  $region1: #{tpu_custom_call.1} parent=0
    #allocation3 [shape = 'u8[28672]{0}', space=vmem, size = 0x7000, scoped, tag = 'input window, operand 0, single buffered']
    #allocation4 [shape = 's32[1]{0}', space=sflag, size = 0x4, scoped, tag = 'scoped memory for tpu_custom_call.1']
    #allocation5 [shape = 'u8[1605632]{0}', space=vmem, size = 0x188000, scoped, tag = 'input window, operand 1, single buffered']
    #allocation6 [shape = 's32[1]{0}', space=sflag, size = 0x4, scoped, tag = 'scoped memory for tpu_custom_call.1']
    #allocation7 [shape = 'u8[4096]{0}', space=vmem, size = 0x1000, scoped, tag = 'input window, operand 2, single buffered']
    #allocation8 [shape = 'u8[1048576]{0}', space=vmem, size = 0x100000, scoped, tag = 'input window, operand 3, single buffered']
    #allocation9 [shape = 's32[1]{0}', space=sflag, size = 0x4, scoped, tag = 'scoped memory for tpu_custom_call.1']
    #allocation10 [shape = 'u8[2048]{0}', space=vmem, size = 0x800, scoped, tag = 'input window, operand 4, single buffered']
    #allocation11 [shape = 'u8[262144]{0}', space=vmem, size = 0x40000, scoped, tag = 'input window, operand 5, single buffered']
    #allocation12 [shape = 's32[1]{0}', space=sflag, size = 0x4, scoped, tag = 'scoped memory for tpu_custom_call.1']
    #allocation13 [shape = 'u8[1024]{0}', space=vmem, size = 0x400, scoped, tag = 'input window, operand 6, single buffered']
    #allocation14 [shape = 'u8[1024]{0}', space=vmem, size = 0x400, scoped, tag = 'input window, operand 7, single buffered']
    #allocation15 [shape = 's32[1]{0}', space=sflag, size = 0x4, scoped, tag = 'scoped memory for tpu_custom_call.1']
    %16 = vsyncpa [#allocation4], 0
    %17 = vsyncpa [#allocation6], 0
    %18 = vsyncpa [#allocation9], 0
    %19 = vsyncpa [#allocation12], 0
    %20 = vsyncpa [#allocation15], 0
    // Predicated region
    $region2: #{tpu_custom_call.1} parent=1 // pred_check
      _
    $region3: #{tpu_custom_call.1} parent=1 // pred_check_branch
      %22 = sbr.rel (0) target = $region5
    $region4: #{tpu_custom_call.1} parent=1 // pred_region
      %s24 = ssub.s32 896, 896
      %25 = vsyncadd [#allocation4], %s24
      %s27 = sshll.u32 [#allocation3], 4
      %s28 = int_to_ptr.vmem [resolvable:$true] %s27
      %30 = dma.hbm_to_vmem [thread:$0]  %s0, 896, %s28, [#allocation4]
    $region5: #{tpu_custom_call.1} parent=1 // pred_fallthru
      _
    // Predicated region
    $region6: #{tpu_custom_call.1} parent=1 // pred_check
      _
    $region7: #{tpu_custom_call.1} parent=1 // pred_check_branch
      %32 = sbr.rel (0) target = $region9
    $region8: #{tpu_custom_call.1} parent=1 // pred_region
      %s34 = ssub.s32 50176, 50176
      %35 = vsyncadd [#allocation6], %s34
      %s36 = sshll.u32 [#allocation5], 4
      %s37 = int_to_ptr.vmem [resolvable:$true] %s36
      %42 = dma.hbm_to_vmem [thread:$0]  %s1, 50176, %s37, [#allocation6], 512, 512, 32
    $region9: #{tpu_custom_call.1} parent=1 // pred_fallthru
      _
    // Predicated region
    $region10: #{tpu_custom_call.1} parent=1 // pred_check
      _
    $region11: #{tpu_custom_call.1} parent=1 // pred_check_branch
      %44 = sbr.rel (0) target = $region13
    $region12: #{tpu_custom_call.1} parent=1 // pred_region
      %s46 = ssub.s32 128, 128
      %47 = vsyncadd [#allocation6], %s46
      %s49 = sshll.u32 [#allocation7], 4
      %s50 = int_to_ptr.vmem [resolvable:$true] %s49
      %52 = dma.hbm_to_vmem [thread:$0]  %s2, 128, %s50, [#allocation6]
    $region13: #{tpu_custom_call.1} parent=1 // pred_fallthru
      _
    // Predicated region
    $region14: #{tpu_custom_call.1} parent=1 // pred_check
      _
    $region15: #{tpu_custom_call.1} parent=1 // pred_check_branch
      %54 = sbr.rel (0) target = $region17
    $region16: #{tpu_custom_call.1} parent=1 // pred_region
      %s56 = ssub.s32 32768, 32768
      %57 = vsyncadd [#allocation9], %s56
      %s58 = sshll.u32 [#allocation8], 4
      %s59 = int_to_ptr.vmem [resolvable:$true] %s58
      %64 = dma.hbm_to_vmem [thread:$0]  %s3, 32768, %s59, [#allocation9], 256, 256, 16
    $region17: #{tpu_custom_call.1} parent=1 // pred_fallthru
      _
    // Predicated region
    $region18: #{tpu_custom_call.1} parent=1 // pred_check
      _
    $region19: #{tpu_custom_call.1} parent=1 // pred_check_branch
      %66 = sbr.rel (0) target = $region21
    $region20: #{tpu_custom_call.1} parent=1 // pred_region
      %s68 = ssub.s32 64, 64
      %69 = vsyncadd [#allocation9], %s68
      %s71 = sshll.u32 [#allocation10], 4
      %s72 = int_to_ptr.vmem [resolvable:$true] %s71
      %74 = dma.hbm_to_vmem [thread:$0]  %s4, 64, %s72, [#allocation9]
    $region21: #{tpu_custom_call.1} parent=1 // pred_fallthru
      _
    // Predicated region
    $region22: #{tpu_custom_call.1} parent=1 // pred_check
      _
    $region23: #{tpu_custom_call.1} parent=1 // pred_check_branch
      %76 = sbr.rel (0) target = $region25
    $region24: #{tpu_custom_call.1} parent=1 // pred_region
      %s78 = ssub.s32 8192, 8192
      %79 = vsyncadd [#allocation12], %s78
      %s80 = sshll.u32 [#allocation11], 4
      %s81 = int_to_ptr.vmem [resolvable:$true] %s80
      %86 = dma.hbm_to_vmem [thread:$0]  %s5, 8192, %s81, [#allocation12], 128, 128, 8
    $region25: #{tpu_custom_call.1} parent=1 // pred_fallthru
      _
    // Predicated region
    $region26: #{tpu_custom_call.1} parent=1 // pred_check
      _
    $region27: #{tpu_custom_call.1} parent=1 // pred_check_branch
      %88 = sbr.rel (0) target = $region29
    $region28: #{tpu_custom_call.1} parent=1 // pred_region
      %s90 = ssub.s32 32, 32
      %91 = vsyncadd [#allocation12], %s90
      %s93 = sshll.u32 [#allocation13], 4
      %s94 = int_to_ptr.vmem [resolvable:$true] %s93
      %96 = dma.hbm_to_vmem [thread:$0]  %s6, 32, %s94, [#allocation12]
    $region29: #{tpu_custom_call.1} parent=1 // pred_fallthru
      _
    // Predicated region
    $region30: #{tpu_custom_call.1} parent=1 // pred_check
      _
    $region31: #{tpu_custom_call.1} parent=1 // pred_check_branch
      %98 = sbr.rel (0) target = $region33
    $region32: #{tpu_custom_call.1} parent=1 // pred_region
      %s100 = ssub.s32 32, 32
      %101 = vsyncadd [#allocation15], %s100
      %s103 = sshll.u32 [#allocation14], 4
      %s104 = int_to_ptr.vmem [resolvable:$true] %s103
      %106 = dma.hbm_to_vmem [thread:$0]  %s7, 32, %s104, [#allocation15]
    $region33: #{tpu_custom_call.1} parent=1 // pred_fallthru
      _
    // Predicated region
    $region34: #{tpu_custom_call.1} parent=1 // pred_check
      _
    $region35: #{tpu_custom_call.1} parent=1 // pred_check_branch
      %108 = sbr.rel (0) target = $region37
    $region36: #{tpu_custom_call.1} parent=1 // pred_region
      _
    $region37: #{tpu_custom_call.1} parent=1 // pred_fallthru
      _
    // Predicated region
    $region38: #{tpu_custom_call.1} parent=1 // pred_check
      _
    $region39: #{tpu_custom_call.1} parent=1 // pred_check_branch
      %110 = sbr.rel (0) target = $region41
    $region40: #{tpu_custom_call.1} parent=1 // pred_region
      %111 = dma.done [#allocation4], 896
    $region41: #{tpu_custom_call.1} parent=1 // pred_fallthru
      _
    // Predicated region
    $region42: #{tpu_custom_call.1} parent=1 // pred_check
      _
    $region43: #{tpu_custom_call.1} parent=1 // pred_check_branch
      %113 = sbr.rel (0) target = $region45
    $region44: #{tpu_custom_call.1} parent=1 // pred_region
      %114 = dma.done [#allocation6], 50176
    $region45: #{tpu_custom_call.1} parent=1 // pred_fallthru
      _
    // Predicated region
    $region46: #{tpu_custom_call.1} parent=1 // pred_check
      _
    $region47: #{tpu_custom_call.1} parent=1 // pred_check_branch
      %116 = sbr.rel (0) target = $region49
    $region48: #{tpu_custom_call.1} parent=1 // pred_region
      %117 = dma.done [#allocation6], 128
    $region49: #{tpu_custom_call.1} parent=1 // pred_fallthru
      _
    // Predicated region
    $region50: #{tpu_custom_call.1} parent=1 // pred_check
      _
    $region51: #{tpu_custom_call.1} parent=1 // pred_check_branch
      %119 = sbr.rel (0) target = $region53
    $region52: #{tpu_custom_call.1} parent=1 // pred_region
      %120 = dma.done [#allocation9], 32768
    $region53: #{tpu_custom_call.1} parent=1 // pred_fallthru
      _
    // Predicated region
    $region54: #{tpu_custom_call.1} parent=1 // pred_check
      _
    $region55: #{tpu_custom_call.1} parent=1 // pred_check_branch
      %122 = sbr.rel (0) target = $region57
    $region56: #{tpu_custom_call.1} parent=1 // pred_region
      %123 = dma.done [#allocation9], 64
    $region57: #{tpu_custom_call.1} parent=1 // pred_fallthru
      _
    // Predicated region
    $region58: #{tpu_custom_call.1} parent=1 // pred_check
      _
    $region59: #{tpu_custom_call.1} parent=1 // pred_check_branch
      %125 = sbr.rel (0) target = $region61
    $region60: #{tpu_custom_call.1} parent=1 // pred_region
      %126 = dma.done [#allocation12], 8192
    $region61: #{tpu_custom_call.1} parent=1 // pred_fallthru
      _
    // Predicated region
    $region62: #{tpu_custom_call.1} parent=1 // pred_check
      _
    $region63: #{tpu_custom_call.1} parent=1 // pred_check_branch
      %128 = sbr.rel (0) target = $region65
    $region64: #{tpu_custom_call.1} parent=1 // pred_region
      %129 = dma.done [#allocation12], 32
    $region65: #{tpu_custom_call.1} parent=1 // pred_fallthru
      _
    // Predicated region
    $region66: #{tpu_custom_call.1} parent=1 // pred_check
      _
    $region67: #{tpu_custom_call.1} parent=1 // pred_check_branch
      %131 = sbr.rel (0) target = $region69
    $region68: #{tpu_custom_call.1} parent=1 // pred_region
      %132 = dma.done [#allocation15], 32
    $region69: #{tpu_custom_call.1} parent=1 // pred_fallthru
      _
    %v134 = vld [vmem:[#allocation3] sm:$0xff]
    %v135 = vld [vmem:[#allocation3 + $0x8] sm:$0xff]
    %v136 = vld [vmem:[#allocation3 + $0x10] sm:$0xff]
    %v137 = vld [vmem:[#allocation3 + $0x18] sm:$0xff]
    %v138 = vld [vmem:[#allocation3 + $0x20] sm:$0xff]
    %v139 = vld [vmem:[#allocation3 + $0x28] sm:$0xff]
    %v140 = vld [vmem:[#allocation3 + $0x30] sm:$0xff]
    %v141 = vpack.c.bf16 %v134, %v134
    %v142 = vpack.c.bf16 %v135, %v135
    %v143 = vpack.c.bf16 %v136, %v136
    %v144 = vpack.c.bf16 %v137, %v137
    %v145 = vpack.c.bf16 %v138, %v138
    %v146 = vpack.c.bf16 %v139, %v139
    %v147 = vpack.c.bf16 %v140, %v140
    %v148 = vld [vmem:[#allocation5] sm:$0xff]
    %v149 = vld [vmem:[#allocation5 + $0x8] sm:$0xff]
    %v150 = vld [vmem:[#allocation5 + $0x10] sm:$0xff]
    %v151 = vld [vmem:[#allocation5 + $0x18] sm:$0xff]
    %v152 = vld [vmem:[#allocation5 + $0x20] sm:$0xff]
    %v153 = vld [vmem:[#allocation5 + $0x28] sm:$0xff]
    %v154 = vld [vmem:[#allocation5 + $0x30] sm:$0xff]
    %v155 = vld [vmem:[#allocation5 + $0x38] sm:$0xff]
    %v156 = vld [vmem:[#allocation5 + $0x40] sm:$0xff]
    %v157 = vld [vmem:[#allocation5 + $0x48] sm:$0xff]
    %v158 = vld [vmem:[#allocation5 + $0x50] sm:$0xff]
    %v159 = vld [vmem:[#allocation5 + $0x58] sm:$0xff]
    %v160 = vld [vmem:[#allocation5 + $0x60] sm:$0xff]
    %v161 = vld [vmem:[#allocation5 + $0x68] sm:$0xff]
    %v162 = vld [vmem:[#allocation5 + $0x70] sm:$0xff]
    %v163 = vld [vmem:[#allocation5 + $0x78] sm:$0xff]
    %v164 = vld [vmem:[#allocation5 + $0x80] sm:$0xff]
    %v165 = vld [vmem:[#allocation5 + $0x88] sm:$0xff]
    %v166 = vld [vmem:[#allocation5 + $0x90] sm:$0xff]
    %v167 = vld [vmem:[#allocation5 + $0x98] sm:$0xff]
    %v168 = vld [vmem:[#allocation5 + $0xa0] sm:$0xff]
    %v169 = vld [vmem:[#allocation5 + $0xa8] sm:$0xff]
    %v170 = vld [vmem:[#allocation5 + $0xb0] sm:$0xff]
    %v171 = vld [vmem:[#allocation5 + $0xb8] sm:$0xff]
    %v172 = vld [vmem:[#allocation5 + $0xc0] sm:$0xff]
    %v173 = vld [vmem:[#allocation5 + $0xc8] sm:$0xff]
    %v174 = vld [vmem:[#allocation5 + $0xd0] sm:$0xff]
    %v175 = vld [vmem:[#allocation5 + $0xd8] sm:$0xff]
    %v176 = vld [vmem:[#allocation5 + $0xe0] sm:$0xff]
    %v177 = vld [vmem:[#allocation5 + $0xe8] sm:$0xff]
    %v178 = vld [vmem:[#allocation5 + $0xf0] sm:$0xff]
    %v179 = vld [vmem:[#allocation5 + $0xf8] sm:$0xff]
    %v180 = vld [vmem:[#allocation5 + $0x100] sm:$0xff]
    %v181 = vld [vmem:[#allocation5 + $0x108] sm:$0xff]
    %v182 = vld [vmem:[#allocation5 + $0x110] sm:$0xff]
    %v183 = vld [vmem:[#allocation5 + $0x118] sm:$0xff]
    %v184 = vld [vmem:[#allocation5 + $0x120] sm:$0xff]
    %v185 = vld [vmem:[#allocation5 + $0x128] sm:$0xff]
    %v186 = vld [vmem:[#allocation5 + $0x130] sm:$0xff]
    %v187 = vld [vmem:[#allocation5 + $0x138] sm:$0xff]
    %v188 = vld [vmem:[#allocation5 + $0x140] sm:$0xff]
    %v189 = vld [vmem:[#allocation5 + $0x148] sm:$0xff]
    %v190 = vld [vmem:[#allocation5 + $0x150] sm:$0xff]
    %v191 = vld [vmem:[#allocation5 + $0x158] sm:$0xff]
    %v192 = vld [vmem:[#allocation5 + $0x160] sm:$0xff]
    %v193 = vld [vmem:[#allocation5 + $0x168] sm:$0xff]
    %v194 = vld [vmem:[#allocation5 + $0x170] sm:$0xff]
    %v195 = vld [vmem:[#allocation5 + $0x178] sm:$0xff]
    %v196 = vld [vmem:[#allocation5 + $0x180] sm:$0xff]
    %v197 = vld [vmem:[#allocation5 + $0x188] sm:$0xff]
    %v198 = vld [vmem:[#allocation5 + $0x190] sm:$0xff]
    %v199 = vld [vmem:[#allocation5 + $0x198] sm:$0xff]
    %v200 = vld [vmem:[#allocation5 + $0x1a0] sm:$0xff]
    %v201 = vld [vmem:[#allocation5 + $0x1a8] sm:$0xff]
    %v202 = vld [vmem:[#allocation5 + $0x1b0] sm:$0xff]
    %v203 = vld [vmem:[#allocation5 + $0x1b8] sm:$0xff]
    %v204 = vld [vmem:[#allocation5 + $0x1c0] sm:$0xff]
    %v205 = vld [vmem:[#allocation5 + $0x1c8] sm:$0xff]
    %v206 = vld [vmem:[#allocation5 + $0x1d0] sm:$0xff]
    %v207 = vld [vmem:[#allocation5 + $0x1d8] sm:$0xff]
    %v208 = vld [vmem:[#allocation5 + $0x1e0] sm:$0xff]
    %v209 = vld [vmem:[#allocation5 + $0x1e8] sm:$0xff]
    %v210 = vld [vmem:[#allocation5 + $0x1f0] sm:$0xff]
    %v211 = vld [vmem:[#allocation5 + $0x1f8] sm:$0xff]
    %v212 = vld [vmem:[#allocation5 + $0x200] sm:$0xff]
    %v213 = vld [vmem:[#allocation5 + $0x208] sm:$0xff]
    %v214 = vld [vmem:[#allocation5 + $0x210] sm:$0xff]
    %v215 = vld [vmem:[#allocation5 + $0x218] sm:$0xff]
    %v216 = vld [vmem:[#allocation5 + $0x220] sm:$0xff]
    %v217 = vld [vmem:[#allocation5 + $0x228] sm:$0xff]
    %v218 = vld [vmem:[#allocation5 + $0x230] sm:$0xff]
    %v219 = vld [vmem:[#allocation5 + $0x238] sm:$0xff]
    %v220 = vld [vmem:[#allocation5 + $0x240] sm:$0xff]
    %v221 = vld [vmem:[#allocation5 + $0x248] sm:$0xff]
    %v222 = vld [vmem:[#allocation5 + $0x250] sm:$0xff]
    %v223 = vld [vmem:[#allocation5 + $0x258] sm:$0xff]
    %v224 = vld [vmem:[#allocation5 + $0x260] sm:$0xff]
    %v225 = vld [vmem:[#allocation5 + $0x268] sm:$0xff]
    %v226 = vld [vmem:[#allocation5 + $0x270] sm:$0xff]
    %v227 = vld [vmem:[#allocation5 + $0x278] sm:$0xff]
    %v228 = vld [vmem:[#allocation5 + $0x280] sm:$0xff]
    %v229 = vld [vmem:[#allocation5 + $0x288] sm:$0xff]
    %v230 = vld [vmem:[#allocation5 + $0x290] sm:$0xff]
    %v231 = vld [vmem:[#allocation5 + $0x298] sm:$0xff]
    %v232 = vld [vmem:[#allocation5 + $0x2a0] sm:$0xff]
    %v233 = vld [vmem:[#allocation5 + $0x2a8] sm:$0xff]
    %v234 = vld [vmem:[#allocation5 + $0x2b0] sm:$0xff]
    %v235 = vld [vmem:[#allocation5 + $0x2b8] sm:$0xff]
    %v236 = vld [vmem:[#allocation5 + $0x2c0] sm:$0xff]
    %v237 = vld [vmem:[#allocation5 + $0x2c8] sm:$0xff]
    %v238 = vld [vmem:[#allocation5 + $0x2d0] sm:$0xff]
    %v239 = vld [vmem:[#allocation5 + $0x2d8] sm:$0xff]
    %v240 = vld [vmem:[#allocation5 + $0x2e0] sm:$0xff]
    %v241 = vld [vmem:[#allocation5 + $0x2e8] sm:$0xff]
    %v242 = vld [vmem:[#allocation5 + $0x2f0] sm:$0xff]
    %v243 = vld [vmem:[#allocation5 + $0x2f8] sm:$0xff]
    %v244 = vld [vmem:[#allocation5 + $0x300] sm:$0xff]
    %v245 = vld [vmem:[#allocation5 + $0x308] sm:$0xff]
    %v246 = vld [vmem:[#allocation5 + $0x310] sm:$0xff]
    %v247 = vld [vmem:[#allocation5 + $0x318] sm:$0xff]
    %v248 = vld [vmem:[#allocation5 + $0x320] sm:$0xff]
    %v249 = vld [vmem:[#allocation5 + $0x328] sm:$0xff]
    %v250 = vld [vmem:[#allocation5 + $0x330] sm:$0xff]
    %v251 = vld [vmem:[#allocation5 + $0x338] sm:$0xff]
    %v252 = vld [vmem:[#allocation5 + $0x340] sm:$0xff]
    %v253 = vld [vmem:[#allocation5 + $0x348] sm:$0xff]
    %v254 = vld [vmem:[#allocation5 + $0x350] sm:$0xff]
    %v255 = vld [vmem:[#allocation5 + $0x358] sm:$0xff]
    %v256 = vld [vmem:[#allocation5 + $0x360] sm:$0xff]
    %v257 = vld [vmem:[#allocation5 + $0x368] sm:$0xff]
    %v258 = vld [vmem:[#allocation5 + $0x370] sm:$0xff]
    %v259 = vld [vmem:[#allocation5 + $0x378] sm:$0xff]
    %v260 = vld [vmem:[#allocation5 + $0x380] sm:$0xff]
    %v261 = vld [vmem:[#allocation5 + $0x388] sm:$0xff]
    %v262 = vld [vmem:[#allocation5 + $0x390] sm:$0xff]
    %v263 = vld [vmem:[#allocation5 + $0x398] sm:$0xff]
    %v264 = vld [vmem:[#allocation5 + $0x3a0] sm:$0xff]
    %v265 = vld [vmem:[#allocation5 + $0x3a8] sm:$0xff]
    %v266 = vld [vmem:[#allocation5 + $0x3b0] sm:$0xff]
    %v267 = vld [vmem:[#allocation5 + $0x3b8] sm:$0xff]
    %v268 = vld [vmem:[#allocation5 + $0x3c0] sm:$0xff]
    %v269 = vld [vmem:[#allocation5 + $0x3c8] sm:$0xff]
    %v270 = vld [vmem:[#allocation5 + $0x3d0] sm:$0xff]
    %v271 = vld [vmem:[#allocation5 + $0x3d8] sm:$0xff]
    %v272 = vld [vmem:[#allocation5 + $0x3e0] sm:$0xff]
    %v273 = vld [vmem:[#allocation5 + $0x3e8] sm:$0xff]
    %v274 = vld [vmem:[#allocation5 + $0x3f0] sm:$0xff]
    %v275 = vld [vmem:[#allocation5 + $0x3f8] sm:$0xff]
    %v276 = vld [vmem:[#allocation5 + $0x400] sm:$0xff]
    %v277 = vld [vmem:[#allocation5 + $0x408] sm:$0xff]
    %v278 = vld [vmem:[#allocation5 + $0x410] sm:$0xff]
    %v279 = vld [vmem:[#allocation5 + $0x418] sm:$0xff]
    %v280 = vld [vmem:[#allocation5 + $0x420] sm:$0xff]
    %v281 = vld [vmem:[#allocation5 + $0x428] sm:$0xff]
    %v282 = vld [vmem:[#allocation5 + $0x430] sm:$0xff]
    %v283 = vld [vmem:[#allocation5 + $0x438] sm:$0xff]
    %v284 = vld [vmem:[#allocation5 + $0x440] sm:$0xff]
    %v285 = vld [vmem:[#allocation5 + $0x448] sm:$0xff]
    %v286 = vld [vmem:[#allocation5 + $0x450] sm:$0xff]
    %v287 = vld [vmem:[#allocation5 + $0x458] sm:$0xff]
    %v288 = vld [vmem:[#allocation5 + $0x460] sm:$0xff]
    %v289 = vld [vmem:[#allocation5 + $0x468] sm:$0xff]
    %v290 = vld [vmem:[#allocation5 + $0x470] sm:$0xff]
    %v291 = vld [vmem:[#allocation5 + $0x478] sm:$0xff]
    %v292 = vld [vmem:[#allocation5 + $0x480] sm:$0xff]
    %v293 = vld [vmem:[#allocation5 + $0x488] sm:$0xff]
    %v294 = vld [vmem:[#allocation5 + $0x490] sm:$0xff]
    %v295 = vld [vmem:[#allocation5 + $0x498] sm:$0xff]
    %v296 = vld [vmem:[#allocation5 + $0x4a0] sm:$0xff]
    %v297 = vld [vmem:[#allocation5 + $0x4a8] sm:$0xff]
    %v298 = vld [vmem:[#allocation5 + $0x4b0] sm:$0xff]
    %v299 = vld [vmem:[#allocation5 + $0x4b8] sm:$0xff]
    %v300 = vld [vmem:[#allocation5 + $0x4c0] sm:$0xff]
    %v301 = vld [vmem:[#allocation5 + $0x4c8] sm:$0xff]
    %v302 = vld [vmem:[#allocation5 + $0x4d0] sm:$0xff]
    %v303 = vld [vmem:[#allocation5 + $0x4d8] sm:$0xff]
    %v304 = vld [vmem:[#allocation5 + $0x4e0] sm:$0xff]
    %v305 = vld [vmem:[#allocation5 + $0x4e8] sm:$0xff]
    %v306 = vld [vmem:[#allocation5 + $0x4f0] sm:$0xff]
    %v307 = vld [vmem:[#allocation5 + $0x4f8] sm:$0xff]
    %v308 = vld [vmem:[#allocation5 + $0x500] sm:$0xff]
    %v309 = vld [vmem:[#allocation5 + $0x508] sm:$0xff]
    %v310 = vld [vmem:[#allocation5 + $0x510] sm:$0xff]
    %v311 = vld [vmem:[#allocation5 + $0x518] sm:$0xff]
    %v312 = vld [vmem:[#allocation5 + $0x520] sm:$0xff]
    %v313 = vld [vmem:[#allocation5 + $0x528] sm:$0xff]
    %v314 = vld [vmem:[#allocation5 + $0x530] sm:$0xff]
    %v315 = vld [vmem:[#allocation5 + $0x538] sm:$0xff]
    %v316 = vld [vmem:[#allocation5 + $0x540] sm:$0xff]
    %v317 = vld [vmem:[#allocation5 + $0x548] sm:$0xff]
    %v318 = vld [vmem:[#allocation5 + $0x550] sm:$0xff]
    %v319 = vld [vmem:[#allocation5 + $0x558] sm:$0xff]
    %v320 = vld [vmem:[#allocation5 + $0x560] sm:$0xff]
    %v321 = vld [vmem:[#allocation5 + $0x568] sm:$0xff]
    %v322 = vld [vmem:[#allocation5 + $0x570] sm:$0xff]
    %v323 = vld [vmem:[#allocation5 + $0x578] sm:$0xff]
    %v324 = vld [vmem:[#allocation5 + $0x580] sm:$0xff]
    %v325 = vld [vmem:[#allocation5 + $0x588] sm:$0xff]
    %v326 = vld [vmem:[#allocation5 + $0x590] sm:$0xff]
    %v327 = vld [vmem:[#allocation5 + $0x598] sm:$0xff]
    %v328 = vld [vmem:[#allocation5 + $0x5a0] sm:$0xff]
    %v329 = vld [vmem:[#allocation5 + $0x5a8] sm:$0xff]
    %v330 = vld [vmem:[#allocation5 + $0x5b0] sm:$0xff]
    %v331 = vld [vmem:[#allocation5 + $0x5b8] sm:$0xff]
    %v332 = vld [vmem:[#allocation5 + $0x5c0] sm:$0xff]
    %v333 = vld [vmem:[#allocation5 + $0x5c8] sm:$0xff]
    %v334 = vld [vmem:[#allocation5 + $0x5d0] sm:$0xff]
    %v335 = vld [vmem:[#allocation5 + $0x5d8] sm:$0xff]
    %v336 = vld [vmem:[#allocation5 + $0x5e0] sm:$0xff]
    %v337 = vld [vmem:[#allocation5 + $0x5e8] sm:$0xff]
    %v338 = vld [vmem:[#allocation5 + $0x5f0] sm:$0xff]
    %v339 = vld [vmem:[#allocation5 + $0x5f8] sm:$0xff]
    %v340 = vld [vmem:[#allocation5 + $0x600] sm:$0xff]
    %v341 = vld [vmem:[#allocation5 + $0x608] sm:$0xff]
    %v342 = vld [vmem:[#allocation5 + $0x610] sm:$0xff]
    %v343 = vld [vmem:[#allocation5 + $0x618] sm:$0xff]
    %v344 = vld [vmem:[#allocation5 + $0x620] sm:$0xff]
    %v345 = vld [vmem:[#allocation5 + $0x628] sm:$0xff]
    %v346 = vld [vmem:[#allocation5 + $0x630] sm:$0xff]
    %v347 = vld [vmem:[#allocation5 + $0x638] sm:$0xff]
    %v348 = vld [vmem:[#allocation5 + $0x640] sm:$0xff]
    %v349 = vld [vmem:[#allocation5 + $0x648] sm:$0xff]
    %v350 = vld [vmem:[#allocation5 + $0x650] sm:$0xff]
    %v351 = vld [vmem:[#allocation5 + $0x658] sm:$0xff]
    %v352 = vld [vmem:[#allocation5 + $0x660] sm:$0xff]
    %v353 = vld [vmem:[#allocation5 + $0x668] sm:$0xff]
    %v354 = vld [vmem:[#allocation5 + $0x670] sm:$0xff]
    %v355 = vld [vmem:[#allocation5 + $0x678] sm:$0xff]
    %v356 = vld [vmem:[#allocation5 + $0x680] sm:$0xff]
    %v357 = vld [vmem:[#allocation5 + $0x688] sm:$0xff]
    %v358 = vld [vmem:[#allocation5 + $0x690] sm:$0xff]
    %v359 = vld [vmem:[#allocation5 + $0x698] sm:$0xff]
    %v360 = vld [vmem:[#allocation5 + $0x6a0] sm:$0xff]
    %v361 = vld [vmem:[#allocation5 + $0x6a8] sm:$0xff]
    %v362 = vld [vmem:[#allocation5 + $0x6b0] sm:$0xff]
    %v363 = vld [vmem:[#allocation5 + $0x6b8] sm:$0xff]
    %v364 = vld [vmem:[#allocation5 + $0x6c0] sm:$0xff]
    %v365 = vld [vmem:[#allocation5 + $0x6c8] sm:$0xff]
    %v366 = vld [vmem:[#allocation5 + $0x6d0] sm:$0xff]
    %v367 = vld [vmem:[#allocation5 + $0x6d8] sm:$0xff]
    %v368 = vld [vmem:[#allocation5 + $0x6e0] sm:$0xff]
    %v369 = vld [vmem:[#allocation5 + $0x6e8] sm:$0xff]
    %v370 = vld [vmem:[#allocation5 + $0x6f0] sm:$0xff]
    %v371 = vld [vmem:[#allocation5 + $0x6f8] sm:$0xff]
    %v372 = vld [vmem:[#allocation5 + $0x700] sm:$0xff]
    %v373 = vld [vmem:[#allocation5 + $0x708] sm:$0xff]
    %v374 = vld [vmem:[#allocation5 + $0x710] sm:$0xff]
    %v375 = vld [vmem:[#allocation5 + $0x718] sm:$0xff]
    %v376 = vld [vmem:[#allocation5 + $0x720] sm:$0xff]
    %v377 = vld [vmem:[#allocation5 + $0x728] sm:$0xff]
    %v378 = vld [vmem:[#allocation5 + $0x730] sm:$0xff]
    %v379 = vld [vmem:[#allocation5 + $0x738] sm:$0xff]
    %v380 = vld [vmem:[#allocation5 + $0x740] sm:$0xff]
    %v381 = vld [vmem:[#allocation5 + $0x748] sm:$0xff]
    %v382 = vld [vmem:[#allocation5 + $0x750] sm:$0xff]
    %v383 = vld [vmem:[#allocation5 + $0x758] sm:$0xff]
    %v384 = vld [vmem:[#allocation5 + $0x760] sm:$0xff]
    %v385 = vld [vmem:[#allocation5 + $0x768] sm:$0xff]
    %v386 = vld [vmem:[#allocation5 + $0x770] sm:$0xff]
    %v387 = vld [vmem:[#allocation5 + $0x778] sm:$0xff]
    %v388 = vld [vmem:[#allocation5 + $0x780] sm:$0xff]
    %v389 = vld [vmem:[#allocation5 + $0x788] sm:$0xff]
    %v390 = vld [vmem:[#allocation5 + $0x790] sm:$0xff]
    %v391 = vld [vmem:[#allocation5 + $0x798] sm:$0xff]
    %v392 = vld [vmem:[#allocation5 + $0x7a0] sm:$0xff]
    %v393 = vld [vmem:[#allocation5 + $0x7a8] sm:$0xff]
    %v394 = vld [vmem:[#allocation5 + $0x7b0] sm:$0xff]
    %v395 = vld [vmem:[#allocation5 + $0x7b8] sm:$0xff]
    %v396 = vld [vmem:[#allocation5 + $0x7c0] sm:$0xff]
    %v397 = vld [vmem:[#allocation5 + $0x7c8] sm:$0xff]
    %v398 = vld [vmem:[#allocation5 + $0x7d0] sm:$0xff]
    %v399 = vld [vmem:[#allocation5 + $0x7d8] sm:$0xff]
    %v400 = vld [vmem:[#allocation5 + $0x7e0] sm:$0xff]
    %v401 = vld [vmem:[#allocation5 + $0x7e8] sm:$0xff]
    %v402 = vld [vmem:[#allocation5 + $0x7f0] sm:$0xff]
    %v403 = vld [vmem:[#allocation5 + $0x7f8] sm:$0xff]
    %v404 = vld [vmem:[#allocation5 + $0x800] sm:$0xff]
    %v405 = vld [vmem:[#allocation5 + $0x808] sm:$0xff]
    %v406 = vld [vmem:[#allocation5 + $0x810] sm:$0xff]
    %v407 = vld [vmem:[#allocation5 + $0x818] sm:$0xff]
    %v408 = vld [vmem:[#allocation5 + $0x820] sm:$0xff]
    %v409 = vld [vmem:[#allocation5 + $0x828] sm:$0xff]
    %v410 = vld [vmem:[#allocation5 + $0x830] sm:$0xff]
    %v411 = vld [vmem:[#allocation5 + $0x838] sm:$0xff]
    %v412 = vld [vmem:[#allocation5 + $0x840] sm:$0xff]
    %v413 = vld [vmem:[#allocation5 + $0x848] sm:$0xff]
    %v414 = vld [vmem:[#allocation5 + $0x850] sm:$0xff]
    %v415 = vld [vmem:[#allocation5 + $0x858] sm:$0xff]
    %v416 = vld [vmem:[#allocation5 + $0x860] sm:$0xff]
    %v417 = vld [vmem:[#allocation5 + $0x868] sm:$0xff]
    %v418 = vld [vmem:[#allocation5 + $0x870] sm:$0xff]
    %v419 = vld [vmem:[#allocation5 + $0x878] sm:$0xff]
    %v420 = vld [vmem:[#allocation5 + $0x880] sm:$0xff]
    %v421 = vld [vmem:[#allocation5 + $0x888] sm:$0xff]
    %v422 = vld [vmem:[#allocation5 + $0x890] sm:$0xff]
    %v423 = vld [vmem:[#allocation5 + $0x898] sm:$0xff]
    %v424 = vld [vmem:[#allocation5 + $0x8a0] sm:$0xff]
    %v425 = vld [vmem:[#allocation5 + $0x8a8] sm:$0xff]
    %v426 = vld [vmem:[#allocation5 + $0x8b0] sm:$0xff]
    %v427 = vld [vmem:[#allocation5 + $0x8b8] sm:$0xff]
    %v428 = vld [vmem:[#allocation5 + $0x8c0] sm:$0xff]
    %v429 = vld [vmem:[#allocation5 + $0x8c8] sm:$0xff]
    %v430 = vld [vmem:[#allocation5 + $0x8d0] sm:$0xff]
    %v431 = vld [vmem:[#allocation5 + $0x8d8] sm:$0xff]
    %v432 = vld [vmem:[#allocation5 + $0x8e0] sm:$0xff]
    %v433 = vld [vmem:[#allocation5 + $0x8e8] sm:$0xff]
    %v434 = vld [vmem:[#allocation5 + $0x8f0] sm:$0xff]
    %v435 = vld [vmem:[#allocation5 + $0x8f8] sm:$0xff]
    %v436 = vld [vmem:[#allocation5 + $0x900] sm:$0xff]
    %v437 = vld [vmem:[#allocation5 + $0x908] sm:$0xff]
    %v438 = vld [vmem:[#allocation5 + $0x910] sm:$0xff]
    %v439 = vld [vmem:[#allocation5 + $0x918] sm:$0xff]
    %v440 = vld [vmem:[#allocation5 + $0x920] sm:$0xff]
    %v441 = vld [vmem:[#allocation5 + $0x928] sm:$0xff]
    %v442 = vld [vmem:[#allocation5 + $0x930] sm:$0xff]
    %v443 = vld [vmem:[#allocation5 + $0x938] sm:$0xff]
    %v444 = vld [vmem:[#allocation5 + $0x940] sm:$0xff]
    %v445 = vld [vmem:[#allocation5 + $0x948] sm:$0xff]
    %v446 = vld [vmem:[#allocation5 + $0x950] sm:$0xff]
    %v447 = vld [vmem:[#allocation5 + $0x958] sm:$0xff]
    %v448 = vld [vmem:[#allocation5 + $0x960] sm:$0xff]
    %v449 = vld [vmem:[#allocation5 + $0x968] sm:$0xff]
    %v450 = vld [vmem:[#allocation5 + $0x970] sm:$0xff]
    %v451 = vld [vmem:[#allocation5 + $0x978] sm:$0xff]
    %v452 = vld [vmem:[#allocation5 + $0x980] sm:$0xff]
    %v453 = vld [vmem:[#allocation5 + $0x988] sm:$0xff]
    %v454 = vld [vmem:[#allocation5 + $0x990] sm:$0xff]
    %v455 = vld [vmem:[#allocation5 + $0x998] sm:$0xff]
    %v456 = vld [vmem:[#allocation5 + $0x9a0] sm:$0xff]
    %v457 = vld [vmem:[#allocation5 + $0x9a8] sm:$0xff]
    %v458 = vld [vmem:[#allocation5 + $0x9b0] sm:$0xff]
    %v459 = vld [vmem:[#allocation5 + $0x9b8] sm:$0xff]
    %v460 = vld [vmem:[#allocation5 + $0x9c0] sm:$0xff]
    %v461 = vld [vmem:[#allocation5 + $0x9c8] sm:$0xff]
    %v462 = vld [vmem:[#allocation5 + $0x9d0] sm:$0xff]
    %v463 = vld [vmem:[#allocation5 + $0x9d8] sm:$0xff]
    %v464 = vld [vmem:[#allocation5 + $0x9e0] sm:$0xff]
    %v465 = vld [vmem:[#allocation5 + $0x9e8] sm:$0xff]
    %v466 = vld [vmem:[#allocation5 + $0x9f0] sm:$0xff]
    %v467 = vld [vmem:[#allocation5 + $0x9f8] sm:$0xff]
    %v468 = vld [vmem:[#allocation5 + $0xa00] sm:$0xff]
    %v469 = vld [vmem:[#allocation5 + $0xa08] sm:$0xff]
    %v470 = vld [vmem:[#allocation5 + $0xa10] sm:$0xff]
    %v471 = vld [vmem:[#allocation5 + $0xa18] sm:$0xff]
    %v472 = vld [vmem:[#allocation5 + $0xa20] sm:$0xff]
    %v473 = vld [vmem:[#allocation5 + $0xa28] sm:$0xff]
    %v474 = vld [vmem:[#allocation5 + $0xa30] sm:$0xff]
    %v475 = vld [vmem:[#allocation5 + $0xa38] sm:$0xff]
    %v476 = vld [vmem:[#allocation5 + $0xa40] sm:$0xff]
    %v477 = vld [vmem:[#allocation5 + $0xa48] sm:$0xff]
    %v478 = vld [vmem:[#allocation5 + $0xa50] sm:$0xff]
    %v479 = vld [vmem:[#allocation5 + $0xa58] sm:$0xff]
    %v480 = vld [vmem:[#allocation5 + $0xa60] sm:$0xff]
    %v481 = vld [vmem:[#allocation5 + $0xa68] sm:$0xff]
    %v482 = vld [vmem:[#allocation5 + $0xa70] sm:$0xff]
    %v483 = vld [vmem:[#allocation5 + $0xa78] sm:$0xff]
    %v484 = vld [vmem:[#allocation5 + $0xa80] sm:$0xff]
    %v485 = vld [vmem:[#allocation5 + $0xa88] sm:$0xff]
    %v486 = vld [vmem:[#allocation5 + $0xa90] sm:$0xff]
    %v487 = vld [vmem:[#allocation5 + $0xa98] sm:$0xff]
    %v488 = vld [vmem:[#allocation5 + $0xaa0] sm:$0xff]
    %v489 = vld [vmem:[#allocation5 + $0xaa8] sm:$0xff]
    %v490 = vld [vmem:[#allocation5 + $0xab0] sm:$0xff]
    %v491 = vld [vmem:[#allocation5 + $0xab8] sm:$0xff]
    %v492 = vld [vmem:[#allocation5 + $0xac0] sm:$0xff]
    %v493 = vld [vmem:[#allocation5 + $0xac8] sm:$0xff]
    %v494 = vld [vmem:[#allocation5 + $0xad0] sm:$0xff]
    %v495 = vld [vmem:[#allocation5 + $0xad8] sm:$0xff]
    %v496 = vld [vmem:[#allocation5 + $0xae0] sm:$0xff]
    %v497 = vld [vmem:[#allocation5 + $0xae8] sm:$0xff]
    %v498 = vld [vmem:[#allocation5 + $0xaf0] sm:$0xff]
    %v499 = vld [vmem:[#allocation5 + $0xaf8] sm:$0xff]
    %v500 = vld [vmem:[#allocation5 + $0xb00] sm:$0xff]
    %v501 = vld [vmem:[#allocation5 + $0xb08] sm:$0xff]
    %v502 = vld [vmem:[#allocation5 + $0xb10] sm:$0xff]
    %v503 = vld [vmem:[#allocation5 + $0xb18] sm:$0xff]
    %v504 = vld [vmem:[#allocation5 + $0xb20] sm:$0xff]
    %v505 = vld [vmem:[#allocation5 + $0xb28] sm:$0xff]
    %v506 = vld [vmem:[#allocation5 + $0xb30] sm:$0xff]
    %v507 = vld [vmem:[#allocation5 + $0xb38] sm:$0xff]
    %v508 = vld [vmem:[#allocation5 + $0xb40] sm:$0xff]
    %v509 = vld [vmem:[#allocation5 + $0xb48] sm:$0xff]
    %v510 = vld [vmem:[#allocation5 + $0xb50] sm:$0xff]
    %v511 = vld [vmem:[#allocation5 + $0xb58] sm:$0xff]
    %v512 = vld [vmem:[#allocation5 + $0xb60] sm:$0xff]
    %v513 = vld [vmem:[#allocation5 + $0xb68] sm:$0xff]
    %v514 = vld [vmem:[#allocation5 + $0xb70] sm:$0xff]
    %v515 = vld [vmem:[#allocation5 + $0xb78] sm:$0xff]
    %v516 = vld [vmem:[#allocation5 + $0xb80] sm:$0xff]
    %v517 = vld [vmem:[#allocation5 + $0xb88] sm:$0xff]
    %v518 = vld [vmem:[#allocation5 + $0xb90] sm:$0xff]
    %v519 = vld [vmem:[#allocation5 + $0xb98] sm:$0xff]
    %v520 = vld [vmem:[#allocation5 + $0xba0] sm:$0xff]
    %v521 = vld [vmem:[#allocation5 + $0xba8] sm:$0xff]
    %v522 = vld [vmem:[#allocation5 + $0xbb0] sm:$0xff]
    %v523 = vld [vmem:[#allocation5 + $0xbb8] sm:$0xff]
    %v524 = vld [vmem:[#allocation5 + $0xbc0] sm:$0xff]
    %v525 = vld [vmem:[#allocation5 + $0xbc8] sm:$0xff]
    %v526 = vld [vmem:[#allocation5 + $0xbd0] sm:$0xff]
    %v527 = vld [vmem:[#allocation5 + $0xbd8] sm:$0xff]
    %v528 = vld [vmem:[#allocation5 + $0xbe0] sm:$0xff]
    %v529 = vld [vmem:[#allocation5 + $0xbe8] sm:$0xff]
    %v530 = vld [vmem:[#allocation5 + $0xbf0] sm:$0xff]
    %v531 = vld [vmem:[#allocation5 + $0xbf8] sm:$0xff]
    %v532 = vld [vmem:[#allocation5 + $0xc00] sm:$0xff]
    %v533 = vld [vmem:[#allocation5 + $0xc08] sm:$0xff]
    %v534 = vld [vmem:[#allocation5 + $0xc10] sm:$0xff]
    %v535 = vld [vmem:[#allocation5 + $0xc18] sm:$0xff]
    %v536 = vld [vmem:[#allocation5 + $0xc20] sm:$0xff]
    %v537 = vld [vmem:[#allocation5 + $0xc28] sm:$0xff]
    %v538 = vld [vmem:[#allocation5 + $0xc30] sm:$0xff]
    %v539 = vld [vmem:[#allocation5 + $0xc38] sm:$0xff]
    %v540 = vld [vmem:[#allocation7] sm:$0xff]
    %v542 = vlaneseq
    %v543 = vshrl.u32 %v542, 7
    %v544 = vsub.s32 0, %v543
    %v545 = vrot.slane %v540, %v544
    %v546 = vlaneseq
    %v547 = vshrl.u32 %v546, 7
    %v548 = vsub.s32 1, %v547
    %v549 = vrot.slane %v540, %v548
    %v550 = vlaneseq
    %v551 = vshrl.u32 %v550, 7
    %v552 = vsub.s32 2, %v551
    %v553 = vrot.slane %v540, %v552
    %v554 = vlaneseq
    %v555 = vshrl.u32 %v554, 7
    %v556 = vsub.s32 3, %v555
    %v557 = vrot.slane %v540, %v556
    %v558 = vlaneseq
    %v559 = vshrl.u32 %v558, 7
    %v560 = vsub.s32 4, %v559
    %v561 = vrot.slane %v540, %v560
    %v562 = vlaneseq
    %v563 = vshrl.u32 %v562, 7
    %v564 = vsub.s32 5, %v563
    %v565 = vrot.slane %v540, %v564
    %v566 = vlaneseq
    %v567 = vshrl.u32 %v566, 7
    %v568 = vsub.s32 6, %v567
    %v569 = vrot.slane %v540, %v568
    %v570 = vlaneseq
    %v571 = vshrl.u32 %v570, 7
    %v572 = vsub.s32 7, %v571
    %v573 = vrot.slane %v540, %v572
    %v974 = vunpack.c.l.b16 %v148
    %v975 = vunpack.c.h.b16 %v148
    %v976 = vunpack.c.l.b16 %v149
    %v977 = vunpack.c.h.b16 %v149
    %v978 = vunpack.c.l.b16 %v150
    %v979 = vunpack.c.h.b16 %v150
    %v980 = vunpack.c.l.b16 %v151
    %v981 = vunpack.c.h.b16 %v151
    %v982 = vunpack.c.l.b16 %v152
    %v983 = vunpack.c.h.b16 %v152
    %v984 = vunpack.c.l.b16 %v153
    %v985 = vunpack.c.h.b16 %v153
    %v986 = vunpack.c.l.b16 %v154
    %v987 = vunpack.c.h.b16 %v154
    %v988 = vunpack.c.l.b16 %v155
    %v989 = vunpack.c.h.b16 %v155
    %v990 = vunpack.c.l.b16 %v156
    %v991 = vunpack.c.h.b16 %v156
    %v992 = vunpack.c.l.b16 %v157
    %v993 = vunpack.c.h.b16 %v157
    %v994 = vunpack.c.l.b16 %v158
    %v995 = vunpack.c.h.b16 %v158
    %v996 = vunpack.c.l.b16 %v159
    %v997 = vunpack.c.h.b16 %v159
    %v998 = vunpack.c.l.b16 %v160
    %v999 = vunpack.c.h.b16 %v160
    %v1000 = vunpack.c.l.b16 %v161
    %v1001 = vunpack.c.h.b16 %v161
    %v1002 = vunpack.c.l.b16 %v162
    %v1003 = vunpack.c.h.b16 %v162
    %v1004 = vunpack.c.l.b16 %v163
    %v1005 = vunpack.c.h.b16 %v163
    %v1006 = vunpack.c.l.b16 %v164
    %v1007 = vunpack.c.h.b16 %v164
    %v1008 = vunpack.c.l.b16 %v165
    %v1009 = vunpack.c.h.b16 %v165
    %v1010 = vunpack.c.l.b16 %v166
    %v1011 = vunpack.c.h.b16 %v166
    %v1012 = vunpack.c.l.b16 %v167
    %v1013 = vunpack.c.h.b16 %v167
    %v1014 = vunpack.c.l.b16 %v168
    %v1015 = vunpack.c.h.b16 %v168
    %v1016 = vunpack.c.l.b16 %v169
    %v1017 = vunpack.c.h.b16 %v169
    %v1018 = vunpack.c.l.b16 %v170
    %v1019 = vunpack.c.h.b16 %v170
    %v1020 = vunpack.c.l.b16 %v171
    %v1021 = vunpack.c.h.b16 %v171
    %v1022 = vunpack.c.l.b16 %v172
    %v1023 = vunpack.c.h.b16 %v172
    %v1024 = vunpack.c.l.b16 %v173
    %v1025 = vunpack.c.h.b16 %v173
    %v1026 = vunpack.c.l.b16 %v174
    %v1027 = vunpack.c.h.b16 %v174
    %v1028 = vunpack.c.l.b16 %v175
    %v1029 = vunpack.c.h.b16 %v175
    %v1030 = vunpack.c.l.b16 %v176
    %v1031 = vunpack.c.h.b16 %v176
    %v1032 = vunpack.c.l.b16 %v177
    %v1033 = vunpack.c.h.b16 %v177
    %v1034 = vunpack.c.l.b16 %v178
    %v1035 = vunpack.c.h.b16 %v178
    %v1036 = vunpack.c.l.b16 %v179
    %v1037 = vunpack.c.h.b16 %v179
    %v1038 = vunpack.c.l.b16 %v180
    %v1039 = vunpack.c.h.b16 %v180
    %v1040 = vunpack.c.l.b16 %v181
    %v1041 = vunpack.c.h.b16 %v181
    %v1042 = vunpack.c.l.b16 %v182
    %v1043 = vunpack.c.h.b16 %v182
    %v1044 = vunpack.c.l.b16 %v183
    %v1045 = vunpack.c.h.b16 %v183
    %v1046 = vunpack.c.l.b16 %v184
    %v1047 = vunpack.c.h.b16 %v184
    %v1048 = vunpack.c.l.b16 %v185
    %v1049 = vunpack.c.h.b16 %v185
    %v1050 = vunpack.c.l.b16 %v186
    %v1051 = vunpack.c.h.b16 %v186
    %v1052 = vunpack.c.l.b16 %v187
    %v1053 = vunpack.c.h.b16 %v187
    %v1054 = vunpack.c.l.b16 %v188
    %v1055 = vunpack.c.h.b16 %v188
    %v1056 = vunpack.c.l.b16 %v189
    %v1057 = vunpack.c.h.b16 %v189
    %v1058 = vunpack.c.l.b16 %v190
    %v1059 = vunpack.c.h.b16 %v190
    %v1060 = vunpack.c.l.b16 %v191
    %v1061 = vunpack.c.h.b16 %v191
    %v1062 = vunpack.c.l.b16 %v192
    %v1063 = vunpack.c.h.b16 %v192
    %v1064 = vunpack.c.l.b16 %v193
    %v1065 = vunpack.c.h.b16 %v193
    %v1066 = vunpack.c.l.b16 %v194
    %v1067 = vunpack.c.h.b16 %v194
    %v1068 = vunpack.c.l.b16 %v195
    %v1069 = vunpack.c.h.b16 %v195
    %v1070 = vunpack.c.l.b16 %v196
    %v1071 = vunpack.c.h.b16 %v196
    %v1072 = vunpack.c.l.b16 %v197
    %v1073 = vunpack.c.h.b16 %v197
    %v1074 = vunpack.c.l.b16 %v198
    %v1075 = vunpack.c.h.b16 %v198
    %v1076 = vunpack.c.l.b16 %v199
    %v1077 = vunpack.c.h.b16 %v199
    %v1078 = vunpack.c.l.b16 %v200
    %v1079 = vunpack.c.h.b16 %v200
    %v1080 = vunpack.c.l.b16 %v201
    %v1081 = vunpack.c.h.b16 %v201
    %v1082 = vunpack.c.l.b16 %v202
    %v1083 = vunpack.c.h.b16 %v202
    %v1084 = vunpack.c.l.b16 %v203
    %v1085 = vunpack.c.h.b16 %v203
    %v1086 = vunpack.c.l.b16 %v204
    %v1087 = vunpack.c.h.b16 %v204
    %v1088 = vunpack.c.l.b16 %v205
    %v1089 = vunpack.c.h.b16 %v205
    %v1090 = vunpack.c.l.b16 %v206
    %v1091 = vunpack.c.h.b16 %v206
    %v1092 = vunpack.c.l.b16 %v207
    %v1093 = vunpack.c.h.b16 %v207
    %v1094 = vunpack.c.l.b16 %v208
    %v1095 = vunpack.c.h.b16 %v208
    %v1096 = vunpack.c.l.b16 %v209
    %v1097 = vunpack.c.h.b16 %v209
    %v1098 = vunpack.c.l.b16 %v210
    %v1099 = vunpack.c.h.b16 %v210
    %v1100 = vunpack.c.l.b16 %v211
    %v1101 = vunpack.c.h.b16 %v211
    %v1102 = vunpack.c.l.b16 %v212
    %v1103 = vunpack.c.h.b16 %v212
    %v1104 = vunpack.c.l.b16 %v213
    %v1105 = vunpack.c.h.b16 %v213
    %v1106 = vunpack.c.l.b16 %v214
    %v1107 = vunpack.c.h.b16 %v214
    %v1108 = vunpack.c.l.b16 %v215
    %v1109 = vunpack.c.h.b16 %v215
    %v1110 = vunpack.c.l.b16 %v216
    %v1111 = vunpack.c.h.b16 %v216
    %v1112 = vunpack.c.l.b16 %v217
    %v1113 = vunpack.c.h.b16 %v217
    %v1114 = vunpack.c.l.b16 %v218
    %v1115 = vunpack.c.h.b16 %v218
    %v1116 = vunpack.c.l.b16 %v219
    %v1117 = vunpack.c.h.b16 %v219
    %v1118 = vunpack.c.l.b16 %v220
    %v1119 = vunpack.c.h.b16 %v220
    %v1120 = vunpack.c.l.b16 %v221
    %v1121 = vunpack.c.h.b16 %v221
    %v1122 = vunpack.c.l.b16 %v222
    %v1123 = vunpack.c.h.b16 %v222
    %v1124 = vunpack.c.l.b16 %v223
    %v1125 = vunpack.c.h.b16 %v223
    %v1126 = vunpack.c.l.b16 %v224
    %v1127 = vunpack.c.h.b16 %v224
    %v1128 = vunpack.c.l.b16 %v225
    %v1129 = vunpack.c.h.b16 %v225
    %v1130 = vunpack.c.l.b16 %v226
    %v1131 = vunpack.c.h.b16 %v226
    %v1132 = vunpack.c.l.b16 %v227
    %v1133 = vunpack.c.h.b16 %v227
    %v1134 = vunpack.c.l.b16 %v228
    %v1135 = vunpack.c.h.b16 %v228
    %v1136 = vunpack.c.l.b16 %v229
    %v1137 = vunpack.c.h.b16 %v229
    %v1138 = vunpack.c.l.b16 %v230
    %v1139 = vunpack.c.h.b16 %v230
    %v1140 = vunpack.c.l.b16 %v231
    %v1141 = vunpack.c.h.b16 %v231
    %v1142 = vunpack.c.l.b16 %v232
    %v1143 = vunpack.c.h.b16 %v232
    %v1144 = vunpack.c.l.b16 %v233
    %v1145 = vunpack.c.h.b16 %v233
    %v1146 = vunpack.c.l.b16 %v234
    %v1147 = vunpack.c.h.b16 %v234
    %v1148 = vunpack.c.l.b16 %v235
    %v1149 = vunpack.c.h.b16 %v235
    %v1150 = vunpack.c.l.b16 %v236
    %v1151 = vunpack.c.h.b16 %v236
    %v1152 = vunpack.c.l.b16 %v237
    %v1153 = vunpack.c.h.b16 %v237
    %v1154 = vunpack.c.l.b16 %v238
    %v1155 = vunpack.c.h.b16 %v238
    %v1156 = vunpack.c.l.b16 %v239
    %v1157 = vunpack.c.h.b16 %v239
    %v1158 = vunpack.c.l.b16 %v240
    %v1159 = vunpack.c.h.b16 %v240
    %v1160 = vunpack.c.l.b16 %v241
    %v1161 = vunpack.c.h.b16 %v241
    %v1162 = vunpack.c.l.b16 %v242
    %v1163 = vunpack.c.h.b16 %v242
    %v1164 = vunpack.c.l.b16 %v243
    %v1165 = vunpack.c.h.b16 %v243
    %v1166 = vunpack.c.l.b16 %v244
    %v1167 = vunpack.c.h.b16 %v244
    %v1168 = vunpack.c.l.b16 %v245
    %v1169 = vunpack.c.h.b16 %v245
    %v1170 = vunpack.c.l.b16 %v246
    %v1171 = vunpack.c.h.b16 %v246
    %v1172 = vunpack.c.l.b16 %v247
    %v1173 = vunpack.c.h.b16 %v247
    %v1174 = vunpack.c.l.b16 %v248
    %v1175 = vunpack.c.h.b16 %v248
    %v1176 = vunpack.c.l.b16 %v249
    %v1177 = vunpack.c.h.b16 %v249
    %v1178 = vunpack.c.l.b16 %v250
    %v1179 = vunpack.c.h.b16 %v250
    %v1180 = vunpack.c.l.b16 %v251
    %v1181 = vunpack.c.h.b16 %v251
    %v1182 = vunpack.c.l.b16 %v252
    %v1183 = vunpack.c.h.b16 %v252
    %v1184 = vunpack.c.l.b16 %v253
    %v1185 = vunpack.c.h.b16 %v253
    %v1186 = vunpack.c.l.b16 %v254
    %v1187 = vunpack.c.h.b16 %v254
    %v1188 = vunpack.c.l.b16 %v255
    %v1189 = vunpack.c.h.b16 %v255
    %v1190 = vunpack.c.l.b16 %v256
    %v1191 = vunpack.c.h.b16 %v256
    %v1192 = vunpack.c.l.b16 %v257
    %v1193 = vunpack.c.h.b16 %v257
    %v1194 = vunpack.c.l.b16 %v258
    %v1195 = vunpack.c.h.b16 %v258
    %v1196 = vunpack.c.l.b16 %v259
    %v1197 = vunpack.c.h.b16 %v259
    %v1198 = vunpack.c.l.b16 %v260
    %v1199 = vunpack.c.h.b16 %v260
    %v1200 = vunpack.c.l.b16 %v261
    %v1201 = vunpack.c.h.b16 %v261
    %v1202 = vunpack.c.l.b16 %v262
    %v1203 = vunpack.c.h.b16 %v262
    %v1204 = vunpack.c.l.b16 %v263
    %v1205 = vunpack.c.h.b16 %v263
    %v1206 = vunpack.c.l.b16 %v264
    %v1207 = vunpack.c.h.b16 %v264
    %v1208 = vunpack.c.l.b16 %v265
    %v1209 = vunpack.c.h.b16 %v265
    %v1210 = vunpack.c.l.b16 %v266
    %v1211 = vunpack.c.h.b16 %v266
    %v1212 = vunpack.c.l.b16 %v267
    %v1213 = vunpack.c.h.b16 %v267
    %v1214 = vunpack.c.l.b16 %v268
    %v1215 = vunpack.c.h.b16 %v268
    %v1216 = vunpack.c.l.b16 %v269
    %v1217 = vunpack.c.h.b16 %v269
    %v1218 = vunpack.c.l.b16 %v270
    %v1219 = vunpack.c.h.b16 %v270
    %v1220 = vunpack.c.l.b16 %v271
    %v1221 = vunpack.c.h.b16 %v271
    %v1222 = vunpack.c.l.b16 %v272
    %v1223 = vunpack.c.h.b16 %v272
    %v1224 = vunpack.c.l.b16 %v273
    %v1225 = vunpack.c.h.b16 %v273
    %v1226 = vunpack.c.l.b16 %v274
    %v1227 = vunpack.c.h.b16 %v274
    %v1228 = vunpack.c.l.b16 %v275
    %v1229 = vunpack.c.h.b16 %v275
    %v1230 = vunpack.c.l.b16 %v276
    %v1231 = vunpack.c.h.b16 %v276
    %v1232 = vunpack.c.l.b16 %v277
    %v1233 = vunpack.c.h.b16 %v277
    %v1234 = vunpack.c.l.b16 %v278
    %v1235 = vunpack.c.h.b16 %v278
    %v1236 = vunpack.c.l.b16 %v279
    %v1237 = vunpack.c.h.b16 %v279
    %v1238 = vunpack.c.l.b16 %v280
    %v1239 = vunpack.c.h.b16 %v280
    %v1240 = vunpack.c.l.b16 %v281
    %v1241 = vunpack.c.h.b16 %v281
    %v1242 = vunpack.c.l.b16 %v282
    %v1243 = vunpack.c.h.b16 %v282
    %v1244 = vunpack.c.l.b16 %v283
    %v1245 = vunpack.c.h.b16 %v283
    %v1246 = vunpack.c.l.b16 %v284
    %v1247 = vunpack.c.h.b16 %v284
    %v1248 = vunpack.c.l.b16 %v285
    %v1249 = vunpack.c.h.b16 %v285
    %v1250 = vunpack.c.l.b16 %v286
    %v1251 = vunpack.c.h.b16 %v286
    %v1252 = vunpack.c.l.b16 %v287
    %v1253 = vunpack.c.h.b16 %v287
    %v1254 = vunpack.c.l.b16 %v288
    %v1255 = vunpack.c.h.b16 %v288
    %v1256 = vunpack.c.l.b16 %v289
    %v1257 = vunpack.c.h.b16 %v289
    %v1258 = vunpack.c.l.b16 %v290
    %v1259 = vunpack.c.h.b16 %v290
    %v1260 = vunpack.c.l.b16 %v291
    %v1261 = vunpack.c.h.b16 %v291
    %v1262 = vunpack.c.l.b16 %v292
    %v1263 = vunpack.c.h.b16 %v292
    %v1264 = vunpack.c.l.b16 %v293
    %v1265 = vunpack.c.h.b16 %v293
    %v1266 = vunpack.c.l.b16 %v294
    %v1267 = vunpack.c.h.b16 %v294
    %v1268 = vunpack.c.l.b16 %v295
    %v1269 = vunpack.c.h.b16 %v295
    %v1270 = vunpack.c.l.b16 %v296
    %v1271 = vunpack.c.h.b16 %v296
    %v1272 = vunpack.c.l.b16 %v297
    %v1273 = vunpack.c.h.b16 %v297
    %v1274 = vunpack.c.l.b16 %v298
    %v1275 = vunpack.c.h.b16 %v298
    %v1276 = vunpack.c.l.b16 %v299
    %v1277 = vunpack.c.h.b16 %v299
    %v1278 = vunpack.c.l.b16 %v300
    %v1279 = vunpack.c.h.b16 %v300
    %v1280 = vunpack.c.l.b16 %v301
    %v1281 = vunpack.c.h.b16 %v301
    %v1282 = vunpack.c.l.b16 %v302
    %v1283 = vunpack.c.h.b16 %v302
    %v1284 = vunpack.c.l.b16 %v303
    %v1285 = vunpack.c.h.b16 %v303
    %v1286 = vunpack.c.l.b16 %v304
    %v1287 = vunpack.c.h.b16 %v304
    %v1288 = vunpack.c.l.b16 %v305
    %v1289 = vunpack.c.h.b16 %v305
    %v1290 = vunpack.c.l.b16 %v306
    %v1291 = vunpack.c.h.b16 %v306
    %v1292 = vunpack.c.l.b16 %v307
    %v1293 = vunpack.c.h.b16 %v307
    %v1294 = vunpack.c.l.b16 %v308
    %v1295 = vunpack.c.h.b16 %v308
    %v1296 = vunpack.c.l.b16 %v309
    %v1297 = vunpack.c.h.b16 %v309
    %v1298 = vunpack.c.l.b16 %v310
    %v1299 = vunpack.c.h.b16 %v310
    %v1300 = vunpack.c.l.b16 %v311
    %v1301 = vunpack.c.h.b16 %v311
    %v1302 = vunpack.c.l.b16 %v312
    %v1303 = vunpack.c.h.b16 %v312
    %v1304 = vunpack.c.l.b16 %v313
    %v1305 = vunpack.c.h.b16 %v313
    %v1306 = vunpack.c.l.b16 %v314
    %v1307 = vunpack.c.h.b16 %v314
    %v1308 = vunpack.c.l.b16 %v315
    %v1309 = vunpack.c.h.b16 %v315
    %v1310 = vunpack.c.l.b16 %v316
    %v1311 = vunpack.c.h.b16 %v316
    %v1312 = vunpack.c.l.b16 %v317
    %v1313 = vunpack.c.h.b16 %v317
    %v1314 = vunpack.c.l.b16 %v318
    %v1315 = vunpack.c.h.b16 %v318
    %v1316 = vunpack.c.l.b16 %v319
    %v1317 = vunpack.c.h.b16 %v319
    %v1318 = vunpack.c.l.b16 %v320
    %v1319 = vunpack.c.h.b16 %v320
    %v1320 = vunpack.c.l.b16 %v321
    %v1321 = vunpack.c.h.b16 %v321
    %v1322 = vunpack.c.l.b16 %v322
    %v1323 = vunpack.c.h.b16 %v322
    %v1324 = vunpack.c.l.b16 %v323
    %v1325 = vunpack.c.h.b16 %v323
    %v1326 = vunpack.c.l.b16 %v324
    %v1327 = vunpack.c.h.b16 %v324
    %v1328 = vunpack.c.l.b16 %v325
    %v1329 = vunpack.c.h.b16 %v325
    %v1330 = vunpack.c.l.b16 %v326
    %v1331 = vunpack.c.h.b16 %v326
    %v1332 = vunpack.c.l.b16 %v327
    %v1333 = vunpack.c.h.b16 %v327
    %v1334 = vunpack.c.l.b16 %v328
    %v1335 = vunpack.c.h.b16 %v328
    %v1336 = vunpack.c.l.b16 %v329
    %v1337 = vunpack.c.h.b16 %v329
    %v1338 = vunpack.c.l.b16 %v330
    %v1339 = vunpack.c.h.b16 %v330
    %v1340 = vunpack.c.l.b16 %v331
    %v1341 = vunpack.c.h.b16 %v331
    %v1342 = vunpack.c.l.b16 %v332
    %v1343 = vunpack.c.h.b16 %v332
    %v1344 = vunpack.c.l.b16 %v333
    %v1345 = vunpack.c.h.b16 %v333
    %v1346 = vunpack.c.l.b16 %v334
    %v1347 = vunpack.c.h.b16 %v334
    %v1348 = vunpack.c.l.b16 %v335
    %v1349 = vunpack.c.h.b16 %v335
    %v1350 = vunpack.c.l.b16 %v336
    %v1351 = vunpack.c.h.b16 %v336
    %v1352 = vunpack.c.l.b16 %v337
    %v1353 = vunpack.c.h.b16 %v337
    %v1354 = vunpack.c.l.b16 %v338
    %v1355 = vunpack.c.h.b16 %v338
    %v1356 = vunpack.c.l.b16 %v339
    %v1357 = vunpack.c.h.b16 %v339
    %v1358 = vunpack.c.l.b16 %v340
    %v1359 = vunpack.c.h.b16 %v340
    %v1360 = vunpack.c.l.b16 %v341
    %v1361 = vunpack.c.h.b16 %v341
    %v1362 = vunpack.c.l.b16 %v342
    %v1363 = vunpack.c.h.b16 %v342
    %v1364 = vunpack.c.l.b16 %v343
    %v1365 = vunpack.c.h.b16 %v343
    %v1366 = vunpack.c.l.b16 %v344
    %v1367 = vunpack.c.h.b16 %v344
    %v1368 = vunpack.c.l.b16 %v345
    %v1369 = vunpack.c.h.b16 %v345
    %v1370 = vunpack.c.l.b16 %v346
    %v1371 = vunpack.c.h.b16 %v346
    %v1372 = vunpack.c.l.b16 %v347
    %v1373 = vunpack.c.h.b16 %v347
    %v1374 = vunpack.c.l.b16 %v348
    %v1375 = vunpack.c.h.b16 %v348
    %v1376 = vunpack.c.l.b16 %v349
    %v1377 = vunpack.c.h.b16 %v349
    %v1378 = vunpack.c.l.b16 %v350
    %v1379 = vunpack.c.h.b16 %v350
    %v1380 = vunpack.c.l.b16 %v351
    %v1381 = vunpack.c.h.b16 %v351
    %v1382 = vunpack.c.l.b16 %v352
    %v1383 = vunpack.c.h.b16 %v352
    %v1384 = vunpack.c.l.b16 %v353
    %v1385 = vunpack.c.h.b16 %v353
    %v1386 = vunpack.c.l.b16 %v354
    %v1387 = vunpack.c.h.b16 %v354
    %v1388 = vunpack.c.l.b16 %v355
    %v1389 = vunpack.c.h.b16 %v355
    %v1390 = vunpack.c.l.b16 %v356
    %v1391 = vunpack.c.h.b16 %v356
    %v1392 = vunpack.c.l.b16 %v357
    %v1393 = vunpack.c.h.b16 %v357
    %v1394 = vunpack.c.l.b16 %v358
    %v1395 = vunpack.c.h.b16 %v358
    %v1396 = vunpack.c.l.b16 %v359
    %v1397 = vunpack.c.h.b16 %v359
    %v1398 = vunpack.c.l.b16 %v360
    %v1399 = vunpack.c.h.b16 %v360
    %v1400 = vunpack.c.l.b16 %v361
    %v1401 = vunpack.c.h.b16 %v361
    %v1402 = vunpack.c.l.b16 %v362
    %v1403 = vunpack.c.h.b16 %v362
    %v1404 = vunpack.c.l.b16 %v363
    %v1405 = vunpack.c.h.b16 %v363
    %v1406 = vunpack.c.l.b16 %v364
    %v1407 = vunpack.c.h.b16 %v364
    %v1408 = vunpack.c.l.b16 %v365
    %v1409 = vunpack.c.h.b16 %v365
    %v1410 = vunpack.c.l.b16 %v366
    %v1411 = vunpack.c.h.b16 %v366
    %v1412 = vunpack.c.l.b16 %v367
    %v1413 = vunpack.c.h.b16 %v367
    %v1414 = vunpack.c.l.b16 %v368
    %v1415 = vunpack.c.h.b16 %v368
    %v1416 = vunpack.c.l.b16 %v369
    %v1417 = vunpack.c.h.b16 %v369
    %v1418 = vunpack.c.l.b16 %v370
    %v1419 = vunpack.c.h.b16 %v370
    %v1420 = vunpack.c.l.b16 %v371
    %v1421 = vunpack.c.h.b16 %v371
    %v1422 = vunpack.c.l.b16 %v372
    %v1423 = vunpack.c.h.b16 %v372
    %v1424 = vunpack.c.l.b16 %v373
    %v1425 = vunpack.c.h.b16 %v373
    %v1426 = vunpack.c.l.b16 %v374
    %v1427 = vunpack.c.h.b16 %v374
    %v1428 = vunpack.c.l.b16 %v375
    %v1429 = vunpack.c.h.b16 %v375
    %v1430 = vunpack.c.l.b16 %v376
    %v1431 = vunpack.c.h.b16 %v376
    %v1432 = vunpack.c.l.b16 %v377
    %v1433 = vunpack.c.h.b16 %v377
    %v1434 = vunpack.c.l.b16 %v378
    %v1435 = vunpack.c.h.b16 %v378
    %v1436 = vunpack.c.l.b16 %v379
    %v1437 = vunpack.c.h.b16 %v379
    %v1438 = vunpack.c.l.b16 %v380
    %v1439 = vunpack.c.h.b16 %v380
    %v1440 = vunpack.c.l.b16 %v381
    %v1441 = vunpack.c.h.b16 %v381
    %v1442 = vunpack.c.l.b16 %v382
    %v1443 = vunpack.c.h.b16 %v382
    %v1444 = vunpack.c.l.b16 %v383
    %v1445 = vunpack.c.h.b16 %v383
    %v1446 = vunpack.c.l.b16 %v384
    %v1447 = vunpack.c.h.b16 %v384
    %v1448 = vunpack.c.l.b16 %v385
    %v1449 = vunpack.c.h.b16 %v385
    %v1450 = vunpack.c.l.b16 %v386
    %v1451 = vunpack.c.h.b16 %v386
    %v1452 = vunpack.c.l.b16 %v387
    %v1453 = vunpack.c.h.b16 %v387
    %v1454 = vunpack.c.l.b16 %v388
    %v1455 = vunpack.c.h.b16 %v388
    %v1456 = vunpack.c.l.b16 %v389
    %v1457 = vunpack.c.h.b16 %v389
    %v1458 = vunpack.c.l.b16 %v390
    %v1459 = vunpack.c.h.b16 %v390
    %v1460 = vunpack.c.l.b16 %v391
    %v1461 = vunpack.c.h.b16 %v391
    %v1462 = vunpack.c.l.b16 %v392
    %v1463 = vunpack.c.h.b16 %v392
    %v1464 = vunpack.c.l.b16 %v393
    %v1465 = vunpack.c.h.b16 %v393
    %v1466 = vunpack.c.l.b16 %v394
    %v1467 = vunpack.c.h.b16 %v394
    %v1468 = vunpack.c.l.b16 %v395
    %v1469 = vunpack.c.h.b16 %v395
    %v1470 = vunpack.c.l.b16 %v396
    %v1471 = vunpack.c.h.b16 %v396
    %v1472 = vunpack.c.l.b16 %v397
    %v1473 = vunpack.c.h.b16 %v397
    %v1474 = vunpack.c.l.b16 %v398
    %v1475 = vunpack.c.h.b16 %v398
    %v1476 = vunpack.c.l.b16 %v399
    %v1477 = vunpack.c.h.b16 %v399
    %v1478 = vunpack.c.l.b16 %v400
    %v1479 = vunpack.c.h.b16 %v400
    %v1480 = vunpack.c.l.b16 %v401
    %v1481 = vunpack.c.h.b16 %v401
    %v1482 = vunpack.c.l.b16 %v402
    %v1483 = vunpack.c.h.b16 %v402
    %v1484 = vunpack.c.l.b16 %v403
    %v1485 = vunpack.c.h.b16 %v403
    %v1486 = vunpack.c.l.b16 %v404
    %v1487 = vunpack.c.h.b16 %v404
    %v1488 = vunpack.c.l.b16 %v405
    %v1489 = vunpack.c.h.b16 %v405
    %v1490 = vunpack.c.l.b16 %v406
    %v1491 = vunpack.c.h.b16 %v406
    %v1492 = vunpack.c.l.b16 %v407
    %v1493 = vunpack.c.h.b16 %v407
    %v1494 = vunpack.c.l.b16 %v408
    %v1495 = vunpack.c.h.b16 %v408
    %v1496 = vunpack.c.l.b16 %v409
    %v1497 = vunpack.c.h.b16 %v409
    %v1498 = vunpack.c.l.b16 %v410
    %v1499 = vunpack.c.h.b16 %v410
    %v1500 = vunpack.c.l.b16 %v411
    %v1501 = vunpack.c.h.b16 %v411
    %v1502 = vunpack.c.l.b16 %v412
    %v1503 = vunpack.c.h.b16 %v412
    %v1504 = vunpack.c.l.b16 %v413
    %v1505 = vunpack.c.h.b16 %v413
    %v1506 = vunpack.c.l.b16 %v414
    %v1507 = vunpack.c.h.b16 %v414
    %v1508 = vunpack.c.l.b16 %v415
    %v1509 = vunpack.c.h.b16 %v415
    %v1510 = vunpack.c.l.b16 %v416
    %v1511 = vunpack.c.h.b16 %v416
    %v1512 = vunpack.c.l.b16 %v417
    %v1513 = vunpack.c.h.b16 %v417
    %v1514 = vunpack.c.l.b16 %v418
    %v1515 = vunpack.c.h.b16 %v418
    %v1516 = vunpack.c.l.b16 %v419
    %v1517 = vunpack.c.h.b16 %v419
    %v1518 = vunpack.c.l.b16 %v420
    %v1519 = vunpack.c.h.b16 %v420
    %v1520 = vunpack.c.l.b16 %v421
    %v1521 = vunpack.c.h.b16 %v421
    %v1522 = vunpack.c.l.b16 %v422
    %v1523 = vunpack.c.h.b16 %v422
    %v1524 = vunpack.c.l.b16 %v423
    %v1525 = vunpack.c.h.b16 %v423
    %v1526 = vunpack.c.l.b16 %v424
    %v1527 = vunpack.c.h.b16 %v424
    %v1528 = vunpack.c.l.b16 %v425
    %v1529 = vunpack.c.h.b16 %v425
    %v1530 = vunpack.c.l.b16 %v426
    %v1531 = vunpack.c.h.b16 %v426
    %v1532 = vunpack.c.l.b16 %v427
    %v1533 = vunpack.c.h.b16 %v427
    %v1534 = vunpack.c.l.b16 %v428
    %v1535 = vunpack.c.h.b16 %v428
    %v1536 = vunpack.c.l.b16 %v429
    %v1537 = vunpack.c.h.b16 %v429
    %v1538 = vunpack.c.l.b16 %v430
    %v1539 = vunpack.c.h.b16 %v430
    %v1540 = vunpack.c.l.b16 %v431
    %v1541 = vunpack.c.h.b16 %v431
    %v1542 = vunpack.c.l.b16 %v432
    %v1543 = vunpack.c.h.b16 %v432
    %v1544 = vunpack.c.l.b16 %v433
    %v1545 = vunpack.c.h.b16 %v433
    %v1546 = vunpack.c.l.b16 %v434
    %v1547 = vunpack.c.h.b16 %v434
    %v1548 = vunpack.c.l.b16 %v435
    %v1549 = vunpack.c.h.b16 %v435
    %v1550 = vunpack.c.l.b16 %v436
    %v1551 = vunpack.c.h.b16 %v436
    %v1552 = vunpack.c.l.b16 %v437
    %v1553 = vunpack.c.h.b16 %v437
    %v1554 = vunpack.c.l.b16 %v438
    %v1555 = vunpack.c.h.b16 %v438
    %v1556 = vunpack.c.l.b16 %v439
    %v1557 = vunpack.c.h.b16 %v439
    %v1558 = vunpack.c.l.b16 %v440
    %v1559 = vunpack.c.h.b16 %v440
    %v1560 = vunpack.c.l.b16 %v441
    %v1561 = vunpack.c.h.b16 %v441
    %v1562 = vunpack.c.l.b16 %v442
    %v1563 = vunpack.c.h.b16 %v442
    %v1564 = vunpack.c.l.b16 %v443
    %v1565 = vunpack.c.h.b16 %v443
    %v1566 = vunpack.c.l.b16 %v444
    %v1567 = vunpack.c.h.b16 %v444
    %v1568 = vunpack.c.l.b16 %v445
    %v1569 = vunpack.c.h.b16 %v445
    %v1570 = vunpack.c.l.b16 %v446
    %v1571 = vunpack.c.h.b16 %v446
    %v1572 = vunpack.c.l.b16 %v447
    %v1573 = vunpack.c.h.b16 %v447
    %v1574 = vunpack.c.l.b16 %v448
    %v1575 = vunpack.c.h.b16 %v448
    %v1576 = vunpack.c.l.b16 %v449
    %v1577 = vunpack.c.h.b16 %v449
    %v1578 = vunpack.c.l.b16 %v450
    %v1579 = vunpack.c.h.b16 %v450
    %v1580 = vunpack.c.l.b16 %v451
    %v1581 = vunpack.c.h.b16 %v451
    %v1582 = vunpack.c.l.b16 %v452
    %v1583 = vunpack.c.h.b16 %v452
    %v1584 = vunpack.c.l.b16 %v453
    %v1585 = vunpack.c.h.b16 %v453
    %v1586 = vunpack.c.l.b16 %v454
    %v1587 = vunpack.c.h.b16 %v454
    %v1588 = vunpack.c.l.b16 %v455
    %v1589 = vunpack.c.h.b16 %v455
    %v1590 = vunpack.c.l.b16 %v456
    %v1591 = vunpack.c.h.b16 %v456
    %v1592 = vunpack.c.l.b16 %v457
    %v1593 = vunpack.c.h.b16 %v457
    %v1594 = vunpack.c.l.b16 %v458
    %v1595 = vunpack.c.h.b16 %v458
    %v1596 = vunpack.c.l.b16 %v459
    %v1597 = vunpack.c.h.b16 %v459
    %v1598 = vunpack.c.l.b16 %v460
    %v1599 = vunpack.c.h.b16 %v460
    %v1600 = vunpack.c.l.b16 %v461
    %v1601 = vunpack.c.h.b16 %v461
    %v1602 = vunpack.c.l.b16 %v462
    %v1603 = vunpack.c.h.b16 %v462
    %v1604 = vunpack.c.l.b16 %v463
    %v1605 = vunpack.c.h.b16 %v463
    %v1606 = vunpack.c.l.b16 %v464
    %v1607 = vunpack.c.h.b16 %v464
    %v1608 = vunpack.c.l.b16 %v465
    %v1609 = vunpack.c.h.b16 %v465
    %v1610 = vunpack.c.l.b16 %v466
    %v1611 = vunpack.c.h.b16 %v466
    %v1612 = vunpack.c.l.b16 %v467
    %v1613 = vunpack.c.h.b16 %v467
    %v1614 = vunpack.c.l.b16 %v468
    %v1615 = vunpack.c.h.b16 %v468
    %v1616 = vunpack.c.l.b16 %v469
    %v1617 = vunpack.c.h.b16 %v469
    %v1618 = vunpack.c.l.b16 %v470
    %v1619 = vunpack.c.h.b16 %v470
    %v1620 = vunpack.c.l.b16 %v471
    %v1621 = vunpack.c.h.b16 %v471
    %v1622 = vunpack.c.l.b16 %v472
    %v1623 = vunpack.c.h.b16 %v472
    %v1624 = vunpack.c.l.b16 %v473
    %v1625 = vunpack.c.h.b16 %v473
    %v1626 = vunpack.c.l.b16 %v474
    %v1627 = vunpack.c.h.b16 %v474
    %v1628 = vunpack.c.l.b16 %v475
    %v1629 = vunpack.c.h.b16 %v475
    %v1630 = vunpack.c.l.b16 %v476
    %v1631 = vunpack.c.h.b16 %v476
    %v1632 = vunpack.c.l.b16 %v477
    %v1633 = vunpack.c.h.b16 %v477
    %v1634 = vunpack.c.l.b16 %v478
    %v1635 = vunpack.c.h.b16 %v478
    %v1636 = vunpack.c.l.b16 %v479
    %v1637 = vunpack.c.h.b16 %v479
    %v1638 = vunpack.c.l.b16 %v480
    %v1639 = vunpack.c.h.b16 %v480
    %v1640 = vunpack.c.l.b16 %v481
    %v1641 = vunpack.c.h.b16 %v481
    %v1642 = vunpack.c.l.b16 %v482
    %v1643 = vunpack.c.h.b16 %v482
    %v1644 = vunpack.c.l.b16 %v483
    %v1645 = vunpack.c.h.b16 %v483
    %v1646 = vunpack.c.l.b16 %v484
    %v1647 = vunpack.c.h.b16 %v484
    %v1648 = vunpack.c.l.b16 %v485
    %v1649 = vunpack.c.h.b16 %v485
    %v1650 = vunpack.c.l.b16 %v486
    %v1651 = vunpack.c.h.b16 %v486
    %v1652 = vunpack.c.l.b16 %v487
    %v1653 = vunpack.c.h.b16 %v487
    %v1654 = vunpack.c.l.b16 %v488
    %v1655 = vunpack.c.h.b16 %v488
    %v1656 = vunpack.c.l.b16 %v489
    %v1657 = vunpack.c.h.b16 %v489
    %v1658 = vunpack.c.l.b16 %v490
    %v1659 = vunpack.c.h.b16 %v490
    %v1660 = vunpack.c.l.b16 %v491
    %v1661 = vunpack.c.h.b16 %v491
    %v1662 = vunpack.c.l.b16 %v492
    %v1663 = vunpack.c.h.b16 %v492
    %v1664 = vunpack.c.l.b16 %v493
    %v1665 = vunpack.c.h.b16 %v493
    %v1666 = vunpack.c.l.b16 %v494
    %v1667 = vunpack.c.h.b16 %v494
    %v1668 = vunpack.c.l.b16 %v495
    %v1669 = vunpack.c.h.b16 %v495
    %v1670 = vunpack.c.l.b16 %v496
    %v1671 = vunpack.c.h.b16 %v496
    %v1672 = vunpack.c.l.b16 %v497
    %v1673 = vunpack.c.h.b16 %v497
    %v1674 = vunpack.c.l.b16 %v498
    %v1675 = vunpack.c.h.b16 %v498
    %v1676 = vunpack.c.l.b16 %v499
    %v1677 = vunpack.c.h.b16 %v499
    %v1678 = vunpack.c.l.b16 %v500
    %v1679 = vunpack.c.h.b16 %v500
    %v1680 = vunpack.c.l.b16 %v501
    %v1681 = vunpack.c.h.b16 %v501
    %v1682 = vunpack.c.l.b16 %v502
    %v1683 = vunpack.c.h.b16 %v502
    %v1684 = vunpack.c.l.b16 %v503
    %v1685 = vunpack.c.h.b16 %v503
    %v1686 = vunpack.c.l.b16 %v504
    %v1687 = vunpack.c.h.b16 %v504
    %v1688 = vunpack.c.l.b16 %v505
    %v1689 = vunpack.c.h.b16 %v505
    %v1690 = vunpack.c.l.b16 %v506
    %v1691 = vunpack.c.h.b16 %v506
    %v1692 = vunpack.c.l.b16 %v507
    %v1693 = vunpack.c.h.b16 %v507
    %v1694 = vunpack.c.l.b16 %v508
    %v1695 = vunpack.c.h.b16 %v508
    %v1696 = vunpack.c.l.b16 %v509
    %v1697 = vunpack.c.h.b16 %v509
    %v1698 = vunpack.c.l.b16 %v510
    %v1699 = vunpack.c.h.b16 %v510
    %v1700 = vunpack.c.l.b16 %v511
    %v1701 = vunpack.c.h.b16 %v511
    %v1702 = vunpack.c.l.b16 %v512
    %v1703 = vunpack.c.h.b16 %v512
    %v1704 = vunpack.c.l.b16 %v513
    %v1705 = vunpack.c.h.b16 %v513
    %v1706 = vunpack.c.l.b16 %v514
    %v1707 = vunpack.c.h.b16 %v514
    %v1708 = vunpack.c.l.b16 %v515
    %v1709 = vunpack.c.h.b16 %v515
    %v1710 = vunpack.c.l.b16 %v516
    %v1711 = vunpack.c.h.b16 %v516
    %v1712 = vunpack.c.l.b16 %v517
    %v1713 = vunpack.c.h.b16 %v517
    %v1714 = vunpack.c.l.b16 %v518
    %v1715 = vunpack.c.h.b16 %v518
    %v1716 = vunpack.c.l.b16 %v519
    %v1717 = vunpack.c.h.b16 %v519
    %v1718 = vunpack.c.l.b16 %v520
    %v1719 = vunpack.c.h.b16 %v520
    %v1720 = vunpack.c.l.b16 %v521
    %v1721 = vunpack.c.h.b16 %v521
    %v1722 = vunpack.c.l.b16 %v522
    %v1723 = vunpack.c.h.b16 %v522
    %v1724 = vunpack.c.l.b16 %v523
    %v1725 = vunpack.c.h.b16 %v523
    %v1726 = vunpack.c.l.b16 %v524
    %v1727 = vunpack.c.h.b16 %v524
    %v1728 = vunpack.c.l.b16 %v525
    %v1729 = vunpack.c.h.b16 %v525
    %v1730 = vunpack.c.l.b16 %v526
    %v1731 = vunpack.c.h.b16 %v526
    %v1732 = vunpack.c.l.b16 %v527
    %v1733 = vunpack.c.h.b16 %v527
    %v1734 = vunpack.c.l.b16 %v528
    %v1735 = vunpack.c.h.b16 %v528
    %v1736 = vunpack.c.l.b16 %v529
    %v1737 = vunpack.c.h.b16 %v529
    %v1738 = vunpack.c.l.b16 %v530
    %v1739 = vunpack.c.h.b16 %v530
    %v1740 = vunpack.c.l.b16 %v531
    %v1741 = vunpack.c.h.b16 %v531
    %v1742 = vunpack.c.l.b16 %v532
    %v1743 = vunpack.c.h.b16 %v532
    %v1744 = vunpack.c.l.b16 %v533
    %v1745 = vunpack.c.h.b16 %v533
    %v1746 = vunpack.c.l.b16 %v534
    %v1747 = vunpack.c.h.b16 %v534
    %v1748 = vunpack.c.l.b16 %v535
    %v1749 = vunpack.c.h.b16 %v535
    %v1750 = vunpack.c.l.b16 %v536
    %v1751 = vunpack.c.h.b16 %v536
    %v1752 = vunpack.c.l.b16 %v537
    %v1753 = vunpack.c.h.b16 %v537
    %v1754 = vunpack.c.l.b16 %v538
    %v1755 = vunpack.c.h.b16 %v538
    %v1756 = vunpack.c.l.b16 %v539
    %v1757 = vunpack.c.h.b16 %v539
    %v1758 = vpack.c.b16 %v982, %v974
    %v1759 = vpack.c.b16 %v983, %v975
    %v1760 = vpack.c.b16 %v984, %v976
    %v1761 = vpack.c.b16 %v985, %v977
    %v1762 = vpack.c.b16 %v986, %v978
    %v1763 = vpack.c.b16 %v987, %v979
    %v1764 = vpack.c.b16 %v988, %v980
    %v1765 = vpack.c.b16 %v989, %v981
    %v1766 = vpack.c.b16 %v998, %v990
    %v1767 = vpack.c.b16 %v999, %v991
    %v1768 = vpack.c.b16 %v1000, %v992
    %v1769 = vpack.c.b16 %v1001, %v993
    %v1770 = vpack.c.b16 %v1002, %v994
    %v1771 = vpack.c.b16 %v1003, %v995
    %v1772 = vpack.c.b16 %v1004, %v996
    %v1773 = vpack.c.b16 %v1005, %v997
    %v1774 = vpack.c.b16 %v1014, %v1006
    %v1775 = vpack.c.b16 %v1015, %v1007
    %v1776 = vpack.c.b16 %v1016, %v1008
    %v1777 = vpack.c.b16 %v1017, %v1009
    %v1778 = vpack.c.b16 %v1018, %v1010
    %v1779 = vpack.c.b16 %v1019, %v1011
    %v1780 = vpack.c.b16 %v1020, %v1012
    %v1781 = vpack.c.b16 %v1021, %v1013
    %v1782 = vpack.c.b16 %v1030, %v1022
    %v1783 = vpack.c.b16 %v1031, %v1023
    %v1784 = vpack.c.b16 %v1032, %v1024
    %v1785 = vpack.c.b16 %v1033, %v1025
    %v1786 = vpack.c.b16 %v1034, %v1026
    %v1787 = vpack.c.b16 %v1035, %v1027
    %v1788 = vpack.c.b16 %v1036, %v1028
    %v1789 = vpack.c.b16 %v1037, %v1029
    %v1790 = vpack.c.b16 %v1046, %v1038
    %v1791 = vpack.c.b16 %v1047, %v1039
    %v1792 = vpack.c.b16 %v1048, %v1040
    %v1793 = vpack.c.b16 %v1049, %v1041
    %v1794 = vpack.c.b16 %v1050, %v1042
    %v1795 = vpack.c.b16 %v1051, %v1043
    %v1796 = vpack.c.b16 %v1052, %v1044
    %v1797 = vpack.c.b16 %v1053, %v1045
    %v1798 = vpack.c.b16 %v1062, %v1054
    %v1799 = vpack.c.b16 %v1063, %v1055
    %v1800 = vpack.c.b16 %v1064, %v1056
    %v1801 = vpack.c.b16 %v1065, %v1057
    %v1802 = vpack.c.b16 %v1066, %v1058
    %v1803 = vpack.c.b16 %v1067, %v1059
    %v1804 = vpack.c.b16 %v1068, %v1060
    %v1805 = vpack.c.b16 %v1069, %v1061
    %v1806 = vpack.c.b16 %v1078, %v1070
    %v1807 = vpack.c.b16 %v1079, %v1071
    %v1808 = vpack.c.b16 %v1080, %v1072
    %v1809 = vpack.c.b16 %v1081, %v1073
    %v1810 = vpack.c.b16 %v1082, %v1074
    %v1811 = vpack.c.b16 %v1083, %v1075
    %v1812 = vpack.c.b16 %v1084, %v1076
    %v1813 = vpack.c.b16 %v1085, %v1077
    %v1814 = vpack.c.b16 %v1094, %v1086
    %v1815 = vpack.c.b16 %v1095, %v1087
    %v1816 = vpack.c.b16 %v1096, %v1088
    %v1817 = vpack.c.b16 %v1097, %v1089
    %v1818 = vpack.c.b16 %v1098, %v1090
    %v1819 = vpack.c.b16 %v1099, %v1091
    %v1820 = vpack.c.b16 %v1100, %v1092
    %v1821 = vpack.c.b16 %v1101, %v1093
    %v1822 = vpack.c.b16 %v1110, %v1102
    %v1823 = vpack.c.b16 %v1111, %v1103
    %v1824 = vpack.c.b16 %v1112, %v1104
    %v1825 = vpack.c.b16 %v1113, %v1105
    %v1826 = vpack.c.b16 %v1114, %v1106
    %v1827 = vpack.c.b16 %v1115, %v1107
    %v1828 = vpack.c.b16 %v1116, %v1108
    %v1829 = vpack.c.b16 %v1117, %v1109
    %v1830 = vpack.c.b16 %v1126, %v1118
    %v1831 = vpack.c.b16 %v1127, %v1119
    %v1832 = vpack.c.b16 %v1128, %v1120
    %v1833 = vpack.c.b16 %v1129, %v1121
    %v1834 = vpack.c.b16 %v1130, %v1122
    %v1835 = vpack.c.b16 %v1131, %v1123
    %v1836 = vpack.c.b16 %v1132, %v1124
    %v1837 = vpack.c.b16 %v1133, %v1125
    %v1838 = vpack.c.b16 %v1142, %v1134
    %v1839 = vpack.c.b16 %v1143, %v1135
    %v1840 = vpack.c.b16 %v1144, %v1136
    %v1841 = vpack.c.b16 %v1145, %v1137
    %v1842 = vpack.c.b16 %v1146, %v1138
    %v1843 = vpack.c.b16 %v1147, %v1139
    %v1844 = vpack.c.b16 %v1148, %v1140
    %v1845 = vpack.c.b16 %v1149, %v1141
    %v1846 = vpack.c.b16 %v1158, %v1150
    %v1847 = vpack.c.b16 %v1159, %v1151
    %v1848 = vpack.c.b16 %v1160, %v1152
    %v1849 = vpack.c.b16 %v1161, %v1153
    %v1850 = vpack.c.b16 %v1162, %v1154
    %v1851 = vpack.c.b16 %v1163, %v1155
    %v1852 = vpack.c.b16 %v1164, %v1156
    %v1853 = vpack.c.b16 %v1165, %v1157
    %v1854 = vpack.c.b16 %v1174, %v1166
    %v1855 = vpack.c.b16 %v1175, %v1167
    %v1856 = vpack.c.b16 %v1176, %v1168
    %v1857 = vpack.c.b16 %v1177, %v1169
    %v1858 = vpack.c.b16 %v1178, %v1170
    %v1859 = vpack.c.b16 %v1179, %v1171
    %v1860 = vpack.c.b16 %v1180, %v1172
    %v1861 = vpack.c.b16 %v1181, %v1173
    %v1862 = vpack.c.b16 %v1190, %v1182
    %v1863 = vpack.c.b16 %v1191, %v1183
    %v1864 = vpack.c.b16 %v1192, %v1184
    %v1865 = vpack.c.b16 %v1193, %v1185
    %v1866 = vpack.c.b16 %v1194, %v1186
    %v1867 = vpack.c.b16 %v1195, %v1187
    %v1868 = vpack.c.b16 %v1196, %v1188
    %v1869 = vpack.c.b16 %v1197, %v1189
    %v1870 = vpack.c.b16 %v1206, %v1198
    %v1871 = vpack.c.b16 %v1207, %v1199
    %v1872 = vpack.c.b16 %v1208, %v1200
    %v1873 = vpack.c.b16 %v1209, %v1201
    %v1874 = vpack.c.b16 %v1210, %v1202
    %v1875 = vpack.c.b16 %v1211, %v1203
    %v1876 = vpack.c.b16 %v1212, %v1204
    %v1877 = vpack.c.b16 %v1213, %v1205
    %v1878 = vpack.c.b16 %v1222, %v1214
    %v1879 = vpack.c.b16 %v1223, %v1215
    %v1880 = vpack.c.b16 %v1224, %v1216
    %v1881 = vpack.c.b16 %v1225, %v1217
    %v1882 = vpack.c.b16 %v1226, %v1218
    %v1883 = vpack.c.b16 %v1227, %v1219
    %v1884 = vpack.c.b16 %v1228, %v1220
    %v1885 = vpack.c.b16 %v1229, %v1221
    %v1886 = vpack.c.b16 %v1238, %v1230
    %v1887 = vpack.c.b16 %v1239, %v1231
    %v1888 = vpack.c.b16 %v1240, %v1232
    %v1889 = vpack.c.b16 %v1241, %v1233
    %v1890 = vpack.c.b16 %v1242, %v1234
    %v1891 = vpack.c.b16 %v1243, %v1235
    %v1892 = vpack.c.b16 %v1244, %v1236
    %v1893 = vpack.c.b16 %v1245, %v1237
    %v1894 = vpack.c.b16 %v1254, %v1246
    %v1895 = vpack.c.b16 %v1255, %v1247
    %v1896 = vpack.c.b16 %v1256, %v1248
    %v1897 = vpack.c.b16 %v1257, %v1249
    %v1898 = vpack.c.b16 %v1258, %v1250
    %v1899 = vpack.c.b16 %v1259, %v1251
    %v1900 = vpack.c.b16 %v1260, %v1252
    %v1901 = vpack.c.b16 %v1261, %v1253
    %v1902 = vpack.c.b16 %v1270, %v1262
    %v1903 = vpack.c.b16 %v1271, %v1263
    %v1904 = vpack.c.b16 %v1272, %v1264
    %v1905 = vpack.c.b16 %v1273, %v1265
    %v1906 = vpack.c.b16 %v1274, %v1266
    %v1907 = vpack.c.b16 %v1275, %v1267
    %v1908 = vpack.c.b16 %v1276, %v1268
    %v1909 = vpack.c.b16 %v1277, %v1269
    %v1910 = vpack.c.b16 %v1286, %v1278
    %v1911 = vpack.c.b16 %v1287, %v1279
    %v1912 = vpack.c.b16 %v1288, %v1280
    %v1913 = vpack.c.b16 %v1289, %v1281
    %v1914 = vpack.c.b16 %v1290, %v1282
    %v1915 = vpack.c.b16 %v1291, %v1283
    %v1916 = vpack.c.b16 %v1292, %v1284
    %v1917 = vpack.c.b16 %v1293, %v1285
    %v1918 = vpack.c.b16 %v1302, %v1294
    %v1919 = vpack.c.b16 %v1303, %v1295
    %v1920 = vpack.c.b16 %v1304, %v1296
    %v1921 = vpack.c.b16 %v1305, %v1297
    %v1922 = vpack.c.b16 %v1306, %v1298
    %v1923 = vpack.c.b16 %v1307, %v1299
    %v1924 = vpack.c.b16 %v1308, %v1300
    %v1925 = vpack.c.b16 %v1309, %v1301
    %v1926 = vpack.c.b16 %v1318, %v1310
    %v1927 = vpack.c.b16 %v1319, %v1311
    %v1928 = vpack.c.b16 %v1320, %v1312
    %v1929 = vpack.c.b16 %v1321, %v1313
    %v1930 = vpack.c.b16 %v1322, %v1314
    %v1931 = vpack.c.b16 %v1323, %v1315
    %v1932 = vpack.c.b16 %v1324, %v1316
    %v1933 = vpack.c.b16 %v1325, %v1317
    %v1934 = vpack.c.b16 %v1334, %v1326
    %v1935 = vpack.c.b16 %v1335, %v1327
    %v1936 = vpack.c.b16 %v1336, %v1328
    %v1937 = vpack.c.b16 %v1337, %v1329
    %v1938 = vpack.c.b16 %v1338, %v1330
    %v1939 = vpack.c.b16 %v1339, %v1331
    %v1940 = vpack.c.b16 %v1340, %v1332
    %v1941 = vpack.c.b16 %v1341, %v1333
    %v1942 = vpack.c.b16 %v1350, %v1342
    %v1943 = vpack.c.b16 %v1351, %v1343
    %v1944 = vpack.c.b16 %v1352, %v1344
    %v1945 = vpack.c.b16 %v1353, %v1345
    %v1946 = vpack.c.b16 %v1354, %v1346
    %v1947 = vpack.c.b16 %v1355, %v1347
    %v1948 = vpack.c.b16 %v1356, %v1348
    %v1949 = vpack.c.b16 %v1357, %v1349
    %v1950 = vpack.c.b16 %v1366, %v1358
    %v1951 = vpack.c.b16 %v1367, %v1359
    %v1952 = vpack.c.b16 %v1368, %v1360
    %v1953 = vpack.c.b16 %v1369, %v1361
    %v1954 = vpack.c.b16 %v1370, %v1362
    %v1955 = vpack.c.b16 %v1371, %v1363
    %v1956 = vpack.c.b16 %v1372, %v1364
    %v1957 = vpack.c.b16 %v1373, %v1365
    %v1958 = vpack.c.b16 %v1382, %v1374
    %v1959 = vpack.c.b16 %v1383, %v1375
    %v1960 = vpack.c.b16 %v1384, %v1376
    %v1961 = vpack.c.b16 %v1385, %v1377
    %v1962 = vpack.c.b16 %v1386, %v1378
    %v1963 = vpack.c.b16 %v1387, %v1379
    %v1964 = vpack.c.b16 %v1388, %v1380
    %v1965 = vpack.c.b16 %v1389, %v1381
    %v1966 = vpack.c.b16 %v1398, %v1390
    %v1967 = vpack.c.b16 %v1399, %v1391
    %v1968 = vpack.c.b16 %v1400, %v1392
    %v1969 = vpack.c.b16 %v1401, %v1393
    %v1970 = vpack.c.b16 %v1402, %v1394
    %v1971 = vpack.c.b16 %v1403, %v1395
    %v1972 = vpack.c.b16 %v1404, %v1396
    %v1973 = vpack.c.b16 %v1405, %v1397
    %v1974 = vpack.c.b16 %v1414, %v1406
    %v1975 = vpack.c.b16 %v1415, %v1407
    %v1976 = vpack.c.b16 %v1416, %v1408
    %v1977 = vpack.c.b16 %v1417, %v1409
    %v1978 = vpack.c.b16 %v1418, %v1410
    %v1979 = vpack.c.b16 %v1419, %v1411
    %v1980 = vpack.c.b16 %v1420, %v1412
    %v1981 = vpack.c.b16 %v1421, %v1413
    %v1982 = vpack.c.b16 %v1430, %v1422
    %v1983 = vpack.c.b16 %v1431, %v1423
    %v1984 = vpack.c.b16 %v1432, %v1424
    %v1985 = vpack.c.b16 %v1433, %v1425
    %v1986 = vpack.c.b16 %v1434, %v1426
    %v1987 = vpack.c.b16 %v1435, %v1427
    %v1988 = vpack.c.b16 %v1436, %v1428
    %v1989 = vpack.c.b16 %v1437, %v1429
    %v1990 = vpack.c.b16 %v1446, %v1438
    %v1991 = vpack.c.b16 %v1447, %v1439
    %v1992 = vpack.c.b16 %v1448, %v1440
    %v1993 = vpack.c.b16 %v1449, %v1441
    %v1994 = vpack.c.b16 %v1450, %v1442
    %v1995 = vpack.c.b16 %v1451, %v1443
    %v1996 = vpack.c.b16 %v1452, %v1444
    %v1997 = vpack.c.b16 %v1453, %v1445
    %v1998 = vpack.c.b16 %v1462, %v1454
    %v1999 = vpack.c.b16 %v1463, %v1455
    %v2000 = vpack.c.b16 %v1464, %v1456
    %v2001 = vpack.c.b16 %v1465, %v1457
    %v2002 = vpack.c.b16 %v1466, %v1458
    %v2003 = vpack.c.b16 %v1467, %v1459
    %v2004 = vpack.c.b16 %v1468, %v1460
    %v2005 = vpack.c.b16 %v1469, %v1461
    %v2006 = vpack.c.b16 %v1478, %v1470
    %v2007 = vpack.c.b16 %v1479, %v1471
    %v2008 = vpack.c.b16 %v1480, %v1472
    %v2009 = vpack.c.b16 %v1481, %v1473
    %v2010 = vpack.c.b16 %v1482, %v1474
    %v2011 = vpack.c.b16 %v1483, %v1475
    %v2012 = vpack.c.b16 %v1484, %v1476
    %v2013 = vpack.c.b16 %v1485, %v1477
    %v2014 = vpack.c.b16 %v1494, %v1486
    %v2015 = vpack.c.b16 %v1495, %v1487
    %v2016 = vpack.c.b16 %v1496, %v1488
    %v2017 = vpack.c.b16 %v1497, %v1489
    %v2018 = vpack.c.b16 %v1498, %v1490
    %v2019 = vpack.c.b16 %v1499, %v1491
    %v2020 = vpack.c.b16 %v1500, %v1492
    %v2021 = vpack.c.b16 %v1501, %v1493
    %v2022 = vpack.c.b16 %v1510, %v1502
    %v2023 = vpack.c.b16 %v1511, %v1503
    %v2024 = vpack.c.b16 %v1512, %v1504
    %v2025 = vpack.c.b16 %v1513, %v1505
    %v2026 = vpack.c.b16 %v1514, %v1506
    %v2027 = vpack.c.b16 %v1515, %v1507
    %v2028 = vpack.c.b16 %v1516, %v1508
    %v2029 = vpack.c.b16 %v1517, %v1509
    %v2030 = vpack.c.b16 %v1526, %v1518
    %v2031 = vpack.c.b16 %v1527, %v1519
    %v2032 = vpack.c.b16 %v1528, %v1520
    %v2033 = vpack.c.b16 %v1529, %v1521
    %v2034 = vpack.c.b16 %v1530, %v1522
    %v2035 = vpack.c.b16 %v1531, %v1523
    %v2036 = vpack.c.b16 %v1532, %v1524
    %v2037 = vpack.c.b16 %v1533, %v1525
    %v2038 = vpack.c.b16 %v1542, %v1534
    %v2039 = vpack.c.b16 %v1543, %v1535
    %v2040 = vpack.c.b16 %v1544, %v1536
    %v2041 = vpack.c.b16 %v1545, %v1537
    %v2042 = vpack.c.b16 %v1546, %v1538
    %v2043 = vpack.c.b16 %v1547, %v1539
    %v2044 = vpack.c.b16 %v1548, %v1540
    %v2045 = vpack.c.b16 %v1549, %v1541
    %v2046 = vpack.c.b16 %v1558, %v1550
    %v2047 = vpack.c.b16 %v1559, %v1551
    %v2048 = vpack.c.b16 %v1560, %v1552
    %v2049 = vpack.c.b16 %v1561, %v1553
    %v2050 = vpack.c.b16 %v1562, %v1554
    %v2051 = vpack.c.b16 %v1563, %v1555
    %v2052 = vpack.c.b16 %v1564, %v1556
    %v2053 = vpack.c.b16 %v1565, %v1557
    %v2054 = vpack.c.b16 %v1574, %v1566
    %v2055 = vpack.c.b16 %v1575, %v1567
    %v2056 = vpack.c.b16 %v1576, %v1568
    %v2057 = vpack.c.b16 %v1577, %v1569
    %v2058 = vpack.c.b16 %v1578, %v1570
    %v2059 = vpack.c.b16 %v1579, %v1571
    %v2060 = vpack.c.b16 %v1580, %v1572
    %v2061 = vpack.c.b16 %v1581, %v1573
    %v2062 = vpack.c.b16 %v1590, %v1582
    %v2063 = vpack.c.b16 %v1591, %v1583
    %v2064 = vpack.c.b16 %v1592, %v1584
    %v2065 = vpack.c.b16 %v1593, %v1585
    %v2066 = vpack.c.b16 %v1594, %v1586
    %v2067 = vpack.c.b16 %v1595, %v1587
    %v2068 = vpack.c.b16 %v1596, %v1588
    %v2069 = vpack.c.b16 %v1597, %v1589
    %v2070 = vpack.c.b16 %v1606, %v1598
    %v2071 = vpack.c.b16 %v1607, %v1599
    %v2072 = vpack.c.b16 %v1608, %v1600
    %v2073 = vpack.c.b16 %v1609, %v1601
    %v2074 = vpack.c.b16 %v1610, %v1602
    %v2075 = vpack.c.b16 %v1611, %v1603
    %v2076 = vpack.c.b16 %v1612, %v1604
    %v2077 = vpack.c.b16 %v1613, %v1605
    %v2078 = vpack.c.b16 %v1622, %v1614
    %v2079 = vpack.c.b16 %v1623, %v1615
    %v2080 = vpack.c.b16 %v1624, %v1616
    %v2081 = vpack.c.b16 %v1625, %v1617
    %v2082 = vpack.c.b16 %v1626, %v1618
    %v2083 = vpack.c.b16 %v1627, %v1619
    %v2084 = vpack.c.b16 %v1628, %v1620
    %v2085 = vpack.c.b16 %v1629, %v1621
    %v2086 = vpack.c.b16 %v1638, %v1630
    %v2087 = vpack.c.b16 %v1639, %v1631
    %v2088 = vpack.c.b16 %v1640, %v1632
    %v2089 = vpack.c.b16 %v1641, %v1633
    %v2090 = vpack.c.b16 %v1642, %v1634
    %v2091 = vpack.c.b16 %v1643, %v1635
    %v2092 = vpack.c.b16 %v1644, %v1636
    %v2093 = vpack.c.b16 %v1645, %v1637
    %v2094 = vpack.c.b16 %v1654, %v1646
    %v2095 = vpack.c.b16 %v1655, %v1647
    %v2096 = vpack.c.b16 %v1656, %v1648
    %v2097 = vpack.c.b16 %v1657, %v1649
    %v2098 = vpack.c.b16 %v1658, %v1650
    %v2099 = vpack.c.b16 %v1659, %v1651
    %v2100 = vpack.c.b16 %v1660, %v1652
    %v2101 = vpack.c.b16 %v1661, %v1653
    %v2102 = vpack.c.b16 %v1670, %v1662
    %v2103 = vpack.c.b16 %v1671, %v1663
    %v2104 = vpack.c.b16 %v1672, %v1664
    %v2105 = vpack.c.b16 %v1673, %v1665
    %v2106 = vpack.c.b16 %v1674, %v1666
    %v2107 = vpack.c.b16 %v1675, %v1667
    %v2108 = vpack.c.b16 %v1676, %v1668
    %v2109 = vpack.c.b16 %v1677, %v1669
    %v2110 = vpack.c.b16 %v1686, %v1678
    %v2111 = vpack.c.b16 %v1687, %v1679
    %v2112 = vpack.c.b16 %v1688, %v1680
    %v2113 = vpack.c.b16 %v1689, %v1681
    %v2114 = vpack.c.b16 %v1690, %v1682
    %v2115 = vpack.c.b16 %v1691, %v1683
    %v2116 = vpack.c.b16 %v1692, %v1684
    %v2117 = vpack.c.b16 %v1693, %v1685
    %v2118 = vpack.c.b16 %v1702, %v1694
    %v2119 = vpack.c.b16 %v1703, %v1695
    %v2120 = vpack.c.b16 %v1704, %v1696
    %v2121 = vpack.c.b16 %v1705, %v1697
    %v2122 = vpack.c.b16 %v1706, %v1698
    %v2123 = vpack.c.b16 %v1707, %v1699
    %v2124 = vpack.c.b16 %v1708, %v1700
    %v2125 = vpack.c.b16 %v1709, %v1701
    %v2126 = vpack.c.b16 %v1718, %v1710
    %v2127 = vpack.c.b16 %v1719, %v1711
    %v2128 = vpack.c.b16 %v1720, %v1712
    %v2129 = vpack.c.b16 %v1721, %v1713
    %v2130 = vpack.c.b16 %v1722, %v1714
    %v2131 = vpack.c.b16 %v1723, %v1715
    %v2132 = vpack.c.b16 %v1724, %v1716
    %v2133 = vpack.c.b16 %v1725, %v1717
    %v2134 = vpack.c.b16 %v1734, %v1726
    %v2135 = vpack.c.b16 %v1735, %v1727
    %v2136 = vpack.c.b16 %v1736, %v1728
    %v2137 = vpack.c.b16 %v1737, %v1729
    %v2138 = vpack.c.b16 %v1738, %v1730
    %v2139 = vpack.c.b16 %v1739, %v1731
    %v2140 = vpack.c.b16 %v1740, %v1732
    %v2141 = vpack.c.b16 %v1741, %v1733
    %v2142 = vpack.c.b16 %v1750, %v1742
    %v2143 = vpack.c.b16 %v1751, %v1743
    %v2144 = vpack.c.b16 %v1752, %v1744
    %v2145 = vpack.c.b16 %v1753, %v1745
    %v2146 = vpack.c.b16 %v1754, %v1746
    %v2147 = vpack.c.b16 %v1755, %v1747
    %v2148 = vpack.c.b16 %v1756, %v1748
    %v2149 = vpack.c.b16 %v1757, %v1749
    %vm2542 = vcmask 130048
    %v2544 = vsel %vm2542, %v147, 0
    %2546 = vmatprep.subr.bf16.mxu0 %v1759
    %2547 = vmatpush1.bf16.msra.mxu0 %v1758
    %2548 = vmatprep.subr.bf16.mxu0 %v1767
    %2549 = vmatpush1.bf16.msra.mxu0 %v1766
    %2550 = vmatprep.subr.bf16.mxu0 %v1775
    %2551 = vmatpush1.bf16.msra.mxu0 %v1774
    %2552 = vmatprep.subr.bf16.mxu0 %v1783
    %2553 = vmatpush1.bf16.msra.mxu0 %v1782
    %2554 = vmatprep.subr.bf16.mxu0 %v1791
    %2555 = vmatpush1.bf16.msra.mxu0 %v1790
    %2556 = vmatprep.subr.bf16.mxu0 %v1799
    %2557 = vmatpush1.bf16.msra.mxu0 %v1798
    %2558 = vmatprep.subr.bf16.mxu0 %v1807
    %2559 = vmatpush1.bf16.msra.mxu0 %v1806
    %2560 = vmatprep.subr.bf16.mxu0 %v1815
    %2561 = vmatpush1.bf16.msra.mxu0 %v1814
    %2562 = vmatprep.subr.bf16.mxu0 %v1823
    %2563 = vmatpush1.bf16.msra.mxu0 %v1822
    %2564 = vmatprep.subr.bf16.mxu0 %v1831
    %2565 = vmatpush1.bf16.msra.mxu0 %v1830
    %2566 = vmatprep.subr.bf16.mxu0 %v1839
    %2567 = vmatpush1.bf16.msra.mxu0 %v1838
    %2568 = vmatprep.subr.bf16.mxu0 %v1847
    %2569 = vmatpush1.bf16.msra.mxu0 %v1846
    %2570 = vmatprep.subr.bf16.mxu0 %v1855
    %2571 = vmatpush1.bf16.msra.mxu0 %v1854
    %2572 = vmatprep.subr.bf16.mxu0 %v1863
    %2573 = vmatpush1.bf16.msra.mxu0 %v1862
    %2574 = vmatprep.subr.bf16.mxu0 %v1871
    %2575 = vmatpush1.bf16.msra.mxu0 %v1870
    %2576 = vmatprep.subr.bf16.mxu0 %v1879
    %2577 = vmatpush1.bf16.msra.mxu0 %v1878
    %2578 = vmatprep.mubr.bf16.mxu0 %v142
    %2579 = vmatmul.mubr.bf16.gmra.mrb[0].mxu0 %v141
    %v2580 = vpop.f32.mrb[0].mxu0
    %v2581 = vadd.f32 %v545, %v2580
    %v2582 = vpop.f32.mrb[0].mxu0
    %v2583 = vadd.f32 %v549, %v2582
    %v2584 = vpop.f32.mrb[0].mxu0
    %v2585 = vpop.f32.mrb[0].mxu0
    %2586 = vdwg.mxu0
    %2587 = vmatprep.subr.bf16.mxu0 %v1887
    %2588 = vmatpush1.bf16.msra.mxu0 %v1886
    %2589 = vmatprep.subr.bf16.mxu0 %v1895
    %2590 = vmatpush1.bf16.msra.mxu0 %v1894
    %2591 = vmatprep.subr.bf16.mxu0 %v1903
    %2592 = vmatpush1.bf16.msra.mxu0 %v1902
    %2593 = vmatprep.subr.bf16.mxu0 %v1911
    %2594 = vmatpush1.bf16.msra.mxu0 %v1910
    %2595 = vmatprep.subr.bf16.mxu0 %v1919
    %2596 = vmatpush1.bf16.msra.mxu0 %v1918
    %2597 = vmatprep.subr.bf16.mxu0 %v1927
    %2598 = vmatpush1.bf16.msra.mxu0 %v1926
    %2599 = vmatprep.subr.bf16.mxu0 %v1935
    %2600 = vmatpush1.bf16.msra.mxu0 %v1934
    %2601 = vmatprep.subr.bf16.mxu0 %v1943
    %2602 = vmatpush1.bf16.msra.mxu0 %v1942
    %2603 = vmatprep.subr.bf16.mxu0 %v1951
    %2604 = vmatpush1.bf16.msra.mxu0 %v1950
    %2605 = vmatprep.subr.bf16.mxu0 %v1959
    %2606 = vmatpush1.bf16.msra.mxu0 %v1958
    %2607 = vmatprep.subr.bf16.mxu0 %v1967
    %2608 = vmatpush1.bf16.msra.mxu0 %v1966
    %2609 = vmatprep.subr.bf16.mxu0 %v1975
    %2610 = vmatpush1.bf16.msra.mxu0 %v1974
    %2611 = vmatprep.subr.bf16.mxu0 %v1983
    %2612 = vmatpush1.bf16.msra.mxu0 %v1982
    %2613 = vmatprep.subr.bf16.mxu0 %v1991
    %2614 = vmatpush1.bf16.msra.mxu0 %v1990
    %2615 = vmatprep.subr.bf16.mxu0 %v1999
    %2616 = vmatpush1.bf16.msra.mxu0 %v1998
    %2617 = vmatprep.subr.bf16.mxu0 %v2007
    %2618 = vmatpush1.bf16.msra.mxu0 %v2006
    %2619 = vmatprep.mubr.bf16.mxu0 %v144
    %2620 = vmatmul.mubr.bf16.gmra.mrb[0].mxu0 %v143
    %v2621 = vpop.f32.mrb[0].mxu0
    %v2622 = vadd.f32 %v2581, %v2621
    %v2623 = vpop.f32.mrb[0].mxu0
    %v2624 = vadd.f32 %v2583, %v2623
    %v2625 = vpop.f32.mrb[0].mxu0
    %v2626 = vpop.f32.mrb[0].mxu0
    %2627 = vdwg.mxu0
    %2628 = vmatprep.subr.bf16.mxu0 %v2015
    %2629 = vmatpush1.bf16.msra.mxu0 %v2014
    %2630 = vmatprep.subr.bf16.mxu0 %v2023
    %2631 = vmatpush1.bf16.msra.mxu0 %v2022
    %2632 = vmatprep.subr.bf16.mxu0 %v2031
    %2633 = vmatpush1.bf16.msra.mxu0 %v2030
    %2634 = vmatprep.subr.bf16.mxu0 %v2039
    %2635 = vmatpush1.bf16.msra.mxu0 %v2038
    %2636 = vmatprep.subr.bf16.mxu0 %v2047
    %2637 = vmatpush1.bf16.msra.mxu0 %v2046
    %2638 = vmatprep.subr.bf16.mxu0 %v2055
    %2639 = vmatpush1.bf16.msra.mxu0 %v2054
    %2640 = vmatprep.subr.bf16.mxu0 %v2063
    %2641 = vmatpush1.bf16.msra.mxu0 %v2062
    %2642 = vmatprep.subr.bf16.mxu0 %v2071
    %2643 = vmatpush1.bf16.msra.mxu0 %v2070
    %2644 = vmatprep.subr.bf16.mxu0 %v2079
    %2645 = vmatpush1.bf16.msra.mxu0 %v2078
    %2646 = vmatprep.subr.bf16.mxu0 %v2087
    %2647 = vmatpush1.bf16.msra.mxu0 %v2086
    %2648 = vmatprep.subr.bf16.mxu0 %v2095
    %2649 = vmatpush1.bf16.msra.mxu0 %v2094
    %2650 = vmatprep.subr.bf16.mxu0 %v2103
    %2651 = vmatpush1.bf16.msra.mxu0 %v2102
    %2652 = vmatprep.subr.bf16.mxu0 %v2111
    %2653 = vmatpush1.bf16.msra.mxu0 %v2110
    %2654 = vmatprep.subr.bf16.mxu0 %v2119
    %2655 = vmatpush1.bf16.msra.mxu0 %v2118
    %2656 = vmatprep.subr.bf16.mxu0 %v2127
    %2657 = vmatpush1.bf16.msra.mxu0 %v2126
    %2658 = vmatprep.subr.bf16.mxu0 %v2135
    %2659 = vmatpush1.bf16.msra.mxu0 %v2134
    %2660 = vmatprep.mubr.bf16.mxu0 %v146
    %2661 = vmatmul.mubr.bf16.gmra.mrb[0].mxu0 %v145
    %v2662 = vpop.f32.mrb[0].mxu0
    %v2663 = vadd.f32 %v2622, %v2662
    %v2664 = vpop.f32.mrb[0].mxu0
    %v2665 = vadd.f32 %v2624, %v2664
    %v2666 = vpop.f32.mrb[0].mxu0
    %v2667 = vpop.f32.mrb[0].mxu0
    %2668 = vdwg.mxu0
    %2669 = vmatprep.subr.bf16.mxu0 %v2143
    %2670 = vmatpush1.bf16.msra.mxu0 %v2142
    %2671 = vmatprep.subr.bf16.mxu0 0
    %2672 = vmatpush1.bf16.msra.mxu0 0
    %2673 = vmatprep.subr.bf16.mxu0 0
    %2674 = vmatpush1.bf16.msra.mxu0 0
    %2675 = vmatprep.subr.bf16.mxu0 0
    %2676 = vmatpush1.bf16.msra.mxu0 0
    %2677 = vmatprep.subr.bf16.mxu0 0
    %2678 = vmatpush1.bf16.msra.mxu0 0
    %2679 = vmatprep.subr.bf16.mxu0 0
    %2680 = vmatpush1.bf16.msra.mxu0 0
    %2681 = vmatprep.subr.bf16.mxu0 0
    %2682 = vmatpush1.bf16.msra.mxu0 0
    %2683 = vmatprep.subr.bf16.mxu0 0
    %2684 = vmatpush1.bf16.msra.mxu0 0
    %2685 = vmatprep.subr.bf16.mxu0 0
    %2686 = vmatpush1.bf16.msra.mxu0 0
    %2687 = vmatprep.subr.bf16.mxu0 0
    %2688 = vmatpush1.bf16.msra.mxu0 0
    %2689 = vmatprep.subr.bf16.mxu0 0
    %2690 = vmatpush1.bf16.msra.mxu0 0
    %2691 = vmatprep.subr.bf16.mxu0 0
    %2692 = vmatpush1.bf16.msra.mxu0 0
    %2693 = vmatprep.subr.bf16.mxu0 0
    %2694 = vmatpush1.bf16.msra.mxu0 0
    %2695 = vmatprep.subr.bf16.mxu0 0
    %2696 = vmatpush1.bf16.msra.mxu0 0
    %2697 = vmatprep.subr.bf16.mxu0 0
    %2698 = vmatpush1.bf16.msra.mxu0 0
    %2699 = vmatprep.subr.bf16.mxu0 0
    %2700 = vmatpush1.bf16.msra.mxu0 0
    %2701 = vmatprep.mubr.bf16.mxu0 0
    %2702 = vmatmul.mubr.bf16.gmra.mrb[0].mxu0 %v2544
    %v2703 = vpop.f32.mrb[0].mxu0
    %v2704 = vadd.f32 %v2663, %v2703
    %v2705 = vpop.f32.mrb[0].mxu0
    %v2706 = vadd.f32 %v2665, %v2705
    %v2707 = vpop.f32.mrb[0].mxu0
    %v2708 = vpop.f32.mrb[0].mxu0
    %2709 = vdwg.mxu0
    %2710 = vmatprep.subr.bf16.mxu0 %v1761
    %2711 = vmatpush1.bf16.msra.mxu0 %v1760
    %2712 = vmatprep.subr.bf16.mxu0 %v1769
    %2713 = vmatpush1.bf16.msra.mxu0 %v1768
    %2714 = vmatprep.subr.bf16.mxu0 %v1777
    %2715 = vmatpush1.bf16.msra.mxu0 %v1776
    %2716 = vmatprep.subr.bf16.mxu0 %v1785
    %2717 = vmatpush1.bf16.msra.mxu0 %v1784
    %2718 = vmatprep.subr.bf16.mxu0 %v1793
    %2719 = vmatpush1.bf16.msra.mxu0 %v1792
    %2720 = vmatprep.subr.bf16.mxu0 %v1801
    %2721 = vmatpush1.bf16.msra.mxu0 %v1800
    %2722 = vmatprep.subr.bf16.mxu0 %v1809
    %2723 = vmatpush1.bf16.msra.mxu0 %v1808
    %2724 = vmatprep.subr.bf16.mxu0 %v1817
    %2725 = vmatpush1.bf16.msra.mxu0 %v1816
    %2726 = vmatprep.subr.bf16.mxu0 %v1825
    %2727 = vmatpush1.bf16.msra.mxu0 %v1824
    %2728 = vmatprep.subr.bf16.mxu0 %v1833
    %2729 = vmatpush1.bf16.msra.mxu0 %v1832
    %2730 = vmatprep.subr.bf16.mxu0 %v1841
    %2731 = vmatpush1.bf16.msra.mxu0 %v1840
    %2732 = vmatprep.subr.bf16.mxu0 %v1849
    %2733 = vmatpush1.bf16.msra.mxu0 %v1848
    %2734 = vmatprep.subr.bf16.mxu0 %v1857
    %2735 = vmatpush1.bf16.msra.mxu0 %v1856
    %2736 = vmatprep.subr.bf16.mxu0 %v1865
    %2737 = vmatpush1.bf16.msra.mxu0 %v1864
    %2738 = vmatprep.subr.bf16.mxu0 %v1873
    %2739 = vmatpush1.bf16.msra.mxu0 %v1872
    %2740 = vmatprep.subr.bf16.mxu0 %v1881
    %2741 = vmatpush1.bf16.msra.mxu0 %v1880
    %2742 = vmatprep.mubr.bf16.mxu0 %v142
    %2743 = vmatmul.mubr.bf16.gmra.mrb[0].mxu0 %v141
    %v2744 = vpop.f32.mrb[0].mxu0
    %v2745 = vadd.f32 %v553, %v2744
    %v2746 = vpop.f32.mrb[0].mxu0
    %v2747 = vadd.f32 %v557, %v2746
    %v2748 = vpop.f32.mrb[0].mxu0
    %v2749 = vpop.f32.mrb[0].mxu0
    %2750 = vdwg.mxu0
    %2751 = vmatprep.subr.bf16.mxu0 %v1889
    %2752 = vmatpush1.bf16.msra.mxu0 %v1888
    %2753 = vmatprep.subr.bf16.mxu0 %v1897
    %2754 = vmatpush1.bf16.msra.mxu0 %v1896
    %2755 = vmatprep.subr.bf16.mxu0 %v1905
    %2756 = vmatpush1.bf16.msra.mxu0 %v1904
    %2757 = vmatprep.subr.bf16.mxu0 %v1913
    %2758 = vmatpush1.bf16.msra.mxu0 %v1912
    %2759 = vmatprep.subr.bf16.mxu0 %v1921
    %2760 = vmatpush1.bf16.msra.mxu0 %v1920
    %2761 = vmatprep.subr.bf16.mxu0 %v1929
    %2762 = vmatpush1.bf16.msra.mxu0 %v1928
    %2763 = vmatprep.subr.bf16.mxu0 %v1937
    %2764 = vmatpush1.bf16.msra.mxu0 %v1936
    %2765 = vmatprep.subr.bf16.mxu0 %v1945
    %2766 = vmatpush1.bf16.msra.mxu0 %v1944
    %2767 = vmatprep.subr.bf16.mxu0 %v1953
    %2768 = vmatpush1.bf16.msra.mxu0 %v1952
    %2769 = vmatprep.subr.bf16.mxu0 %v1961
    %2770 = vmatpush1.bf16.msra.mxu0 %v1960
    %2771 = vmatprep.subr.bf16.mxu0 %v1969
    %2772 = vmatpush1.bf16.msra.mxu0 %v1968
    %2773 = vmatprep.subr.bf16.mxu0 %v1977
    %2774 = vmatpush1.bf16.msra.mxu0 %v1976
    %2775 = vmatprep.subr.bf16.mxu0 %v1985
    %2776 = vmatpush1.bf16.msra.mxu0 %v1984
    %2777 = vmatprep.subr.bf16.mxu0 %v1993
    %2778 = vmatpush1.bf16.msra.mxu0 %v1992
    %2779 = vmatprep.subr.bf16.mxu0 %v2001
    %2780 = vmatpush1.bf16.msra.mxu0 %v2000
    %2781 = vmatprep.subr.bf16.mxu0 %v2009
    %2782 = vmatpush1.bf16.msra.mxu0 %v2008
    %2783 = vmatprep.mubr.bf16.mxu0 %v144
    %2784 = vmatmul.mubr.bf16.gmra.mrb[0].mxu0 %v143
    %v2785 = vpop.f32.mrb[0].mxu0
    %v2786 = vadd.f32 %v2745, %v2785
    %v2787 = vpop.f32.mrb[0].mxu0
    %v2788 = vadd.f32 %v2747, %v2787
    %v2789 = vpop.f32.mrb[0].mxu0
    %v2790 = vpop.f32.mrb[0].mxu0
    %2791 = vdwg.mxu0
    %2792 = vmatprep.subr.bf16.mxu0 %v2017
    %2793 = vmatpush1.bf16.msra.mxu0 %v2016
    %2794 = vmatprep.subr.bf16.mxu0 %v2025
    %2795 = vmatpush1.bf16.msra.mxu0 %v2024
    %2796 = vmatprep.subr.bf16.mxu0 %v2033
    %2797 = vmatpush1.bf16.msra.mxu0 %v2032
    %2798 = vmatprep.subr.bf16.mxu0 %v2041
    %2799 = vmatpush1.bf16.msra.mxu0 %v2040
    %2800 = vmatprep.subr.bf16.mxu0 %v2049
    %2801 = vmatpush1.bf16.msra.mxu0 %v2048
    %2802 = vmatprep.subr.bf16.mxu0 %v2057
    %2803 = vmatpush1.bf16.msra.mxu0 %v2056
    %2804 = vmatprep.subr.bf16.mxu0 %v2065
    %2805 = vmatpush1.bf16.msra.mxu0 %v2064
    %2806 = vmatprep.subr.bf16.mxu0 %v2073
    %2807 = vmatpush1.bf16.msra.mxu0 %v2072
    %2808 = vmatprep.subr.bf16.mxu0 %v2081
    %2809 = vmatpush1.bf16.msra.mxu0 %v2080
    %2810 = vmatprep.subr.bf16.mxu0 %v2089
    %2811 = vmatpush1.bf16.msra.mxu0 %v2088
    %2812 = vmatprep.subr.bf16.mxu0 %v2097
    %2813 = vmatpush1.bf16.msra.mxu0 %v2096
    %2814 = vmatprep.subr.bf16.mxu0 %v2105
    %2815 = vmatpush1.bf16.msra.mxu0 %v2104
    %2816 = vmatprep.subr.bf16.mxu0 %v2113
    %2817 = vmatpush1.bf16.msra.mxu0 %v2112
    %2818 = vmatprep.subr.bf16.mxu0 %v2121
    %2819 = vmatpush1.bf16.msra.mxu0 %v2120
    %2820 = vmatprep.subr.bf16.mxu0 %v2129
    %2821 = vmatpush1.bf16.msra.mxu0 %v2128
    %2822 = vmatprep.subr.bf16.mxu0 %v2137
    %2823 = vmatpush1.bf16.msra.mxu0 %v2136
    %2824 = vmatprep.mubr.bf16.mxu0 %v146
    %2825 = vmatmul.mubr.bf16.gmra.mrb[0].mxu0 %v145
    %v2826 = vpop.f32.mrb[0].mxu0
    %v2827 = vadd.f32 %v2786, %v2826
    %v2828 = vpop.f32.mrb[0].mxu0
    %v2829 = vadd.f32 %v2788, %v2828
    %v2830 = vpop.f32.mrb[0].mxu0
    %v2831 = vpop.f32.mrb[0].mxu0
    %2832 = vdwg.mxu0
    %2833 = vmatprep.subr.bf16.mxu0 %v2145
    %2834 = vmatpush1.bf16.msra.mxu0 %v2144
    %2835 = vmatprep.subr.bf16.mxu0 0
    %2836 = vmatpush1.bf16.msra.mxu0 0
    %2837 = vmatprep.subr.bf16.mxu0 0
    %2838 = vmatpush1.bf16.msra.mxu0 0
    %2839 = vmatprep.subr.bf16.mxu0 0
    %2840 = vmatpush1.bf16.msra.mxu0 0
    %2841 = vmatprep.subr.bf16.mxu0 0
    %2842 = vmatpush1.bf16.msra.mxu0 0
    %2843 = vmatprep.subr.bf16.mxu0 0
    %2844 = vmatpush1.bf16.msra.mxu0 0
    %2845 = vmatprep.subr.bf16.mxu0 0
    %2846 = vmatpush1.bf16.msra.mxu0 0
    %2847 = vmatprep.subr.bf16.mxu0 0
    %2848 = vmatpush1.bf16.msra.mxu0 0
    %2849 = vmatprep.subr.bf16.mxu0 0
    %2850 = vmatpush1.bf16.msra.mxu0 0
    %2851 = vmatprep.subr.bf16.mxu0 0
    %2852 = vmatpush1.bf16.msra.mxu0 0
    %2853 = vmatprep.subr.bf16.mxu0 0
    %2854 = vmatpush1.bf16.msra.mxu0 0
    %2855 = vmatprep.subr.bf16.mxu0 0
    %2856 = vmatpush1.bf16.msra.mxu0 0
    %2857 = vmatprep.subr.bf16.mxu0 0
    %2858 = vmatpush1.bf16.msra.mxu0 0
    %2859 = vmatprep.subr.bf16.mxu0 0
    %2860 = vmatpush1.bf16.msra.mxu0 0
    %2861 = vmatprep.subr.bf16.mxu0 0
    %2862 = vmatpush1.bf16.msra.mxu0 0
    %2863 = vmatprep.subr.bf16.mxu0 0
    %2864 = vmatpush1.bf16.msra.mxu0 0
    %2865 = vmatprep.mubr.bf16.mxu0 0
    %2866 = vmatmul.mubr.bf16.gmra.mrb[0].mxu0 %v2544
    %v2867 = vpop.f32.mrb[0].mxu0
    %v2868 = vadd.f32 %v2827, %v2867
    %v2869 = vpop.f32.mrb[0].mxu0
    %v2870 = vadd.f32 %v2829, %v2869
    %v2871 = vpop.f32.mrb[0].mxu0
    %v2872 = vpop.f32.mrb[0].mxu0
    %2873 = vdwg.mxu0
    %2874 = vmatprep.subr.bf16.mxu0 %v1763
    %2875 = vmatpush1.bf16.msra.mxu0 %v1762
    %2876 = vmatprep.subr.bf16.mxu0 %v1771
    %2877 = vmatpush1.bf16.msra.mxu0 %v1770
    %2878 = vmatprep.subr.bf16.mxu0 %v1779
    %2879 = vmatpush1.bf16.msra.mxu0 %v1778
    %2880 = vmatprep.subr.bf16.mxu0 %v1787
    %2881 = vmatpush1.bf16.msra.mxu0 %v1786
    %2882 = vmatprep.subr.bf16.mxu0 %v1795
    %2883 = vmatpush1.bf16.msra.mxu0 %v1794
    %2884 = vmatprep.subr.bf16.mxu0 %v1803
    %2885 = vmatpush1.bf16.msra.mxu0 %v1802
    %2886 = vmatprep.subr.bf16.mxu0 %v1811
    %2887 = vmatpush1.bf16.msra.mxu0 %v1810
    %2888 = vmatprep.subr.bf16.mxu0 %v1819
    %2889 = vmatpush1.bf16.msra.mxu0 %v1818
    %2890 = vmatprep.subr.bf16.mxu0 %v1827
    %2891 = vmatpush1.bf16.msra.mxu0 %v1826
    %2892 = vmatprep.subr.bf16.mxu0 %v1835
    %2893 = vmatpush1.bf16.msra.mxu0 %v1834
    %2894 = vmatprep.subr.bf16.mxu0 %v1843
    %2895 = vmatpush1.bf16.msra.mxu0 %v1842
    %2896 = vmatprep.subr.bf16.mxu0 %v1851
    %2897 = vmatpush1.bf16.msra.mxu0 %v1850
    %2898 = vmatprep.subr.bf16.mxu0 %v1859
    %2899 = vmatpush1.bf16.msra.mxu0 %v1858
    %2900 = vmatprep.subr.bf16.mxu0 %v1867
    %2901 = vmatpush1.bf16.msra.mxu0 %v1866
    %2902 = vmatprep.subr.bf16.mxu0 %v1875
    %2903 = vmatpush1.bf16.msra.mxu0 %v1874
    %2904 = vmatprep.subr.bf16.mxu0 %v1883
    %2905 = vmatpush1.bf16.msra.mxu0 %v1882
    %2906 = vmatprep.mubr.bf16.mxu0 %v142
    %2907 = vmatmul.mubr.bf16.gmra.mrb[0].mxu0 %v141
    %v2908 = vpop.f32.mrb[0].mxu0
    %v2909 = vadd.f32 %v561, %v2908
    %v2910 = vpop.f32.mrb[0].mxu0
    %v2911 = vadd.f32 %v565, %v2910
    %v2912 = vpop.f32.mrb[0].mxu0
    %v2913 = vpop.f32.mrb[0].mxu0
    %2914 = vdwg.mxu0
    %2915 = vmatprep.subr.bf16.mxu0 %v1891
    %2916 = vmatpush1.bf16.msra.mxu0 %v1890
    %2917 = vmatprep.subr.bf16.mxu0 %v1899
    %2918 = vmatpush1.bf16.msra.mxu0 %v1898
    %2919 = vmatprep.subr.bf16.mxu0 %v1907
    %2920 = vmatpush1.bf16.msra.mxu0 %v1906
    %2921 = vmatprep.subr.bf16.mxu0 %v1915
    %2922 = vmatpush1.bf16.msra.mxu0 %v1914
    %2923 = vmatprep.subr.bf16.mxu0 %v1923
    %2924 = vmatpush1.bf16.msra.mxu0 %v1922
    %2925 = vmatprep.subr.bf16.mxu0 %v1931
    %2926 = vmatpush1.bf16.msra.mxu0 %v1930
    %2927 = vmatprep.subr.bf16.mxu0 %v1939
    %2928 = vmatpush1.bf16.msra.mxu0 %v1938
    %2929 = vmatprep.subr.bf16.mxu0 %v1947
    %2930 = vmatpush1.bf16.msra.mxu0 %v1946
    %2931 = vmatprep.subr.bf16.mxu0 %v1955
    %2932 = vmatpush1.bf16.msra.mxu0 %v1954
    %2933 = vmatprep.subr.bf16.mxu0 %v1963
    %2934 = vmatpush1.bf16.msra.mxu0 %v1962
    %2935 = vmatprep.subr.bf16.mxu0 %v1971
    %2936 = vmatpush1.bf16.msra.mxu0 %v1970
    %2937 = vmatprep.subr.bf16.mxu0 %v1979
    %2938 = vmatpush1.bf16.msra.mxu0 %v1978
    %2939 = vmatprep.subr.bf16.mxu0 %v1987
    %2940 = vmatpush1.bf16.msra.mxu0 %v1986
    %2941 = vmatprep.subr.bf16.mxu0 %v1995
    %2942 = vmatpush1.bf16.msra.mxu0 %v1994
    %2943 = vmatprep.subr.bf16.mxu0 %v2003
    %2944 = vmatpush1.bf16.msra.mxu0 %v2002
    %2945 = vmatprep.subr.bf16.mxu0 %v2011
    %2946 = vmatpush1.bf16.msra.mxu0 %v2010
    %2947 = vmatprep.mubr.bf16.mxu0 %v144
    %2948 = vmatmul.mubr.bf16.gmra.mrb[0].mxu0 %v143
    %v2949 = vpop.f32.mrb[0].mxu0
    %v2950 = vadd.f32 %v2909, %v2949
    %v2951 = vpop.f32.mrb[0].mxu0
    %v2952 = vadd.f32 %v2911, %v2951
    %v2953 = vpop.f32.mrb[0].mxu0
    %v2954 = vpop.f32.mrb[0].mxu0
    %2955 = vdwg.mxu0
    %2956 = vmatprep.subr.bf16.mxu0 %v2019
    %2957 = vmatpush1.bf16.msra.mxu0 %v2018
    %2958 = vmatprep.subr.bf16.mxu0 %v2027
    %2959 = vmatpush1.bf16.msra.mxu0 %v2026
    %2960 = vmatprep.subr.bf16.mxu0 %v2035
    %2961 = vmatpush1.bf16.msra.mxu0 %v2034
    %2962 = vmatprep.subr.bf16.mxu0 %v2043
    %2963 = vmatpush1.bf16.msra.mxu0 %v2042
    %2964 = vmatprep.subr.bf16.mxu0 %v2051
    %2965 = vmatpush1.bf16.msra.mxu0 %v2050
    %2966 = vmatprep.subr.bf16.mxu0 %v2059
    %2967 = vmatpush1.bf16.msra.mxu0 %v2058
    %2968 = vmatprep.subr.bf16.mxu0 %v2067
    %2969 = vmatpush1.bf16.msra.mxu0 %v2066
    %2970 = vmatprep.subr.bf16.mxu0 %v2075
    %2971 = vmatpush1.bf16.msra.mxu0 %v2074
    %2972 = vmatprep.subr.bf16.mxu0 %v2083
    %2973 = vmatpush1.bf16.msra.mxu0 %v2082
    %2974 = vmatprep.subr.bf16.mxu0 %v2091
    %2975 = vmatpush1.bf16.msra.mxu0 %v2090
    %2976 = vmatprep.subr.bf16.mxu0 %v2099
    %2977 = vmatpush1.bf16.msra.mxu0 %v2098
    %2978 = vmatprep.subr.bf16.mxu0 %v2107
    %2979 = vmatpush1.bf16.msra.mxu0 %v2106
    %2980 = vmatprep.subr.bf16.mxu0 %v2115
    %2981 = vmatpush1.bf16.msra.mxu0 %v2114
    %2982 = vmatprep.subr.bf16.mxu0 %v2123
    %2983 = vmatpush1.bf16.msra.mxu0 %v2122
    %2984 = vmatprep.subr.bf16.mxu0 %v2131
    %2985 = vmatpush1.bf16.msra.mxu0 %v2130
    %2986 = vmatprep.subr.bf16.mxu0 %v2139
    %2987 = vmatpush1.bf16.msra.mxu0 %v2138
    %2988 = vmatprep.mubr.bf16.mxu0 %v146
    %2989 = vmatmul.mubr.bf16.gmra.mrb[0].mxu0 %v145
    %v2990 = vpop.f32.mrb[0].mxu0
    %v2991 = vadd.f32 %v2950, %v2990
    %v2992 = vpop.f32.mrb[0].mxu0
    %v2993 = vadd.f32 %v2952, %v2992
    %v2994 = vpop.f32.mrb[0].mxu0
    %v2995 = vpop.f32.mrb[0].mxu0
    %2996 = vdwg.mxu0
    %2997 = vmatprep.subr.bf16.mxu0 %v2147
    %2998 = vmatpush1.bf16.msra.mxu0 %v2146
    %2999 = vmatprep.subr.bf16.mxu0 0
    %3000 = vmatpush1.bf16.msra.mxu0 0
    %3001 = vmatprep.subr.bf16.mxu0 0
    %3002 = vmatpush1.bf16.msra.mxu0 0
    %3003 = vmatprep.subr.bf16.mxu0 0
    %3004 = vmatpush1.bf16.msra.mxu0 0
    %3005 = vmatprep.subr.bf16.mxu0 0
    %3006 = vmatpush1.bf16.msra.mxu0 0
    %3007 = vmatprep.subr.bf16.mxu0 0
    %3008 = vmatpush1.bf16.msra.mxu0 0
    %3009 = vmatprep.subr.bf16.mxu0 0
    %3010 = vmatpush1.bf16.msra.mxu0 0
    %3011 = vmatprep.subr.bf16.mxu0 0
    %3012 = vmatpush1.bf16.msra.mxu0 0
    %3013 = vmatprep.subr.bf16.mxu0 0
    %3014 = vmatpush1.bf16.msra.mxu0 0
    %3015 = vmatprep.subr.bf16.mxu0 0
    %3016 = vmatpush1.bf16.msra.mxu0 0
    %3017 = vmatprep.subr.bf16.mxu0 0
    %3018 = vmatpush1.bf16.msra.mxu0 0
    %3019 = vmatprep.subr.bf16.mxu0 0
    %3020 = vmatpush1.bf16.msra.mxu0 0
    %3021 = vmatprep.subr.bf16.mxu0 0
    %3022 = vmatpush1.bf16.msra.mxu0 0
    %3023 = vmatprep.subr.bf16.mxu0 0
    %3024 = vmatpush1.bf16.msra.mxu0 0
    %3025 = vmatprep.subr.bf16.mxu0 0
    %3026 = vmatpush1.bf16.msra.mxu0 0
    %3027 = vmatprep.subr.bf16.mxu0 0
    %3028 = vmatpush1.bf16.msra.mxu0 0
    %3029 = vmatprep.mubr.bf16.mxu0 0
    %3030 = vmatmul.mubr.bf16.gmra.mrb[0].mxu0 %v2544
    %v3031 = vpop.f32.mrb[0].mxu0
    %v3032 = vadd.f32 %v2991, %v3031
    %v3033 = vpop.f32.mrb[0].mxu0
    %v3034 = vadd.f32 %v2993, %v3033
    %v3035 = vpop.f32.mrb[0].mxu0
    %v3036 = vpop.f32.mrb[0].mxu0
    %3037 = vdwg.mxu0
    %3038 = vmatprep.subr.bf16.mxu0 %v1765
    %3039 = vmatpush1.bf16.msra.mxu0 %v1764
    %3040 = vmatprep.subr.bf16.mxu0 %v1773
    %3041 = vmatpush1.bf16.msra.mxu0 %v1772
    %3042 = vmatprep.subr.bf16.mxu0 %v1781
    %3043 = vmatpush1.bf16.msra.mxu0 %v1780
    %3044 = vmatprep.subr.bf16.mxu0 %v1789
    %3045 = vmatpush1.bf16.msra.mxu0 %v1788
    %3046 = vmatprep.subr.bf16.mxu0 %v1797
    %3047 = vmatpush1.bf16.msra.mxu0 %v1796
    %3048 = vmatprep.subr.bf16.mxu0 %v1805
    %3049 = vmatpush1.bf16.msra.mxu0 %v1804
    %3050 = vmatprep.subr.bf16.mxu0 %v1813
    %3051 = vmatpush1.bf16.msra.mxu0 %v1812
    %3052 = vmatprep.subr.bf16.mxu0 %v1821
    %3053 = vmatpush1.bf16.msra.mxu0 %v1820
    %3054 = vmatprep.subr.bf16.mxu0 %v1829
    %3055 = vmatpush1.bf16.msra.mxu0 %v1828
    %3056 = vmatprep.subr.bf16.mxu0 %v1837
    %3057 = vmatpush1.bf16.msra.mxu0 %v1836
    %3058 = vmatprep.subr.bf16.mxu0 %v1845
    %3059 = vmatpush1.bf16.msra.mxu0 %v1844
    %3060 = vmatprep.subr.bf16.mxu0 %v1853
    %3061 = vmatpush1.bf16.msra.mxu0 %v1852
    %3062 = vmatprep.subr.bf16.mxu0 %v1861
    %3063 = vmatpush1.bf16.msra.mxu0 %v1860
    %3064 = vmatprep.subr.bf16.mxu0 %v1869
    %3065 = vmatpush1.bf16.msra.mxu0 %v1868
    %3066 = vmatprep.subr.bf16.mxu0 %v1877
    %3067 = vmatpush1.bf16.msra.mxu0 %v1876
    %3068 = vmatprep.subr.bf16.mxu0 %v1885
    %3069 = vmatpush1.bf16.msra.mxu0 %v1884
    %3070 = vmatprep.mubr.bf16.mxu0 %v142
    %3071 = vmatmul.mubr.bf16.gmra.mrb[0].mxu0 %v141
    %v3072 = vpop.f32.mrb[0].mxu0
    %v3073 = vadd.f32 %v569, %v3072
    %v3074 = vpop.f32.mrb[0].mxu0
    %v3075 = vadd.f32 %v573, %v3074
    %v3076 = vpop.f32.mrb[0].mxu0
    %v3077 = vpop.f32.mrb[0].mxu0
    %3078 = vdwg.mxu0
    %3079 = vmatprep.subr.bf16.mxu0 %v1893
    %3080 = vmatpush1.bf16.msra.mxu0 %v1892
    %3081 = vmatprep.subr.bf16.mxu0 %v1901
    %3082 = vmatpush1.bf16.msra.mxu0 %v1900
    %3083 = vmatprep.subr.bf16.mxu0 %v1909
    %3084 = vmatpush1.bf16.msra.mxu0 %v1908
    %3085 = vmatprep.subr.bf16.mxu0 %v1917
    %3086 = vmatpush1.bf16.msra.mxu0 %v1916
    %3087 = vmatprep.subr.bf16.mxu0 %v1925
    %3088 = vmatpush1.bf16.msra.mxu0 %v1924
    %3089 = vmatprep.subr.bf16.mxu0 %v1933
    %3090 = vmatpush1.bf16.msra.mxu0 %v1932
    %3091 = vmatprep.subr.bf16.mxu0 %v1941
    %3092 = vmatpush1.bf16.msra.mxu0 %v1940
    %3093 = vmatprep.subr.bf16.mxu0 %v1949
    %3094 = vmatpush1.bf16.msra.mxu0 %v1948
    %3095 = vmatprep.subr.bf16.mxu0 %v1957
    %3096 = vmatpush1.bf16.msra.mxu0 %v1956
    %3097 = vmatprep.subr.bf16.mxu0 %v1965
    %3098 = vmatpush1.bf16.msra.mxu0 %v1964
    %3099 = vmatprep.subr.bf16.mxu0 %v1973
    %3100 = vmatpush1.bf16.msra.mxu0 %v1972
    %3101 = vmatprep.subr.bf16.mxu0 %v1981
    %3102 = vmatpush1.bf16.msra.mxu0 %v1980
    %3103 = vmatprep.subr.bf16.mxu0 %v1989
    %3104 = vmatpush1.bf16.msra.mxu0 %v1988
    %3105 = vmatprep.subr.bf16.mxu0 %v1997
    %3106 = vmatpush1.bf16.msra.mxu0 %v1996
    %3107 = vmatprep.subr.bf16.mxu0 %v2005
    %3108 = vmatpush1.bf16.msra.mxu0 %v2004
    %3109 = vmatprep.subr.bf16.mxu0 %v2013
    %3110 = vmatpush1.bf16.msra.mxu0 %v2012
    %3111 = vmatprep.mubr.bf16.mxu0 %v144
    %3112 = vmatmul.mubr.bf16.gmra.mrb[0].mxu0 %v143
    %v3113 = vpop.f32.mrb[0].mxu0
    %v3114 = vadd.f32 %v3073, %v3113
    %v3115 = vpop.f32.mrb[0].mxu0
    %v3116 = vadd.f32 %v3075, %v3115
    %v3117 = vpop.f32.mrb[0].mxu0
    %v3118 = vpop.f32.mrb[0].mxu0
    %3119 = vdwg.mxu0
    %3120 = vmatprep.subr.bf16.mxu0 %v2021
    %3121 = vmatpush1.bf16.msra.mxu0 %v2020
    %3122 = vmatprep.subr.bf16.mxu0 %v2029
    %3123 = vmatpush1.bf16.msra.mxu0 %v2028
    %3124 = vmatprep.subr.bf16.mxu0 %v2037
    %3125 = vmatpush1.bf16.msra.mxu0 %v2036
    %3126 = vmatprep.subr.bf16.mxu0 %v2045
    %3127 = vmatpush1.bf16.msra.mxu0 %v2044
    %3128 = vmatprep.subr.bf16.mxu0 %v2053
    %3129 = vmatpush1.bf16.msra.mxu0 %v2052
    %3130 = vmatprep.subr.bf16.mxu0 %v2061
    %3131 = vmatpush1.bf16.msra.mxu0 %v2060
    %3132 = vmatprep.subr.bf16.mxu0 %v2069
    %3133 = vmatpush1.bf16.msra.mxu0 %v2068
    %3134 = vmatprep.subr.bf16.mxu0 %v2077
    %3135 = vmatpush1.bf16.msra.mxu0 %v2076
    %3136 = vmatprep.subr.bf16.mxu0 %v2085
    %3137 = vmatpush1.bf16.msra.mxu0 %v2084
    %3138 = vmatprep.subr.bf16.mxu0 %v2093
    %3139 = vmatpush1.bf16.msra.mxu0 %v2092
    %3140 = vmatprep.subr.bf16.mxu0 %v2101
    %3141 = vmatpush1.bf16.msra.mxu0 %v2100
    %3142 = vmatprep.subr.bf16.mxu0 %v2109
    %3143 = vmatpush1.bf16.msra.mxu0 %v2108
    %3144 = vmatprep.subr.bf16.mxu0 %v2117
    %3145 = vmatpush1.bf16.msra.mxu0 %v2116
    %3146 = vmatprep.subr.bf16.mxu0 %v2125
    %3147 = vmatpush1.bf16.msra.mxu0 %v2124
    %3148 = vmatprep.subr.bf16.mxu0 %v2133
    %3149 = vmatpush1.bf16.msra.mxu0 %v2132
    %3150 = vmatprep.subr.bf16.mxu0 %v2141
    %3151 = vmatpush1.bf16.msra.mxu0 %v2140
    %3152 = vmatprep.mubr.bf16.mxu0 %v146
    %3153 = vmatmul.mubr.bf16.gmra.mrb[0].mxu0 %v145
    %v3154 = vpop.f32.mrb[0].mxu0
    %v3155 = vadd.f32 %v3114, %v3154
    %v3156 = vpop.f32.mrb[0].mxu0
    %v3157 = vadd.f32 %v3116, %v3156
    %v3158 = vpop.f32.mrb[0].mxu0
    %v3159 = vpop.f32.mrb[0].mxu0
    %3160 = vdwg.mxu0
    %3161 = vmatprep.subr.bf16.mxu0 %v2149
    %3162 = vmatpush1.bf16.msra.mxu0 %v2148
    %3163 = vmatprep.subr.bf16.mxu0 0
    %3164 = vmatpush1.bf16.msra.mxu0 0
    %3165 = vmatprep.subr.bf16.mxu0 0
    %3166 = vmatpush1.bf16.msra.mxu0 0
    %3167 = vmatprep.subr.bf16.mxu0 0
    %3168 = vmatpush1.bf16.msra.mxu0 0
    %3169 = vmatprep.subr.bf16.mxu0 0
    %3170 = vmatpush1.bf16.msra.mxu0 0
    %3171 = vmatprep.subr.bf16.mxu0 0
    %3172 = vmatpush1.bf16.msra.mxu0 0
    %3173 = vmatprep.subr.bf16.mxu0 0
    %3174 = vmatpush1.bf16.msra.mxu0 0
    %3175 = vmatprep.subr.bf16.mxu0 0
    %3176 = vmatpush1.bf16.msra.mxu0 0
    %3177 = vmatprep.subr.bf16.mxu0 0
    %3178 = vmatpush1.bf16.msra.mxu0 0
    %3179 = vmatprep.subr.bf16.mxu0 0
    %3180 = vmatpush1.bf16.msra.mxu0 0
    %3181 = vmatprep.subr.bf16.mxu0 0
    %3182 = vmatpush1.bf16.msra.mxu0 0
    %3183 = vmatprep.subr.bf16.mxu0 0
    %3184 = vmatpush1.bf16.msra.mxu0 0
    %3185 = vmatprep.subr.bf16.mxu0 0
    %3186 = vmatpush1.bf16.msra.mxu0 0
    %3187 = vmatprep.subr.bf16.mxu0 0
    %3188 = vmatpush1.bf16.msra.mxu0 0
    %3189 = vmatprep.subr.bf16.mxu0 0
    %3190 = vmatpush1.bf16.msra.mxu0 0
    %3191 = vmatprep.subr.bf16.mxu0 0
    %3192 = vmatpush1.bf16.msra.mxu0 0
    %3193 = vmatprep.mubr.bf16.mxu0 0
    %3194 = vmatmul.mubr.bf16.gmra.mrb[0].mxu0 %v2544
    %v3195 = vpop.f32.mrb[0].mxu0
    %v3196 = vadd.f32 %v3155, %v3195
    %v3197 = vpop.f32.mrb[0].mxu0
    %v3198 = vadd.f32 %v3157, %v3197
    %v3199 = vpop.f32.mrb[0].mxu0
    %v3200 = vpop.f32.mrb[0].mxu0
    %3201 = vdwg.mxu0
    %v3202 = vmul.f32 %v2704, 0.2
    %v3203 = vmul.f32 %v2706, 0.2
    %v3204 = vmul.f32 %v2868, 0.2
    %v3205 = vmul.f32 %v2870, 0.2
    %v3206 = vmul.f32 %v3032, 0.2
    %v3207 = vmul.f32 %v3034, 0.2
    %v3208 = vmul.f32 %v3196, 0.2
    %v3209 = vmul.f32 %v3198, 0.2
    %v3210 = vmax.f32 %v2704, %v3202
    %v3211 = vmax.f32 %v2706, %v3203
    %v3212 = vmax.f32 %v2868, %v3204
    %v3213 = vmax.f32 %v2870, %v3205
    %v3214 = vmax.f32 %v3032, %v3206
    %v3215 = vmax.f32 %v3034, %v3207
    %v3216 = vmax.f32 %v3196, %v3208
    %v3217 = vmax.f32 %v3198, %v3209
    %v3218 = vpack.c.bf16 %v3210, %v3210
    %v3219 = vpack.c.bf16 %v3211, %v3211
    %v3220 = vpack.c.bf16 %v3212, %v3212
    %v3221 = vpack.c.bf16 %v3213, %v3213
    %v3222 = vpack.c.bf16 %v3214, %v3214
    %v3223 = vpack.c.bf16 %v3215, %v3215
    %v3224 = vpack.c.bf16 %v3216, %v3216
    %v3225 = vpack.c.bf16 %v3217, %v3217
    %v3226 = vld [vmem:[#allocation8] sm:$0xff]
    %v3227 = vld [vmem:[#allocation8 + $0x8] sm:$0xff]
    %v3228 = vld [vmem:[#allocation8 + $0x10] sm:$0xff]
    %v3229 = vld [vmem:[#allocation8 + $0x18] sm:$0xff]
    %v3230 = vld [vmem:[#allocation8 + $0x20] sm:$0xff]
    %v3231 = vld [vmem:[#allocation8 + $0x28] sm:$0xff]
    %v3232 = vld [vmem:[#allocation8 + $0x30] sm:$0xff]
    %v3233 = vld [vmem:[#allocation8 + $0x38] sm:$0xff]
    %v3234 = vld [vmem:[#allocation8 + $0x40] sm:$0xff]
    %v3235 = vld [vmem:[#allocation8 + $0x48] sm:$0xff]
    %v3236 = vld [vmem:[#allocation8 + $0x50] sm:$0xff]
    %v3237 = vld [vmem:[#allocation8 + $0x58] sm:$0xff]
    %v3238 = vld [vmem:[#allocation8 + $0x60] sm:$0xff]
    %v3239 = vld [vmem:[#allocation8 + $0x68] sm:$0xff]
    %v3240 = vld [vmem:[#allocation8 + $0x70] sm:$0xff]
    %v3241 = vld [vmem:[#allocation8 + $0x78] sm:$0xff]
    %v3242 = vld [vmem:[#allocation8 + $0x80] sm:$0xff]
    %v3243 = vld [vmem:[#allocation8 + $0x88] sm:$0xff]
    %v3244 = vld [vmem:[#allocation8 + $0x90] sm:$0xff]
    %v3245 = vld [vmem:[#allocation8 + $0x98] sm:$0xff]
    %v3246 = vld [vmem:[#allocation8 + $0xa0] sm:$0xff]
    %v3247 = vld [vmem:[#allocation8 + $0xa8] sm:$0xff]
    %v3248 = vld [vmem:[#allocation8 + $0xb0] sm:$0xff]
    %v3249 = vld [vmem:[#allocation8 + $0xb8] sm:$0xff]
    %v3250 = vld [vmem:[#allocation8 + $0xc0] sm:$0xff]
    %v3251 = vld [vmem:[#allocation8 + $0xc8] sm:$0xff]
    %v3252 = vld [vmem:[#allocation8 + $0xd0] sm:$0xff]
    %v3253 = vld [vmem:[#allocation8 + $0xd8] sm:$0xff]
    %v3254 = vld [vmem:[#allocation8 + $0xe0] sm:$0xff]
    %v3255 = vld [vmem:[#allocation8 + $0xe8] sm:$0xff]
    %v3256 = vld [vmem:[#allocation8 + $0xf0] sm:$0xff]
    %v3257 = vld [vmem:[#allocation8 + $0xf8] sm:$0xff]
    %v3258 = vld [vmem:[#allocation8 + $0x100] sm:$0xff]
    %v3259 = vld [vmem:[#allocation8 + $0x108] sm:$0xff]
    %v3260 = vld [vmem:[#allocation8 + $0x110] sm:$0xff]
    %v3261 = vld [vmem:[#allocation8 + $0x118] sm:$0xff]
    %v3262 = vld [vmem:[#allocation8 + $0x120] sm:$0xff]
    %v3263 = vld [vmem:[#allocation8 + $0x128] sm:$0xff]
    %v3264 = vld [vmem:[#allocation8 + $0x130] sm:$0xff]
    %v3265 = vld [vmem:[#allocation8 + $0x138] sm:$0xff]
    %v3266 = vld [vmem:[#allocation8 + $0x140] sm:$0xff]
    %v3267 = vld [vmem:[#allocation8 + $0x148] sm:$0xff]
    %v3268 = vld [vmem:[#allocation8 + $0x150] sm:$0xff]
    %v3269 = vld [vmem:[#allocation8 + $0x158] sm:$0xff]
    %v3270 = vld [vmem:[#allocation8 + $0x160] sm:$0xff]
    %v3271 = vld [vmem:[#allocation8 + $0x168] sm:$0xff]
    %v3272 = vld [vmem:[#allocation8 + $0x170] sm:$0xff]
    %v3273 = vld [vmem:[#allocation8 + $0x178] sm:$0xff]
    %v3274 = vld [vmem:[#allocation8 + $0x180] sm:$0xff]
    %v3275 = vld [vmem:[#allocation8 + $0x188] sm:$0xff]
    %v3276 = vld [vmem:[#allocation8 + $0x190] sm:$0xff]
    %v3277 = vld [vmem:[#allocation8 + $0x198] sm:$0xff]
    %v3278 = vld [vmem:[#allocation8 + $0x1a0] sm:$0xff]
    %v3279 = vld [vmem:[#allocation8 + $0x1a8] sm:$0xff]
    %v3280 = vld [vmem:[#allocation8 + $0x1b0] sm:$0xff]
    %v3281 = vld [vmem:[#allocation8 + $0x1b8] sm:$0xff]
    %v3282 = vld [vmem:[#allocation8 + $0x1c0] sm:$0xff]
    %v3283 = vld [vmem:[#allocation8 + $0x1c8] sm:$0xff]
    %v3284 = vld [vmem:[#allocation8 + $0x1d0] sm:$0xff]
    %v3285 = vld [vmem:[#allocation8 + $0x1d8] sm:$0xff]
    %v3286 = vld [vmem:[#allocation8 + $0x1e0] sm:$0xff]
    %v3287 = vld [vmem:[#allocation8 + $0x1e8] sm:$0xff]
    %v3288 = vld [vmem:[#allocation8 + $0x1f0] sm:$0xff]
    %v3289 = vld [vmem:[#allocation8 + $0x1f8] sm:$0xff]
    %v3290 = vld [vmem:[#allocation8 + $0x200] sm:$0xff]
    %v3291 = vld [vmem:[#allocation8 + $0x208] sm:$0xff]
    %v3292 = vld [vmem:[#allocation8 + $0x210] sm:$0xff]
    %v3293 = vld [vmem:[#allocation8 + $0x218] sm:$0xff]
    %v3294 = vld [vmem:[#allocation8 + $0x220] sm:$0xff]
    %v3295 = vld [vmem:[#allocation8 + $0x228] sm:$0xff]
    %v3296 = vld [vmem:[#allocation8 + $0x230] sm:$0xff]
    %v3297 = vld [vmem:[#allocation8 + $0x238] sm:$0xff]
    %v3298 = vld [vmem:[#allocation8 + $0x240] sm:$0xff]
    %v3299 = vld [vmem:[#allocation8 + $0x248] sm:$0xff]
    %v3300 = vld [vmem:[#allocation8 + $0x250] sm:$0xff]
    %v3301 = vld [vmem:[#allocation8 + $0x258] sm:$0xff]
    %v3302 = vld [vmem:[#allocation8 + $0x260] sm:$0xff]
    %v3303 = vld [vmem:[#allocation8 + $0x268] sm:$0xff]
    %v3304 = vld [vmem:[#allocation8 + $0x270] sm:$0xff]
    %v3305 = vld [vmem:[#allocation8 + $0x278] sm:$0xff]
    %v3306 = vld [vmem:[#allocation8 + $0x280] sm:$0xff]
    %v3307 = vld [vmem:[#allocation8 + $0x288] sm:$0xff]
    %v3308 = vld [vmem:[#allocation8 + $0x290] sm:$0xff]
    %v3309 = vld [vmem:[#allocation8 + $0x298] sm:$0xff]
    %v3310 = vld [vmem:[#allocation8 + $0x2a0] sm:$0xff]
    %v3311 = vld [vmem:[#allocation8 + $0x2a8] sm:$0xff]
    %v3312 = vld [vmem:[#allocation8 + $0x2b0] sm:$0xff]
    %v3313 = vld [vmem:[#allocation8 + $0x2b8] sm:$0xff]
    %v3314 = vld [vmem:[#allocation8 + $0x2c0] sm:$0xff]
    %v3315 = vld [vmem:[#allocation8 + $0x2c8] sm:$0xff]
    %v3316 = vld [vmem:[#allocation8 + $0x2d0] sm:$0xff]
    %v3317 = vld [vmem:[#allocation8 + $0x2d8] sm:$0xff]
    %v3318 = vld [vmem:[#allocation8 + $0x2e0] sm:$0xff]
    %v3319 = vld [vmem:[#allocation8 + $0x2e8] sm:$0xff]
    %v3320 = vld [vmem:[#allocation8 + $0x2f0] sm:$0xff]
    %v3321 = vld [vmem:[#allocation8 + $0x2f8] sm:$0xff]
    %v3322 = vld [vmem:[#allocation8 + $0x300] sm:$0xff]
    %v3323 = vld [vmem:[#allocation8 + $0x308] sm:$0xff]
    %v3324 = vld [vmem:[#allocation8 + $0x310] sm:$0xff]
    %v3325 = vld [vmem:[#allocation8 + $0x318] sm:$0xff]
    %v3326 = vld [vmem:[#allocation8 + $0x320] sm:$0xff]
    %v3327 = vld [vmem:[#allocation8 + $0x328] sm:$0xff]
    %v3328 = vld [vmem:[#allocation8 + $0x330] sm:$0xff]
    %v3329 = vld [vmem:[#allocation8 + $0x338] sm:$0xff]
    %v3330 = vld [vmem:[#allocation8 + $0x340] sm:$0xff]
    %v3331 = vld [vmem:[#allocation8 + $0x348] sm:$0xff]
    %v3332 = vld [vmem:[#allocation8 + $0x350] sm:$0xff]
    %v3333 = vld [vmem:[#allocation8 + $0x358] sm:$0xff]
    %v3334 = vld [vmem:[#allocation8 + $0x360] sm:$0xff]
    %v3335 = vld [vmem:[#allocation8 + $0x368] sm:$0xff]
    %v3336 = vld [vmem:[#allocation8 + $0x370] sm:$0xff]
    %v3337 = vld [vmem:[#allocation8 + $0x378] sm:$0xff]
    %v3338 = vld [vmem:[#allocation8 + $0x380] sm:$0xff]
    %v3339 = vld [vmem:[#allocation8 + $0x388] sm:$0xff]
    %v3340 = vld [vmem:[#allocation8 + $0x390] sm:$0xff]
    %v3341 = vld [vmem:[#allocation8 + $0x398] sm:$0xff]
    %v3342 = vld [vmem:[#allocation8 + $0x3a0] sm:$0xff]
    %v3343 = vld [vmem:[#allocation8 + $0x3a8] sm:$0xff]
    %v3344 = vld [vmem:[#allocation8 + $0x3b0] sm:$0xff]
    %v3345 = vld [vmem:[#allocation8 + $0x3b8] sm:$0xff]
    %v3346 = vld [vmem:[#allocation8 + $0x3c0] sm:$0xff]
    %v3347 = vld [vmem:[#allocation8 + $0x3c8] sm:$0xff]
    %v3348 = vld [vmem:[#allocation8 + $0x3d0] sm:$0xff]
    %v3349 = vld [vmem:[#allocation8 + $0x3d8] sm:$0xff]
    %v3350 = vld [vmem:[#allocation8 + $0x3e0] sm:$0xff]
    %v3351 = vld [vmem:[#allocation8 + $0x3e8] sm:$0xff]
    %v3352 = vld [vmem:[#allocation8 + $0x3f0] sm:$0xff]
    %v3353 = vld [vmem:[#allocation8 + $0x3f8] sm:$0xff]
    %v3354 = vld [vmem:[#allocation8 + $0x400] sm:$0xff]
    %v3355 = vld [vmem:[#allocation8 + $0x408] sm:$0xff]
    %v3356 = vld [vmem:[#allocation8 + $0x410] sm:$0xff]
    %v3357 = vld [vmem:[#allocation8 + $0x418] sm:$0xff]
    %v3358 = vld [vmem:[#allocation8 + $0x420] sm:$0xff]
    %v3359 = vld [vmem:[#allocation8 + $0x428] sm:$0xff]
    %v3360 = vld [vmem:[#allocation8 + $0x430] sm:$0xff]
    %v3361 = vld [vmem:[#allocation8 + $0x438] sm:$0xff]
    %v3362 = vld [vmem:[#allocation8 + $0x440] sm:$0xff]
    %v3363 = vld [vmem:[#allocation8 + $0x448] sm:$0xff]
    %v3364 = vld [vmem:[#allocation8 + $0x450] sm:$0xff]
    %v3365 = vld [vmem:[#allocation8 + $0x458] sm:$0xff]
    %v3366 = vld [vmem:[#allocation8 + $0x460] sm:$0xff]
    %v3367 = vld [vmem:[#allocation8 + $0x468] sm:$0xff]
    %v3368 = vld [vmem:[#allocation8 + $0x470] sm:$0xff]
    %v3369 = vld [vmem:[#allocation8 + $0x478] sm:$0xff]
    %v3370 = vld [vmem:[#allocation8 + $0x480] sm:$0xff]
    %v3371 = vld [vmem:[#allocation8 + $0x488] sm:$0xff]
    %v3372 = vld [vmem:[#allocation8 + $0x490] sm:$0xff]
    %v3373 = vld [vmem:[#allocation8 + $0x498] sm:$0xff]
    %v3374 = vld [vmem:[#allocation8 + $0x4a0] sm:$0xff]
    %v3375 = vld [vmem:[#allocation8 + $0x4a8] sm:$0xff]
    %v3376 = vld [vmem:[#allocation8 + $0x4b0] sm:$0xff]
    %v3377 = vld [vmem:[#allocation8 + $0x4b8] sm:$0xff]
    %v3378 = vld [vmem:[#allocation8 + $0x4c0] sm:$0xff]
    %v3379 = vld [vmem:[#allocation8 + $0x4c8] sm:$0xff]
    %v3380 = vld [vmem:[#allocation8 + $0x4d0] sm:$0xff]
    %v3381 = vld [vmem:[#allocation8 + $0x4d8] sm:$0xff]
    %v3382 = vld [vmem:[#allocation8 + $0x4e0] sm:$0xff]
    %v3383 = vld [vmem:[#allocation8 + $0x4e8] sm:$0xff]
    %v3384 = vld [vmem:[#allocation8 + $0x4f0] sm:$0xff]
    %v3385 = vld [vmem:[#allocation8 + $0x4f8] sm:$0xff]
    %v3386 = vld [vmem:[#allocation8 + $0x500] sm:$0xff]
    %v3387 = vld [vmem:[#allocation8 + $0x508] sm:$0xff]
    %v3388 = vld [vmem:[#allocation8 + $0x510] sm:$0xff]
    %v3389 = vld [vmem:[#allocation8 + $0x518] sm:$0xff]
    %v3390 = vld [vmem:[#allocation8 + $0x520] sm:$0xff]
    %v3391 = vld [vmem:[#allocation8 + $0x528] sm:$0xff]
    %v3392 = vld [vmem:[#allocation8 + $0x530] sm:$0xff]
    %v3393 = vld [vmem:[#allocation8 + $0x538] sm:$0xff]
    %v3394 = vld [vmem:[#allocation8 + $0x540] sm:$0xff]
    %v3395 = vld [vmem:[#allocation8 + $0x548] sm:$0xff]
    %v3396 = vld [vmem:[#allocation8 + $0x550] sm:$0xff]
    %v3397 = vld [vmem:[#allocation8 + $0x558] sm:$0xff]
    %v3398 = vld [vmem:[#allocation8 + $0x560] sm:$0xff]
    %v3399 = vld [vmem:[#allocation8 + $0x568] sm:$0xff]
    %v3400 = vld [vmem:[#allocation8 + $0x570] sm:$0xff]
    %v3401 = vld [vmem:[#allocation8 + $0x578] sm:$0xff]
    %v3402 = vld [vmem:[#allocation8 + $0x580] sm:$0xff]
    %v3403 = vld [vmem:[#allocation8 + $0x588] sm:$0xff]
    %v3404 = vld [vmem:[#allocation8 + $0x590] sm:$0xff]
    %v3405 = vld [vmem:[#allocation8 + $0x598] sm:$0xff]
    %v3406 = vld [vmem:[#allocation8 + $0x5a0] sm:$0xff]
    %v3407 = vld [vmem:[#allocation8 + $0x5a8] sm:$0xff]
    %v3408 = vld [vmem:[#allocation8 + $0x5b0] sm:$0xff]
    %v3409 = vld [vmem:[#allocation8 + $0x5b8] sm:$0xff]
    %v3410 = vld [vmem:[#allocation8 + $0x5c0] sm:$0xff]
    %v3411 = vld [vmem:[#allocation8 + $0x5c8] sm:$0xff]
    %v3412 = vld [vmem:[#allocation8 + $0x5d0] sm:$0xff]
    %v3413 = vld [vmem:[#allocation8 + $0x5d8] sm:$0xff]
    %v3414 = vld [vmem:[#allocation8 + $0x5e0] sm:$0xff]
    %v3415 = vld [vmem:[#allocation8 + $0x5e8] sm:$0xff]
    %v3416 = vld [vmem:[#allocation8 + $0x5f0] sm:$0xff]
    %v3417 = vld [vmem:[#allocation8 + $0x5f8] sm:$0xff]
    %v3418 = vld [vmem:[#allocation8 + $0x600] sm:$0xff]
    %v3419 = vld [vmem:[#allocation8 + $0x608] sm:$0xff]
    %v3420 = vld [vmem:[#allocation8 + $0x610] sm:$0xff]
    %v3421 = vld [vmem:[#allocation8 + $0x618] sm:$0xff]
    %v3422 = vld [vmem:[#allocation8 + $0x620] sm:$0xff]
    %v3423 = vld [vmem:[#allocation8 + $0x628] sm:$0xff]
    %v3424 = vld [vmem:[#allocation8 + $0x630] sm:$0xff]
    %v3425 = vld [vmem:[#allocation8 + $0x638] sm:$0xff]
    %v3426 = vld [vmem:[#allocation8 + $0x640] sm:$0xff]
    %v3427 = vld [vmem:[#allocation8 + $0x648] sm:$0xff]
    %v3428 = vld [vmem:[#allocation8 + $0x650] sm:$0xff]
    %v3429 = vld [vmem:[#allocation8 + $0x658] sm:$0xff]
    %v3430 = vld [vmem:[#allocation8 + $0x660] sm:$0xff]
    %v3431 = vld [vmem:[#allocation8 + $0x668] sm:$0xff]
    %v3432 = vld [vmem:[#allocation8 + $0x670] sm:$0xff]
    %v3433 = vld [vmem:[#allocation8 + $0x678] sm:$0xff]
    %v3434 = vld [vmem:[#allocation8 + $0x680] sm:$0xff]
    %v3435 = vld [vmem:[#allocation8 + $0x688] sm:$0xff]
    %v3436 = vld [vmem:[#allocation8 + $0x690] sm:$0xff]
    %v3437 = vld [vmem:[#allocation8 + $0x698] sm:$0xff]
    %v3438 = vld [vmem:[#allocation8 + $0x6a0] sm:$0xff]
    %v3439 = vld [vmem:[#allocation8 + $0x6a8] sm:$0xff]
    %v3440 = vld [vmem:[#allocation8 + $0x6b0] sm:$0xff]
    %v3441 = vld [vmem:[#allocation8 + $0x6b8] sm:$0xff]
    %v3442 = vld [vmem:[#allocation8 + $0x6c0] sm:$0xff]
    %v3443 = vld [vmem:[#allocation8 + $0x6c8] sm:$0xff]
    %v3444 = vld [vmem:[#allocation8 + $0x6d0] sm:$0xff]
    %v3445 = vld [vmem:[#allocation8 + $0x6d8] sm:$0xff]
    %v3446 = vld [vmem:[#allocation8 + $0x6e0] sm:$0xff]
    %v3447 = vld [vmem:[#allocation8 + $0x6e8] sm:$0xff]
    %v3448 = vld [vmem:[#allocation8 + $0x6f0] sm:$0xff]
    %v3449 = vld [vmem:[#allocation8 + $0x6f8] sm:$0xff]
    %v3450 = vld [vmem:[#allocation8 + $0x700] sm:$0xff]
    %v3451 = vld [vmem:[#allocation8 + $0x708] sm:$0xff]
    %v3452 = vld [vmem:[#allocation8 + $0x710] sm:$0xff]
    %v3453 = vld [vmem:[#allocation8 + $0x718] sm:$0xff]
    %v3454 = vld [vmem:[#allocation8 + $0x720] sm:$0xff]
    %v3455 = vld [vmem:[#allocation8 + $0x728] sm:$0xff]
    %v3456 = vld [vmem:[#allocation8 + $0x730] sm:$0xff]
    %v3457 = vld [vmem:[#allocation8 + $0x738] sm:$0xff]
    %v3458 = vld [vmem:[#allocation8 + $0x740] sm:$0xff]
    %v3459 = vld [vmem:[#allocation8 + $0x748] sm:$0xff]
    %v3460 = vld [vmem:[#allocation8 + $0x750] sm:$0xff]
    %v3461 = vld [vmem:[#allocation8 + $0x758] sm:$0xff]
    %v3462 = vld [vmem:[#allocation8 + $0x760] sm:$0xff]
    %v3463 = vld [vmem:[#allocation8 + $0x768] sm:$0xff]
    %v3464 = vld [vmem:[#allocation8 + $0x770] sm:$0xff]
    %v3465 = vld [vmem:[#allocation8 + $0x778] sm:$0xff]
    %v3466 = vld [vmem:[#allocation8 + $0x780] sm:$0xff]
    %v3467 = vld [vmem:[#allocation8 + $0x788] sm:$0xff]
    %v3468 = vld [vmem:[#allocation8 + $0x790] sm:$0xff]
    %v3469 = vld [vmem:[#allocation8 + $0x798] sm:$0xff]
    %v3470 = vld [vmem:[#allocation8 + $0x7a0] sm:$0xff]
    %v3471 = vld [vmem:[#allocation8 + $0x7a8] sm:$0xff]
    %v3472 = vld [vmem:[#allocation8 + $0x7b0] sm:$0xff]
    %v3473 = vld [vmem:[#allocation8 + $0x7b8] sm:$0xff]
    %v3474 = vld [vmem:[#allocation8 + $0x7c0] sm:$0xff]
    %v3475 = vld [vmem:[#allocation8 + $0x7c8] sm:$0xff]
    %v3476 = vld [vmem:[#allocation8 + $0x7d0] sm:$0xff]
    %v3477 = vld [vmem:[#allocation8 + $0x7d8] sm:$0xff]
    %v3478 = vld [vmem:[#allocation8 + $0x7e0] sm:$0xff]
    %v3479 = vld [vmem:[#allocation8 + $0x7e8] sm:$0xff]
    %v3480 = vld [vmem:[#allocation8 + $0x7f0] sm:$0xff]
    %v3481 = vld [vmem:[#allocation8 + $0x7f8] sm:$0xff]
    %v3482 = vld [vmem:[#allocation10] sm:$0xf]
    %v3484 = vlaneseq
    %v3485 = vshrl.u32 %v3484, 7
    %v3486 = vsub.s32 0, %v3485
    %v3487 = vrot.slane %v3482, %v3486
    %v3488 = vlaneseq
    %v3489 = vshrl.u32 %v3488, 7
    %v3490 = vsub.s32 1, %v3489
    %v3491 = vrot.slane %v3482, %v3490
    %v3492 = vlaneseq
    %v3493 = vshrl.u32 %v3492, 7
    %v3494 = vsub.s32 2, %v3493
    %v3495 = vrot.slane %v3482, %v3494
    %v3496 = vlaneseq
    %v3497 = vshrl.u32 %v3496, 7
    %v3498 = vsub.s32 3, %v3497
    %v3499 = vrot.slane %v3482, %v3498
    %v3760 = vunpack.c.l.b16 %v3226
    %v3761 = vunpack.c.h.b16 %v3226
    %v3762 = vunpack.c.l.b16 %v3227
    %v3763 = vunpack.c.h.b16 %v3227
    %v3764 = vunpack.c.l.b16 %v3228
    %v3765 = vunpack.c.h.b16 %v3228
    %v3766 = vunpack.c.l.b16 %v3229
    %v3767 = vunpack.c.h.b16 %v3229
    %v3768 = vunpack.c.l.b16 %v3230
    %v3769 = vunpack.c.h.b16 %v3230
    %v3770 = vunpack.c.l.b16 %v3231
    %v3771 = vunpack.c.h.b16 %v3231
    %v3772 = vunpack.c.l.b16 %v3232
    %v3773 = vunpack.c.h.b16 %v3232
    %v3774 = vunpack.c.l.b16 %v3233
    %v3775 = vunpack.c.h.b16 %v3233
    %v3776 = vunpack.c.l.b16 %v3234
    %v3777 = vunpack.c.h.b16 %v3234
    %v3778 = vunpack.c.l.b16 %v3235
    %v3779 = vunpack.c.h.b16 %v3235
    %v3780 = vunpack.c.l.b16 %v3236
    %v3781 = vunpack.c.h.b16 %v3236
    %v3782 = vunpack.c.l.b16 %v3237
    %v3783 = vunpack.c.h.b16 %v3237
    %v3784 = vunpack.c.l.b16 %v3238
    %v3785 = vunpack.c.h.b16 %v3238
    %v3786 = vunpack.c.l.b16 %v3239
    %v3787 = vunpack.c.h.b16 %v3239
    %v3788 = vunpack.c.l.b16 %v3240
    %v3789 = vunpack.c.h.b16 %v3240
    %v3790 = vunpack.c.l.b16 %v3241
    %v3791 = vunpack.c.h.b16 %v3241
    %v3792 = vunpack.c.l.b16 %v3242
    %v3793 = vunpack.c.h.b16 %v3242
    %v3794 = vunpack.c.l.b16 %v3243
    %v3795 = vunpack.c.h.b16 %v3243
    %v3796 = vunpack.c.l.b16 %v3244
    %v3797 = vunpack.c.h.b16 %v3244
    %v3798 = vunpack.c.l.b16 %v3245
    %v3799 = vunpack.c.h.b16 %v3245
    %v3800 = vunpack.c.l.b16 %v3246
    %v3801 = vunpack.c.h.b16 %v3246
    %v3802 = vunpack.c.l.b16 %v3247
    %v3803 = vunpack.c.h.b16 %v3247
    %v3804 = vunpack.c.l.b16 %v3248
    %v3805 = vunpack.c.h.b16 %v3248
    %v3806 = vunpack.c.l.b16 %v3249
    %v3807 = vunpack.c.h.b16 %v3249
    %v3808 = vunpack.c.l.b16 %v3250
    %v3809 = vunpack.c.h.b16 %v3250
    %v3810 = vunpack.c.l.b16 %v3251
    %v3811 = vunpack.c.h.b16 %v3251
    %v3812 = vunpack.c.l.b16 %v3252
    %v3813 = vunpack.c.h.b16 %v3252
    %v3814 = vunpack.c.l.b16 %v3253
    %v3815 = vunpack.c.h.b16 %v3253
    %v3816 = vunpack.c.l.b16 %v3254
    %v3817 = vunpack.c.h.b16 %v3254
    %v3818 = vunpack.c.l.b16 %v3255
    %v3819 = vunpack.c.h.b16 %v3255
    %v3820 = vunpack.c.l.b16 %v3256
    %v3821 = vunpack.c.h.b16 %v3256
    %v3822 = vunpack.c.l.b16 %v3257
    %v3823 = vunpack.c.h.b16 %v3257
    %v3824 = vunpack.c.l.b16 %v3258
    %v3825 = vunpack.c.h.b16 %v3258
    %v3826 = vunpack.c.l.b16 %v3259
    %v3827 = vunpack.c.h.b16 %v3259
    %v3828 = vunpack.c.l.b16 %v3260
    %v3829 = vunpack.c.h.b16 %v3260
    %v3830 = vunpack.c.l.b16 %v3261
    %v3831 = vunpack.c.h.b16 %v3261
    %v3832 = vunpack.c.l.b16 %v3262
    %v3833 = vunpack.c.h.b16 %v3262
    %v3834 = vunpack.c.l.b16 %v3263
    %v3835 = vunpack.c.h.b16 %v3263
    %v3836 = vunpack.c.l.b16 %v3264
    %v3837 = vunpack.c.h.b16 %v3264
    %v3838 = vunpack.c.l.b16 %v3265
    %v3839 = vunpack.c.h.b16 %v3265
    %v3840 = vunpack.c.l.b16 %v3266
    %v3841 = vunpack.c.h.b16 %v3266
    %v3842 = vunpack.c.l.b16 %v3267
    %v3843 = vunpack.c.h.b16 %v3267
    %v3844 = vunpack.c.l.b16 %v3268
    %v3845 = vunpack.c.h.b16 %v3268
    %v3846 = vunpack.c.l.b16 %v3269
    %v3847 = vunpack.c.h.b16 %v3269
    %v3848 = vunpack.c.l.b16 %v3270
    %v3849 = vunpack.c.h.b16 %v3270
    %v3850 = vunpack.c.l.b16 %v3271
    %v3851 = vunpack.c.h.b16 %v3271
    %v3852 = vunpack.c.l.b16 %v3272
    %v3853 = vunpack.c.h.b16 %v3272
    %v3854 = vunpack.c.l.b16 %v3273
    %v3855 = vunpack.c.h.b16 %v3273
    %v3856 = vunpack.c.l.b16 %v3274
    %v3857 = vunpack.c.h.b16 %v3274
    %v3858 = vunpack.c.l.b16 %v3275
    %v3859 = vunpack.c.h.b16 %v3275
    %v3860 = vunpack.c.l.b16 %v3276
    %v3861 = vunpack.c.h.b16 %v3276
    %v3862 = vunpack.c.l.b16 %v3277
    %v3863 = vunpack.c.h.b16 %v3277
    %v3864 = vunpack.c.l.b16 %v3278
    %v3865 = vunpack.c.h.b16 %v3278
    %v3866 = vunpack.c.l.b16 %v3279
    %v3867 = vunpack.c.h.b16 %v3279
    %v3868 = vunpack.c.l.b16 %v3280
    %v3869 = vunpack.c.h.b16 %v3280
    %v3870 = vunpack.c.l.b16 %v3281
    %v3871 = vunpack.c.h.b16 %v3281
    %v3872 = vunpack.c.l.b16 %v3282
    %v3873 = vunpack.c.h.b16 %v3282
    %v3874 = vunpack.c.l.b16 %v3283
    %v3875 = vunpack.c.h.b16 %v3283
    %v3876 = vunpack.c.l.b16 %v3284
    %v3877 = vunpack.c.h.b16 %v3284
    %v3878 = vunpack.c.l.b16 %v3285
    %v3879 = vunpack.c.h.b16 %v3285
    %v3880 = vunpack.c.l.b16 %v3286
    %v3881 = vunpack.c.h.b16 %v3286
    %v3882 = vunpack.c.l.b16 %v3287
    %v3883 = vunpack.c.h.b16 %v3287
    %v3884 = vunpack.c.l.b16 %v3288
    %v3885 = vunpack.c.h.b16 %v3288
    %v3886 = vunpack.c.l.b16 %v3289
    %v3887 = vunpack.c.h.b16 %v3289
    %v3888 = vunpack.c.l.b16 %v3290
    %v3889 = vunpack.c.h.b16 %v3290
    %v3890 = vunpack.c.l.b16 %v3291
    %v3891 = vunpack.c.h.b16 %v3291
    %v3892 = vunpack.c.l.b16 %v3292
    %v3893 = vunpack.c.h.b16 %v3292
    %v3894 = vunpack.c.l.b16 %v3293
    %v3895 = vunpack.c.h.b16 %v3293
    %v3896 = vunpack.c.l.b16 %v3294
    %v3897 = vunpack.c.h.b16 %v3294
    %v3898 = vunpack.c.l.b16 %v3295
    %v3899 = vunpack.c.h.b16 %v3295
    %v3900 = vunpack.c.l.b16 %v3296
    %v3901 = vunpack.c.h.b16 %v3296
    %v3902 = vunpack.c.l.b16 %v3297
    %v3903 = vunpack.c.h.b16 %v3297
    %v3904 = vunpack.c.l.b16 %v3298
    %v3905 = vunpack.c.h.b16 %v3298
    %v3906 = vunpack.c.l.b16 %v3299
    %v3907 = vunpack.c.h.b16 %v3299
    %v3908 = vunpack.c.l.b16 %v3300
    %v3909 = vunpack.c.h.b16 %v3300
    %v3910 = vunpack.c.l.b16 %v3301
    %v3911 = vunpack.c.h.b16 %v3301
    %v3912 = vunpack.c.l.b16 %v3302
    %v3913 = vunpack.c.h.b16 %v3302
    %v3914 = vunpack.c.l.b16 %v3303
    %v3915 = vunpack.c.h.b16 %v3303
    %v3916 = vunpack.c.l.b16 %v3304
    %v3917 = vunpack.c.h.b16 %v3304
    %v3918 = vunpack.c.l.b16 %v3305
    %v3919 = vunpack.c.h.b16 %v3305
    %v3920 = vunpack.c.l.b16 %v3306
    %v3921 = vunpack.c.h.b16 %v3306
    %v3922 = vunpack.c.l.b16 %v3307
    %v3923 = vunpack.c.h.b16 %v3307
    %v3924 = vunpack.c.l.b16 %v3308
    %v3925 = vunpack.c.h.b16 %v3308
    %v3926 = vunpack.c.l.b16 %v3309
    %v3927 = vunpack.c.h.b16 %v3309
    %v3928 = vunpack.c.l.b16 %v3310
    %v3929 = vunpack.c.h.b16 %v3310
    %v3930 = vunpack.c.l.b16 %v3311
    %v3931 = vunpack.c.h.b16 %v3311
    %v3932 = vunpack.c.l.b16 %v3312
    %v3933 = vunpack.c.h.b16 %v3312
    %v3934 = vunpack.c.l.b16 %v3313
    %v3935 = vunpack.c.h.b16 %v3313
    %v3936 = vunpack.c.l.b16 %v3314
    %v3937 = vunpack.c.h.b16 %v3314
    %v3938 = vunpack.c.l.b16 %v3315
    %v3939 = vunpack.c.h.b16 %v3315
    %v3940 = vunpack.c.l.b16 %v3316
    %v3941 = vunpack.c.h.b16 %v3316
    %v3942 = vunpack.c.l.b16 %v3317
    %v3943 = vunpack.c.h.b16 %v3317
    %v3944 = vunpack.c.l.b16 %v3318
    %v3945 = vunpack.c.h.b16 %v3318
    %v3946 = vunpack.c.l.b16 %v3319
    %v3947 = vunpack.c.h.b16 %v3319
    %v3948 = vunpack.c.l.b16 %v3320
    %v3949 = vunpack.c.h.b16 %v3320
    %v3950 = vunpack.c.l.b16 %v3321
    %v3951 = vunpack.c.h.b16 %v3321
    %v3952 = vunpack.c.l.b16 %v3322
    %v3953 = vunpack.c.h.b16 %v3322
    %v3954 = vunpack.c.l.b16 %v3323
    %v3955 = vunpack.c.h.b16 %v3323
    %v3956 = vunpack.c.l.b16 %v3324
    %v3957 = vunpack.c.h.b16 %v3324
    %v3958 = vunpack.c.l.b16 %v3325
    %v3959 = vunpack.c.h.b16 %v3325
    %v3960 = vunpack.c.l.b16 %v3326
    %v3961 = vunpack.c.h.b16 %v3326
    %v3962 = vunpack.c.l.b16 %v3327
    %v3963 = vunpack.c.h.b16 %v3327
    %v3964 = vunpack.c.l.b16 %v3328
    %v3965 = vunpack.c.h.b16 %v3328
    %v3966 = vunpack.c.l.b16 %v3329
    %v3967 = vunpack.c.h.b16 %v3329
    %v3968 = vunpack.c.l.b16 %v3330
    %v3969 = vunpack.c.h.b16 %v3330
    %v3970 = vunpack.c.l.b16 %v3331
    %v3971 = vunpack.c.h.b16 %v3331
    %v3972 = vunpack.c.l.b16 %v3332
    %v3973 = vunpack.c.h.b16 %v3332
    %v3974 = vunpack.c.l.b16 %v3333
    %v3975 = vunpack.c.h.b16 %v3333
    %v3976 = vunpack.c.l.b16 %v3334
    %v3977 = vunpack.c.h.b16 %v3334
    %v3978 = vunpack.c.l.b16 %v3335
    %v3979 = vunpack.c.h.b16 %v3335
    %v3980 = vunpack.c.l.b16 %v3336
    %v3981 = vunpack.c.h.b16 %v3336
    %v3982 = vunpack.c.l.b16 %v3337
    %v3983 = vunpack.c.h.b16 %v3337
    %v3984 = vunpack.c.l.b16 %v3338
    %v3985 = vunpack.c.h.b16 %v3338
    %v3986 = vunpack.c.l.b16 %v3339
    %v3987 = vunpack.c.h.b16 %v3339
    %v3988 = vunpack.c.l.b16 %v3340
    %v3989 = vunpack.c.h.b16 %v3340
    %v3990 = vunpack.c.l.b16 %v3341
    %v3991 = vunpack.c.h.b16 %v3341
    %v3992 = vunpack.c.l.b16 %v3342
    %v3993 = vunpack.c.h.b16 %v3342
    %v3994 = vunpack.c.l.b16 %v3343
    %v3995 = vunpack.c.h.b16 %v3343
    %v3996 = vunpack.c.l.b16 %v3344
    %v3997 = vunpack.c.h.b16 %v3344
    %v3998 = vunpack.c.l.b16 %v3345
    %v3999 = vunpack.c.h.b16 %v3345
    %v4000 = vunpack.c.l.b16 %v3346
    %v4001 = vunpack.c.h.b16 %v3346
    %v4002 = vunpack.c.l.b16 %v3347
    %v4003 = vunpack.c.h.b16 %v3347
    %v4004 = vunpack.c.l.b16 %v3348
    %v4005 = vunpack.c.h.b16 %v3348
    %v4006 = vunpack.c.l.b16 %v3349
    %v4007 = vunpack.c.h.b16 %v3349
    %v4008 = vunpack.c.l.b16 %v3350
    %v4009 = vunpack.c.h.b16 %v3350
    %v4010 = vunpack.c.l.b16 %v3351
    %v4011 = vunpack.c.h.b16 %v3351
    %v4012 = vunpack.c.l.b16 %v3352
    %v4013 = vunpack.c.h.b16 %v3352
    %v4014 = vunpack.c.l.b16 %v3353
    %v4015 = vunpack.c.h.b16 %v3353
    %v4016 = vunpack.c.l.b16 %v3354
    %v4017 = vunpack.c.h.b16 %v3354
    %v4018 = vunpack.c.l.b16 %v3355
    %v4019 = vunpack.c.h.b16 %v3355
    %v4020 = vunpack.c.l.b16 %v3356
    %v4021 = vunpack.c.h.b16 %v3356
    %v4022 = vunpack.c.l.b16 %v3357
    %v4023 = vunpack.c.h.b16 %v3357
    %v4024 = vunpack.c.l.b16 %v3358
    %v4025 = vunpack.c.h.b16 %v3358
    %v4026 = vunpack.c.l.b16 %v3359
    %v4027 = vunpack.c.h.b16 %v3359
    %v4028 = vunpack.c.l.b16 %v3360
    %v4029 = vunpack.c.h.b16 %v3360
    %v4030 = vunpack.c.l.b16 %v3361
    %v4031 = vunpack.c.h.b16 %v3361
    %v4032 = vunpack.c.l.b16 %v3362
    %v4033 = vunpack.c.h.b16 %v3362
    %v4034 = vunpack.c.l.b16 %v3363
    %v4035 = vunpack.c.h.b16 %v3363
    %v4036 = vunpack.c.l.b16 %v3364
    %v4037 = vunpack.c.h.b16 %v3364
    %v4038 = vunpack.c.l.b16 %v3365
    %v4039 = vunpack.c.h.b16 %v3365
    %v4040 = vunpack.c.l.b16 %v3366
    %v4041 = vunpack.c.h.b16 %v3366
    %v4042 = vunpack.c.l.b16 %v3367
    %v4043 = vunpack.c.h.b16 %v3367
    %v4044 = vunpack.c.l.b16 %v3368
    %v4045 = vunpack.c.h.b16 %v3368
    %v4046 = vunpack.c.l.b16 %v3369
    %v4047 = vunpack.c.h.b16 %v3369
    %v4048 = vunpack.c.l.b16 %v3370
    %v4049 = vunpack.c.h.b16 %v3370
    %v4050 = vunpack.c.l.b16 %v3371
    %v4051 = vunpack.c.h.b16 %v3371
    %v4052 = vunpack.c.l.b16 %v3372
    %v4053 = vunpack.c.h.b16 %v3372
    %v4054 = vunpack.c.l.b16 %v3373
    %v4055 = vunpack.c.h.b16 %v3373
    %v4056 = vunpack.c.l.b16 %v3374
    %v4057 = vunpack.c.h.b16 %v3374
    %v4058 = vunpack.c.l.b16 %v3375
    %v4059 = vunpack.c.h.b16 %v3375
    %v4060 = vunpack.c.l.b16 %v3376
    %v4061 = vunpack.c.h.b16 %v3376
    %v4062 = vunpack.c.l.b16 %v3377
    %v4063 = vunpack.c.h.b16 %v3377
    %v4064 = vunpack.c.l.b16 %v3378
    %v4065 = vunpack.c.h.b16 %v3378
    %v4066 = vunpack.c.l.b16 %v3379
    %v4067 = vunpack.c.h.b16 %v3379
    %v4068 = vunpack.c.l.b16 %v3380
    %v4069 = vunpack.c.h.b16 %v3380
    %v4070 = vunpack.c.l.b16 %v3381
    %v4071 = vunpack.c.h.b16 %v3381
    %v4072 = vunpack.c.l.b16 %v3382
    %v4073 = vunpack.c.h.b16 %v3382
    %v4074 = vunpack.c.l.b16 %v3383
    %v4075 = vunpack.c.h.b16 %v3383
    %v4076 = vunpack.c.l.b16 %v3384
    %v4077 = vunpack.c.h.b16 %v3384
    %v4078 = vunpack.c.l.b16 %v3385
    %v4079 = vunpack.c.h.b16 %v3385
    %v4080 = vunpack.c.l.b16 %v3386
    %v4081 = vunpack.c.h.b16 %v3386
    %v4082 = vunpack.c.l.b16 %v3387
    %v4083 = vunpack.c.h.b16 %v3387
    %v4084 = vunpack.c.l.b16 %v3388
    %v4085 = vunpack.c.h.b16 %v3388
    %v4086 = vunpack.c.l.b16 %v3389
    %v4087 = vunpack.c.h.b16 %v3389
    %v4088 = vunpack.c.l.b16 %v3390
    %v4089 = vunpack.c.h.b16 %v3390
    %v4090 = vunpack.c.l.b16 %v3391
    %v4091 = vunpack.c.h.b16 %v3391
    %v4092 = vunpack.c.l.b16 %v3392
    %v4093 = vunpack.c.h.b16 %v3392
    %v4094 = vunpack.c.l.b16 %v3393
    %v4095 = vunpack.c.h.b16 %v3393
    %v4096 = vunpack.c.l.b16 %v3394
    %v4097 = vunpack.c.h.b16 %v3394
    %v4098 = vunpack.c.l.b16 %v3395
    %v4099 = vunpack.c.h.b16 %v3395
    %v4100 = vunpack.c.l.b16 %v3396
    %v4101 = vunpack.c.h.b16 %v3396
    %v4102 = vunpack.c.l.b16 %v3397
    %v4103 = vunpack.c.h.b16 %v3397
    %v4104 = vunpack.c.l.b16 %v3398
    %v4105 = vunpack.c.h.b16 %v3398
    %v4106 = vunpack.c.l.b16 %v3399
    %v4107 = vunpack.c.h.b16 %v3399
    %v4108 = vunpack.c.l.b16 %v3400
    %v4109 = vunpack.c.h.b16 %v3400
    %v4110 = vunpack.c.l.b16 %v3401
    %v4111 = vunpack.c.h.b16 %v3401
    %v4112 = vunpack.c.l.b16 %v3402
    %v4113 = vunpack.c.h.b16 %v3402
    %v4114 = vunpack.c.l.b16 %v3403
    %v4115 = vunpack.c.h.b16 %v3403
    %v4116 = vunpack.c.l.b16 %v3404
    %v4117 = vunpack.c.h.b16 %v3404
    %v4118 = vunpack.c.l.b16 %v3405
    %v4119 = vunpack.c.h.b16 %v3405
    %v4120 = vunpack.c.l.b16 %v3406
    %v4121 = vunpack.c.h.b16 %v3406
    %v4122 = vunpack.c.l.b16 %v3407
    %v4123 = vunpack.c.h.b16 %v3407
    %v4124 = vunpack.c.l.b16 %v3408
    %v4125 = vunpack.c.h.b16 %v3408
    %v4126 = vunpack.c.l.b16 %v3409
    %v4127 = vunpack.c.h.b16 %v3409
    %v4128 = vunpack.c.l.b16 %v3410
    %v4129 = vunpack.c.h.b16 %v3410
    %v4130 = vunpack.c.l.b16 %v3411
    %v4131 = vunpack.c.h.b16 %v3411
    %v4132 = vunpack.c.l.b16 %v3412
    %v4133 = vunpack.c.h.b16 %v3412
    %v4134 = vunpack.c.l.b16 %v3413
    %v4135 = vunpack.c.h.b16 %v3413
    %v4136 = vunpack.c.l.b16 %v3414
    %v4137 = vunpack.c.h.b16 %v3414
    %v4138 = vunpack.c.l.b16 %v3415
    %v4139 = vunpack.c.h.b16 %v3415
    %v4140 = vunpack.c.l.b16 %v3416
    %v4141 = vunpack.c.h.b16 %v3416
    %v4142 = vunpack.c.l.b16 %v3417
    %v4143 = vunpack.c.h.b16 %v3417
    %v4144 = vunpack.c.l.b16 %v3418
    %v4145 = vunpack.c.h.b16 %v3418
    %v4146 = vunpack.c.l.b16 %v3419
    %v4147 = vunpack.c.h.b16 %v3419
    %v4148 = vunpack.c.l.b16 %v3420
    %v4149 = vunpack.c.h.b16 %v3420
    %v4150 = vunpack.c.l.b16 %v3421
    %v4151 = vunpack.c.h.b16 %v3421
    %v4152 = vunpack.c.l.b16 %v3422
    %v4153 = vunpack.c.h.b16 %v3422
    %v4154 = vunpack.c.l.b16 %v3423
    %v4155 = vunpack.c.h.b16 %v3423
    %v4156 = vunpack.c.l.b16 %v3424
    %v4157 = vunpack.c.h.b16 %v3424
    %v4158 = vunpack.c.l.b16 %v3425
    %v4159 = vunpack.c.h.b16 %v3425
    %v4160 = vunpack.c.l.b16 %v3426
    %v4161 = vunpack.c.h.b16 %v3426
    %v4162 = vunpack.c.l.b16 %v3427
    %v4163 = vunpack.c.h.b16 %v3427
    %v4164 = vunpack.c.l.b16 %v3428
    %v4165 = vunpack.c.h.b16 %v3428
    %v4166 = vunpack.c.l.b16 %v3429
    %v4167 = vunpack.c.h.b16 %v3429
    %v4168 = vunpack.c.l.b16 %v3430
    %v4169 = vunpack.c.h.b16 %v3430
    %v4170 = vunpack.c.l.b16 %v3431
    %v4171 = vunpack.c.h.b16 %v3431
    %v4172 = vunpack.c.l.b16 %v3432
    %v4173 = vunpack.c.h.b16 %v3432
    %v4174 = vunpack.c.l.b16 %v3433
    %v4175 = vunpack.c.h.b16 %v3433
    %v4176 = vunpack.c.l.b16 %v3434
    %v4177 = vunpack.c.h.b16 %v3434
    %v4178 = vunpack.c.l.b16 %v3435
    %v4179 = vunpack.c.h.b16 %v3435
    %v4180 = vunpack.c.l.b16 %v3436
    %v4181 = vunpack.c.h.b16 %v3436
    %v4182 = vunpack.c.l.b16 %v3437
    %v4183 = vunpack.c.h.b16 %v3437
    %v4184 = vunpack.c.l.b16 %v3438
    %v4185 = vunpack.c.h.b16 %v3438
    %v4186 = vunpack.c.l.b16 %v3439
    %v4187 = vunpack.c.h.b16 %v3439
    %v4188 = vunpack.c.l.b16 %v3440
    %v4189 = vunpack.c.h.b16 %v3440
    %v4190 = vunpack.c.l.b16 %v3441
    %v4191 = vunpack.c.h.b16 %v3441
    %v4192 = vunpack.c.l.b16 %v3442
    %v4193 = vunpack.c.h.b16 %v3442
    %v4194 = vunpack.c.l.b16 %v3443
    %v4195 = vunpack.c.h.b16 %v3443
    %v4196 = vunpack.c.l.b16 %v3444
    %v4197 = vunpack.c.h.b16 %v3444
    %v4198 = vunpack.c.l.b16 %v3445
    %v4199 = vunpack.c.h.b16 %v3445
    %v4200 = vunpack.c.l.b16 %v3446
    %v4201 = vunpack.c.h.b16 %v3446
    %v4202 = vunpack.c.l.b16 %v3447
    %v4203 = vunpack.c.h.b16 %v3447
    %v4204 = vunpack.c.l.b16 %v3448
    %v4205 = vunpack.c.h.b16 %v3448
    %v4206 = vunpack.c.l.b16 %v3449
    %v4207 = vunpack.c.h.b16 %v3449
    %v4208 = vunpack.c.l.b16 %v3450
    %v4209 = vunpack.c.h.b16 %v3450
    %v4210 = vunpack.c.l.b16 %v3451
    %v4211 = vunpack.c.h.b16 %v3451
    %v4212 = vunpack.c.l.b16 %v3452
    %v4213 = vunpack.c.h.b16 %v3452
    %v4214 = vunpack.c.l.b16 %v3453
    %v4215 = vunpack.c.h.b16 %v3453
    %v4216 = vunpack.c.l.b16 %v3454
    %v4217 = vunpack.c.h.b16 %v3454
    %v4218 = vunpack.c.l.b16 %v3455
    %v4219 = vunpack.c.h.b16 %v3455
    %v4220 = vunpack.c.l.b16 %v3456
    %v4221 = vunpack.c.h.b16 %v3456
    %v4222 = vunpack.c.l.b16 %v3457
    %v4223 = vunpack.c.h.b16 %v3457
    %v4224 = vunpack.c.l.b16 %v3458
    %v4225 = vunpack.c.h.b16 %v3458
    %v4226 = vunpack.c.l.b16 %v3459
    %v4227 = vunpack.c.h.b16 %v3459
    %v4228 = vunpack.c.l.b16 %v3460
    %v4229 = vunpack.c.h.b16 %v3460
    %v4230 = vunpack.c.l.b16 %v3461
    %v4231 = vunpack.c.h.b16 %v3461
    %v4232 = vunpack.c.l.b16 %v3462
    %v4233 = vunpack.c.h.b16 %v3462
    %v4234 = vunpack.c.l.b16 %v3463
    %v4235 = vunpack.c.h.b16 %v3463
    %v4236 = vunpack.c.l.b16 %v3464
    %v4237 = vunpack.c.h.b16 %v3464
    %v4238 = vunpack.c.l.b16 %v3465
    %v4239 = vunpack.c.h.b16 %v3465
    %v4240 = vunpack.c.l.b16 %v3466
    %v4241 = vunpack.c.h.b16 %v3466
    %v4242 = vunpack.c.l.b16 %v3467
    %v4243 = vunpack.c.h.b16 %v3467
    %v4244 = vunpack.c.l.b16 %v3468
    %v4245 = vunpack.c.h.b16 %v3468
    %v4246 = vunpack.c.l.b16 %v3469
    %v4247 = vunpack.c.h.b16 %v3469
    %v4248 = vunpack.c.l.b16 %v3470
    %v4249 = vunpack.c.h.b16 %v3470
    %v4250 = vunpack.c.l.b16 %v3471
    %v4251 = vunpack.c.h.b16 %v3471
    %v4252 = vunpack.c.l.b16 %v3472
    %v4253 = vunpack.c.h.b16 %v3472
    %v4254 = vunpack.c.l.b16 %v3473
    %v4255 = vunpack.c.h.b16 %v3473
    %v4256 = vunpack.c.l.b16 %v3474
    %v4257 = vunpack.c.h.b16 %v3474
    %v4258 = vunpack.c.l.b16 %v3475
    %v4259 = vunpack.c.h.b16 %v3475
    %v4260 = vunpack.c.l.b16 %v3476
    %v4261 = vunpack.c.h.b16 %v3476
    %v4262 = vunpack.c.l.b16 %v3477
    %v4263 = vunpack.c.h.b16 %v3477
    %v4264 = vunpack.c.l.b16 %v3478
    %v4265 = vunpack.c.h.b16 %v3478
    %v4266 = vunpack.c.l.b16 %v3479
    %v4267 = vunpack.c.h.b16 %v3479
    %v4268 = vunpack.c.l.b16 %v3480
    %v4269 = vunpack.c.h.b16 %v3480
    %v4270 = vunpack.c.l.b16 %v3481
    %v4271 = vunpack.c.h.b16 %v3481
    %v4272 = vpack.c.b16 %v3764, %v3760
    %v4273 = vpack.c.b16 %v3765, %v3761
    %v4274 = vpack.c.b16 %v3766, %v3762
    %v4275 = vpack.c.b16 %v3767, %v3763
    %v4276 = vpack.c.b16 %v3772, %v3768
    %v4277 = vpack.c.b16 %v3773, %v3769
    %v4278 = vpack.c.b16 %v3774, %v3770
    %v4279 = vpack.c.b16 %v3775, %v3771
    %v4280 = vpack.c.b16 %v3780, %v3776
    %v4281 = vpack.c.b16 %v3781, %v3777
    %v4282 = vpack.c.b16 %v3782, %v3778
    %v4283 = vpack.c.b16 %v3783, %v3779
    %v4284 = vpack.c.b16 %v3788, %v3784
    %v4285 = vpack.c.b16 %v3789, %v3785
    %v4286 = vpack.c.b16 %v3790, %v3786
    %v4287 = vpack.c.b16 %v3791, %v3787
    %v4288 = vpack.c.b16 %v3796, %v3792
    %v4289 = vpack.c.b16 %v3797, %v3793
    %v4290 = vpack.c.b16 %v3798, %v3794
    %v4291 = vpack.c.b16 %v3799, %v3795
    %v4292 = vpack.c.b16 %v3804, %v3800
    %v4293 = vpack.c.b16 %v3805, %v3801
    %v4294 = vpack.c.b16 %v3806, %v3802
    %v4295 = vpack.c.b16 %v3807, %v3803
    %v4296 = vpack.c.b16 %v3812, %v3808
    %v4297 = vpack.c.b16 %v3813, %v3809
    %v4298 = vpack.c.b16 %v3814, %v3810
    %v4299 = vpack.c.b16 %v3815, %v3811
    %v4300 = vpack.c.b16 %v3820, %v3816
    %v4301 = vpack.c.b16 %v3821, %v3817
    %v4302 = vpack.c.b16 %v3822, %v3818
    %v4303 = vpack.c.b16 %v3823, %v3819
    %v4304 = vpack.c.b16 %v3828, %v3824
    %v4305 = vpack.c.b16 %v3829, %v3825
    %v4306 = vpack.c.b16 %v3830, %v3826
    %v4307 = vpack.c.b16 %v3831, %v3827
    %v4308 = vpack.c.b16 %v3836, %v3832
    %v4309 = vpack.c.b16 %v3837, %v3833
    %v4310 = vpack.c.b16 %v3838, %v3834
    %v4311 = vpack.c.b16 %v3839, %v3835
    %v4312 = vpack.c.b16 %v3844, %v3840
    %v4313 = vpack.c.b16 %v3845, %v3841
    %v4314 = vpack.c.b16 %v3846, %v3842
    %v4315 = vpack.c.b16 %v3847, %v3843
    %v4316 = vpack.c.b16 %v3852, %v3848
    %v4317 = vpack.c.b16 %v3853, %v3849
    %v4318 = vpack.c.b16 %v3854, %v3850
    %v4319 = vpack.c.b16 %v3855, %v3851
    %v4320 = vpack.c.b16 %v3860, %v3856
    %v4321 = vpack.c.b16 %v3861, %v3857
    %v4322 = vpack.c.b16 %v3862, %v3858
    %v4323 = vpack.c.b16 %v3863, %v3859
    %v4324 = vpack.c.b16 %v3868, %v3864
    %v4325 = vpack.c.b16 %v3869, %v3865
    %v4326 = vpack.c.b16 %v3870, %v3866
    %v4327 = vpack.c.b16 %v3871, %v3867
    %v4328 = vpack.c.b16 %v3876, %v3872
    %v4329 = vpack.c.b16 %v3877, %v3873
    %v4330 = vpack.c.b16 %v3878, %v3874
    %v4331 = vpack.c.b16 %v3879, %v3875
    %v4332 = vpack.c.b16 %v3884, %v3880
    %v4333 = vpack.c.b16 %v3885, %v3881
    %v4334 = vpack.c.b16 %v3886, %v3882
    %v4335 = vpack.c.b16 %v3887, %v3883
    %v4336 = vpack.c.b16 %v3892, %v3888
    %v4337 = vpack.c.b16 %v3893, %v3889
    %v4338 = vpack.c.b16 %v3894, %v3890
    %v4339 = vpack.c.b16 %v3895, %v3891
    %v4340 = vpack.c.b16 %v3900, %v3896
    %v4341 = vpack.c.b16 %v3901, %v3897
    %v4342 = vpack.c.b16 %v3902, %v3898
    %v4343 = vpack.c.b16 %v3903, %v3899
    %v4344 = vpack.c.b16 %v3908, %v3904
    %v4345 = vpack.c.b16 %v3909, %v3905
    %v4346 = vpack.c.b16 %v3910, %v3906
    %v4347 = vpack.c.b16 %v3911, %v3907
    %v4348 = vpack.c.b16 %v3916, %v3912
    %v4349 = vpack.c.b16 %v3917, %v3913
    %v4350 = vpack.c.b16 %v3918, %v3914
    %v4351 = vpack.c.b16 %v3919, %v3915
    %v4352 = vpack.c.b16 %v3924, %v3920
    %v4353 = vpack.c.b16 %v3925, %v3921
    %v4354 = vpack.c.b16 %v3926, %v3922
    %v4355 = vpack.c.b16 %v3927, %v3923
    %v4356 = vpack.c.b16 %v3932, %v3928
    %v4357 = vpack.c.b16 %v3933, %v3929
    %v4358 = vpack.c.b16 %v3934, %v3930
    %v4359 = vpack.c.b16 %v3935, %v3931
    %v4360 = vpack.c.b16 %v3940, %v3936
    %v4361 = vpack.c.b16 %v3941, %v3937
    %v4362 = vpack.c.b16 %v3942, %v3938
    %v4363 = vpack.c.b16 %v3943, %v3939
    %v4364 = vpack.c.b16 %v3948, %v3944
    %v4365 = vpack.c.b16 %v3949, %v3945
    %v4366 = vpack.c.b16 %v3950, %v3946
    %v4367 = vpack.c.b16 %v3951, %v3947
    %v4368 = vpack.c.b16 %v3956, %v3952
    %v4369 = vpack.c.b16 %v3957, %v3953
    %v4370 = vpack.c.b16 %v3958, %v3954
    %v4371 = vpack.c.b16 %v3959, %v3955
    %v4372 = vpack.c.b16 %v3964, %v3960
    %v4373 = vpack.c.b16 %v3965, %v3961
    %v4374 = vpack.c.b16 %v3966, %v3962
    %v4375 = vpack.c.b16 %v3967, %v3963
    %v4376 = vpack.c.b16 %v3972, %v3968
    %v4377 = vpack.c.b16 %v3973, %v3969
    %v4378 = vpack.c.b16 %v3974, %v3970
    %v4379 = vpack.c.b16 %v3975, %v3971
    %v4380 = vpack.c.b16 %v3980, %v3976
    %v4381 = vpack.c.b16 %v3981, %v3977
    %v4382 = vpack.c.b16 %v3982, %v3978
    %v4383 = vpack.c.b16 %v3983, %v3979
    %v4384 = vpack.c.b16 %v3988, %v3984
    %v4385 = vpack.c.b16 %v3989, %v3985
    %v4386 = vpack.c.b16 %v3990, %v3986
    %v4387 = vpack.c.b16 %v3991, %v3987
    %v4388 = vpack.c.b16 %v3996, %v3992
    %v4389 = vpack.c.b16 %v3997, %v3993
    %v4390 = vpack.c.b16 %v3998, %v3994
    %v4391 = vpack.c.b16 %v3999, %v3995
    %v4392 = vpack.c.b16 %v4004, %v4000
    %v4393 = vpack.c.b16 %v4005, %v4001
    %v4394 = vpack.c.b16 %v4006, %v4002
    %v4395 = vpack.c.b16 %v4007, %v4003
    %v4396 = vpack.c.b16 %v4012, %v4008
    %v4397 = vpack.c.b16 %v4013, %v4009
    %v4398 = vpack.c.b16 %v4014, %v4010
    %v4399 = vpack.c.b16 %v4015, %v4011
    %v4400 = vpack.c.b16 %v4020, %v4016
    %v4401 = vpack.c.b16 %v4021, %v4017
    %v4402 = vpack.c.b16 %v4022, %v4018
    %v4403 = vpack.c.b16 %v4023, %v4019
    %v4404 = vpack.c.b16 %v4028, %v4024
    %v4405 = vpack.c.b16 %v4029, %v4025
    %v4406 = vpack.c.b16 %v4030, %v4026
    %v4407 = vpack.c.b16 %v4031, %v4027
    %v4408 = vpack.c.b16 %v4036, %v4032
    %v4409 = vpack.c.b16 %v4037, %v4033
    %v4410 = vpack.c.b16 %v4038, %v4034
    %v4411 = vpack.c.b16 %v4039, %v4035
    %v4412 = vpack.c.b16 %v4044, %v4040
    %v4413 = vpack.c.b16 %v4045, %v4041
    %v4414 = vpack.c.b16 %v4046, %v4042
    %v4415 = vpack.c.b16 %v4047, %v4043
    %v4416 = vpack.c.b16 %v4052, %v4048
    %v4417 = vpack.c.b16 %v4053, %v4049
    %v4418 = vpack.c.b16 %v4054, %v4050
    %v4419 = vpack.c.b16 %v4055, %v4051
    %v4420 = vpack.c.b16 %v4060, %v4056
    %v4421 = vpack.c.b16 %v4061, %v4057
    %v4422 = vpack.c.b16 %v4062, %v4058
    %v4423 = vpack.c.b16 %v4063, %v4059
    %v4424 = vpack.c.b16 %v4068, %v4064
    %v4425 = vpack.c.b16 %v4069, %v4065
    %v4426 = vpack.c.b16 %v4070, %v4066
    %v4427 = vpack.c.b16 %v4071, %v4067
    %v4428 = vpack.c.b16 %v4076, %v4072
    %v4429 = vpack.c.b16 %v4077, %v4073
    %v4430 = vpack.c.b16 %v4078, %v4074
    %v4431 = vpack.c.b16 %v4079, %v4075
    %v4432 = vpack.c.b16 %v4084, %v4080
    %v4433 = vpack.c.b16 %v4085, %v4081
    %v4434 = vpack.c.b16 %v4086, %v4082
    %v4435 = vpack.c.b16 %v4087, %v4083
    %v4436 = vpack.c.b16 %v4092, %v4088
    %v4437 = vpack.c.b16 %v4093, %v4089
    %v4438 = vpack.c.b16 %v4094, %v4090
    %v4439 = vpack.c.b16 %v4095, %v4091
    %v4440 = vpack.c.b16 %v4100, %v4096
    %v4441 = vpack.c.b16 %v4101, %v4097
    %v4442 = vpack.c.b16 %v4102, %v4098
    %v4443 = vpack.c.b16 %v4103, %v4099
    %v4444 = vpack.c.b16 %v4108, %v4104
    %v4445 = vpack.c.b16 %v4109, %v4105
    %v4446 = vpack.c.b16 %v4110, %v4106
    %v4447 = vpack.c.b16 %v4111, %v4107
    %v4448 = vpack.c.b16 %v4116, %v4112
    %v4449 = vpack.c.b16 %v4117, %v4113
    %v4450 = vpack.c.b16 %v4118, %v4114
    %v4451 = vpack.c.b16 %v4119, %v4115
    %v4452 = vpack.c.b16 %v4124, %v4120
    %v4453 = vpack.c.b16 %v4125, %v4121
    %v4454 = vpack.c.b16 %v4126, %v4122
    %v4455 = vpack.c.b16 %v4127, %v4123
    %v4456 = vpack.c.b16 %v4132, %v4128
    %v4457 = vpack.c.b16 %v4133, %v4129
    %v4458 = vpack.c.b16 %v4134, %v4130
    %v4459 = vpack.c.b16 %v4135, %v4131
    %v4460 = vpack.c.b16 %v4140, %v4136
    %v4461 = vpack.c.b16 %v4141, %v4137
    %v4462 = vpack.c.b16 %v4142, %v4138
    %v4463 = vpack.c.b16 %v4143, %v4139
    %v4464 = vpack.c.b16 %v4148, %v4144
    %v4465 = vpack.c.b16 %v4149, %v4145
    %v4466 = vpack.c.b16 %v4150, %v4146
    %v4467 = vpack.c.b16 %v4151, %v4147
    %v4468 = vpack.c.b16 %v4156, %v4152
    %v4469 = vpack.c.b16 %v4157, %v4153
    %v4470 = vpack.c.b16 %v4158, %v4154
    %v4471 = vpack.c.b16 %v4159, %v4155
    %v4472 = vpack.c.b16 %v4164, %v4160
    %v4473 = vpack.c.b16 %v4165, %v4161
    %v4474 = vpack.c.b16 %v4166, %v4162
    %v4475 = vpack.c.b16 %v4167, %v4163
    %v4476 = vpack.c.b16 %v4172, %v4168
    %v4477 = vpack.c.b16 %v4173, %v4169
    %v4478 = vpack.c.b16 %v4174, %v4170
    %v4479 = vpack.c.b16 %v4175, %v4171
    %v4480 = vpack.c.b16 %v4180, %v4176
    %v4481 = vpack.c.b16 %v4181, %v4177
    %v4482 = vpack.c.b16 %v4182, %v4178
    %v4483 = vpack.c.b16 %v4183, %v4179
    %v4484 = vpack.c.b16 %v4188, %v4184
    %v4485 = vpack.c.b16 %v4189, %v4185
    %v4486 = vpack.c.b16 %v4190, %v4186
    %v4487 = vpack.c.b16 %v4191, %v4187
    %v4488 = vpack.c.b16 %v4196, %v4192
    %v4489 = vpack.c.b16 %v4197, %v4193
    %v4490 = vpack.c.b16 %v4198, %v4194
    %v4491 = vpack.c.b16 %v4199, %v4195
    %v4492 = vpack.c.b16 %v4204, %v4200
    %v4493 = vpack.c.b16 %v4205, %v4201
    %v4494 = vpack.c.b16 %v4206, %v4202
    %v4495 = vpack.c.b16 %v4207, %v4203
    %v4496 = vpack.c.b16 %v4212, %v4208
    %v4497 = vpack.c.b16 %v4213, %v4209
    %v4498 = vpack.c.b16 %v4214, %v4210
    %v4499 = vpack.c.b16 %v4215, %v4211
    %v4500 = vpack.c.b16 %v4220, %v4216
    %v4501 = vpack.c.b16 %v4221, %v4217
    %v4502 = vpack.c.b16 %v4222, %v4218
    %v4503 = vpack.c.b16 %v4223, %v4219
    %v4504 = vpack.c.b16 %v4228, %v4224
    %v4505 = vpack.c.b16 %v4229, %v4225
    %v4506 = vpack.c.b16 %v4230, %v4226
    %v4507 = vpack.c.b16 %v4231, %v4227
    %v4508 = vpack.c.b16 %v4236, %v4232
    %v4509 = vpack.c.b16 %v4237, %v4233
    %v4510 = vpack.c.b16 %v4238, %v4234
    %v4511 = vpack.c.b16 %v4239, %v4235
    %v4512 = vpack.c.b16 %v4244, %v4240
    %v4513 = vpack.c.b16 %v4245, %v4241
    %v4514 = vpack.c.b16 %v4246, %v4242
    %v4515 = vpack.c.b16 %v4247, %v4243
    %v4516 = vpack.c.b16 %v4252, %v4248
    %v4517 = vpack.c.b16 %v4253, %v4249
    %v4518 = vpack.c.b16 %v4254, %v4250
    %v4519 = vpack.c.b16 %v4255, %v4251
    %v4520 = vpack.c.b16 %v4260, %v4256
    %v4521 = vpack.c.b16 %v4261, %v4257
    %v4522 = vpack.c.b16 %v4262, %v4258
    %v4523 = vpack.c.b16 %v4263, %v4259
    %v4524 = vpack.c.b16 %v4268, %v4264
    %v4525 = vpack.c.b16 %v4269, %v4265
    %v4526 = vpack.c.b16 %v4270, %v4266
    %v4527 = vpack.c.b16 %v4271, %v4267
    %4784 = vmatprep.subr.bf16.mxu0 %v4273
    %4785 = vmatpush1.bf16.msra.mxu0 %v4272
    %4786 = vmatprep.subr.bf16.mxu0 %v4277
    %4787 = vmatpush1.bf16.msra.mxu0 %v4276
    %4788 = vmatprep.subr.bf16.mxu0 %v4281
    %4789 = vmatpush1.bf16.msra.mxu0 %v4280
    %4790 = vmatprep.subr.bf16.mxu0 %v4285
    %4791 = vmatpush1.bf16.msra.mxu0 %v4284
    %4792 = vmatprep.subr.bf16.mxu0 %v4289
    %4793 = vmatpush1.bf16.msra.mxu0 %v4288
    %4794 = vmatprep.subr.bf16.mxu0 %v4293
    %4795 = vmatpush1.bf16.msra.mxu0 %v4292
    %4796 = vmatprep.subr.bf16.mxu0 %v4297
    %4797 = vmatpush1.bf16.msra.mxu0 %v4296
    %4798 = vmatprep.subr.bf16.mxu0 %v4301
    %4799 = vmatpush1.bf16.msra.mxu0 %v4300
    %4800 = vmatprep.subr.bf16.mxu0 %v4305
    %4801 = vmatpush1.bf16.msra.mxu0 %v4304
    %4802 = vmatprep.subr.bf16.mxu0 %v4309
    %4803 = vmatpush1.bf16.msra.mxu0 %v4308
    %4804 = vmatprep.subr.bf16.mxu0 %v4313
    %4805 = vmatpush1.bf16.msra.mxu0 %v4312
    %4806 = vmatprep.subr.bf16.mxu0 %v4317
    %4807 = vmatpush1.bf16.msra.mxu0 %v4316
    %4808 = vmatprep.subr.bf16.mxu0 %v4321
    %4809 = vmatpush1.bf16.msra.mxu0 %v4320
    %4810 = vmatprep.subr.bf16.mxu0 %v4325
    %4811 = vmatpush1.bf16.msra.mxu0 %v4324
    %4812 = vmatprep.subr.bf16.mxu0 %v4329
    %4813 = vmatpush1.bf16.msra.mxu0 %v4328
    %4814 = vmatprep.subr.bf16.mxu0 %v4333
    %4815 = vmatpush1.bf16.msra.mxu0 %v4332
    %4816 = vmatprep.mubr.bf16.mxu0 %v3219
    %4817 = vmatmul.mubr.bf16.gmra.mrb[0].mxu0 %v3218
    %v4818 = vpop.f32.mrb[0].mxu0
    %v4819 = vadd.f32 %v3487, %v4818
    %v4820 = vpop.f32.mrb[0].mxu0
    %v4821 = vadd.f32 %v3491, %v4820
    %v4822 = vpop.f32.mrb[0].mxu0
    %v4823 = vpop.f32.mrb[0].mxu0
    %4824 = vdwg.mxu0
    %4825 = vmatprep.subr.bf16.mxu0 %v4337
    %4826 = vmatpush1.bf16.msra.mxu0 %v4336
    %4827 = vmatprep.subr.bf16.mxu0 %v4341
    %4828 = vmatpush1.bf16.msra.mxu0 %v4340
    %4829 = vmatprep.subr.bf16.mxu0 %v4345
    %4830 = vmatpush1.bf16.msra.mxu0 %v4344
    %4831 = vmatprep.subr.bf16.mxu0 %v4349
    %4832 = vmatpush1.bf16.msra.mxu0 %v4348
    %4833 = vmatprep.subr.bf16.mxu0 %v4353
    %4834 = vmatpush1.bf16.msra.mxu0 %v4352
    %4835 = vmatprep.subr.bf16.mxu0 %v4357
    %4836 = vmatpush1.bf16.msra.mxu0 %v4356
    %4837 = vmatprep.subr.bf16.mxu0 %v4361
    %4838 = vmatpush1.bf16.msra.mxu0 %v4360
    %4839 = vmatprep.subr.bf16.mxu0 %v4365
    %4840 = vmatpush1.bf16.msra.mxu0 %v4364
    %4841 = vmatprep.subr.bf16.mxu0 %v4369
    %4842 = vmatpush1.bf16.msra.mxu0 %v4368
    %4843 = vmatprep.subr.bf16.mxu0 %v4373
    %4844 = vmatpush1.bf16.msra.mxu0 %v4372
    %4845 = vmatprep.subr.bf16.mxu0 %v4377
    %4846 = vmatpush1.bf16.msra.mxu0 %v4376
    %4847 = vmatprep.subr.bf16.mxu0 %v4381
    %4848 = vmatpush1.bf16.msra.mxu0 %v4380
    %4849 = vmatprep.subr.bf16.mxu0 %v4385
    %4850 = vmatpush1.bf16.msra.mxu0 %v4384
    %4851 = vmatprep.subr.bf16.mxu0 %v4389
    %4852 = vmatpush1.bf16.msra.mxu0 %v4388
    %4853 = vmatprep.subr.bf16.mxu0 %v4393
    %4854 = vmatpush1.bf16.msra.mxu0 %v4392
    %4855 = vmatprep.subr.bf16.mxu0 %v4397
    %4856 = vmatpush1.bf16.msra.mxu0 %v4396
    %4857 = vmatprep.mubr.bf16.mxu0 %v3221
    %4858 = vmatmul.mubr.bf16.gmra.mrb[0].mxu0 %v3220
    %v4859 = vpop.f32.mrb[0].mxu0
    %v4860 = vadd.f32 %v4819, %v4859
    %v4861 = vpop.f32.mrb[0].mxu0
    %v4862 = vadd.f32 %v4821, %v4861
    %v4863 = vpop.f32.mrb[0].mxu0
    %v4864 = vpop.f32.mrb[0].mxu0
    %4865 = vdwg.mxu0
    %4866 = vmatprep.subr.bf16.mxu0 %v4401
    %4867 = vmatpush1.bf16.msra.mxu0 %v4400
    %4868 = vmatprep.subr.bf16.mxu0 %v4405
    %4869 = vmatpush1.bf16.msra.mxu0 %v4404
    %4870 = vmatprep.subr.bf16.mxu0 %v4409
    %4871 = vmatpush1.bf16.msra.mxu0 %v4408
    %4872 = vmatprep.subr.bf16.mxu0 %v4413
    %4873 = vmatpush1.bf16.msra.mxu0 %v4412
    %4874 = vmatprep.subr.bf16.mxu0 %v4417
    %4875 = vmatpush1.bf16.msra.mxu0 %v4416
    %4876 = vmatprep.subr.bf16.mxu0 %v4421
    %4877 = vmatpush1.bf16.msra.mxu0 %v4420
    %4878 = vmatprep.subr.bf16.mxu0 %v4425
    %4879 = vmatpush1.bf16.msra.mxu0 %v4424
    %4880 = vmatprep.subr.bf16.mxu0 %v4429
    %4881 = vmatpush1.bf16.msra.mxu0 %v4428
    %4882 = vmatprep.subr.bf16.mxu0 %v4433
    %4883 = vmatpush1.bf16.msra.mxu0 %v4432
    %4884 = vmatprep.subr.bf16.mxu0 %v4437
    %4885 = vmatpush1.bf16.msra.mxu0 %v4436
    %4886 = vmatprep.subr.bf16.mxu0 %v4441
    %4887 = vmatpush1.bf16.msra.mxu0 %v4440
    %4888 = vmatprep.subr.bf16.mxu0 %v4445
    %4889 = vmatpush1.bf16.msra.mxu0 %v4444
    %4890 = vmatprep.subr.bf16.mxu0 %v4449
    %4891 = vmatpush1.bf16.msra.mxu0 %v4448
    %4892 = vmatprep.subr.bf16.mxu0 %v4453
    %4893 = vmatpush1.bf16.msra.mxu0 %v4452
    %4894 = vmatprep.subr.bf16.mxu0 %v4457
    %4895 = vmatpush1.bf16.msra.mxu0 %v4456
    %4896 = vmatprep.subr.bf16.mxu0 %v4461
    %4897 = vmatpush1.bf16.msra.mxu0 %v4460
    %4898 = vmatprep.mubr.bf16.mxu0 %v3223
    %4899 = vmatmul.mubr.bf16.gmra.mrb[0].mxu0 %v3222
    %v4900 = vpop.f32.mrb[0].mxu0
    %v4901 = vadd.f32 %v4860, %v4900
    %v4902 = vpop.f32.mrb[0].mxu0
    %v4903 = vadd.f32 %v4862, %v4902
    %v4904 = vpop.f32.mrb[0].mxu0
    %v4905 = vpop.f32.mrb[0].mxu0
    %4906 = vdwg.mxu0
    %4907 = vmatprep.subr.bf16.mxu0 %v4465
    %4908 = vmatpush1.bf16.msra.mxu0 %v4464
    %4909 = vmatprep.subr.bf16.mxu0 %v4469
    %4910 = vmatpush1.bf16.msra.mxu0 %v4468
    %4911 = vmatprep.subr.bf16.mxu0 %v4473
    %4912 = vmatpush1.bf16.msra.mxu0 %v4472
    %4913 = vmatprep.subr.bf16.mxu0 %v4477
    %4914 = vmatpush1.bf16.msra.mxu0 %v4476
    %4915 = vmatprep.subr.bf16.mxu0 %v4481
    %4916 = vmatpush1.bf16.msra.mxu0 %v4480
    %4917 = vmatprep.subr.bf16.mxu0 %v4485
    %4918 = vmatpush1.bf16.msra.mxu0 %v4484
    %4919 = vmatprep.subr.bf16.mxu0 %v4489
    %4920 = vmatpush1.bf16.msra.mxu0 %v4488
    %4921 = vmatprep.subr.bf16.mxu0 %v4493
    %4922 = vmatpush1.bf16.msra.mxu0 %v4492
    %4923 = vmatprep.subr.bf16.mxu0 %v4497
    %4924 = vmatpush1.bf16.msra.mxu0 %v4496
    %4925 = vmatprep.subr.bf16.mxu0 %v4501
    %4926 = vmatpush1.bf16.msra.mxu0 %v4500
    %4927 = vmatprep.subr.bf16.mxu0 %v4505
    %4928 = vmatpush1.bf16.msra.mxu0 %v4504
    %4929 = vmatprep.subr.bf16.mxu0 %v4509
    %4930 = vmatpush1.bf16.msra.mxu0 %v4508
    %4931 = vmatprep.subr.bf16.mxu0 %v4513
    %4932 = vmatpush1.bf16.msra.mxu0 %v4512
    %4933 = vmatprep.subr.bf16.mxu0 %v4517
    %4934 = vmatpush1.bf16.msra.mxu0 %v4516
    %4935 = vmatprep.subr.bf16.mxu0 %v4521
    %4936 = vmatpush1.bf16.msra.mxu0 %v4520
    %4937 = vmatprep.subr.bf16.mxu0 %v4525
    %4938 = vmatpush1.bf16.msra.mxu0 %v4524
    %4939 = vmatprep.mubr.bf16.mxu0 %v3225
    %4940 = vmatmul.mubr.bf16.gmra.mrb[0].mxu0 %v3224
    %v4941 = vpop.f32.mrb[0].mxu0
    %v4942 = vadd.f32 %v4901, %v4941
    %v4943 = vpop.f32.mrb[0].mxu0
    %v4944 = vadd.f32 %v4903, %v4943
    %v4945 = vpop.f32.mrb[0].mxu0
    %v4946 = vpop.f32.mrb[0].mxu0
    %4947 = vdwg.mxu0
    %4948 = vmatprep.subr.bf16.mxu0 %v4275
    %4949 = vmatpush1.bf16.msra.mxu0 %v4274
    %4950 = vmatprep.subr.bf16.mxu0 %v4279
    %4951 = vmatpush1.bf16.msra.mxu0 %v4278
    %4952 = vmatprep.subr.bf16.mxu0 %v4283
    %4953 = vmatpush1.bf16.msra.mxu0 %v4282
    %4954 = vmatprep.subr.bf16.mxu0 %v4287
    %4955 = vmatpush1.bf16.msra.mxu0 %v4286
    %4956 = vmatprep.subr.bf16.mxu0 %v4291
    %4957 = vmatpush1.bf16.msra.mxu0 %v4290
    %4958 = vmatprep.subr.bf16.mxu0 %v4295
    %4959 = vmatpush1.bf16.msra.mxu0 %v4294
    %4960 = vmatprep.subr.bf16.mxu0 %v4299
    %4961 = vmatpush1.bf16.msra.mxu0 %v4298
    %4962 = vmatprep.subr.bf16.mxu0 %v4303
    %4963 = vmatpush1.bf16.msra.mxu0 %v4302
    %4964 = vmatprep.subr.bf16.mxu0 %v4307
    %4965 = vmatpush1.bf16.msra.mxu0 %v4306
    %4966 = vmatprep.subr.bf16.mxu0 %v4311
    %4967 = vmatpush1.bf16.msra.mxu0 %v4310
    %4968 = vmatprep.subr.bf16.mxu0 %v4315
    %4969 = vmatpush1.bf16.msra.mxu0 %v4314
    %4970 = vmatprep.subr.bf16.mxu0 %v4319
    %4971 = vmatpush1.bf16.msra.mxu0 %v4318
    %4972 = vmatprep.subr.bf16.mxu0 %v4323
    %4973 = vmatpush1.bf16.msra.mxu0 %v4322
    %4974 = vmatprep.subr.bf16.mxu0 %v4327
    %4975 = vmatpush1.bf16.msra.mxu0 %v4326
    %4976 = vmatprep.subr.bf16.mxu0 %v4331
    %4977 = vmatpush1.bf16.msra.mxu0 %v4330
    %4978 = vmatprep.subr.bf16.mxu0 %v4335
    %4979 = vmatpush1.bf16.msra.mxu0 %v4334
    %4980 = vmatprep.mubr.bf16.mxu0 %v3219
    %4981 = vmatmul.mubr.bf16.gmra.mrb[0].mxu0 %v3218
    %v4982 = vpop.f32.mrb[0].mxu0
    %v4983 = vadd.f32 %v3495, %v4982
    %v4984 = vpop.f32.mrb[0].mxu0
    %v4985 = vadd.f32 %v3499, %v4984
    %v4986 = vpop.f32.mrb[0].mxu0
    %v4987 = vpop.f32.mrb[0].mxu0
    %4988 = vdwg.mxu0
    %4989 = vmatprep.subr.bf16.mxu0 %v4339
    %4990 = vmatpush1.bf16.msra.mxu0 %v4338
    %4991 = vmatprep.subr.bf16.mxu0 %v4343
    %4992 = vmatpush1.bf16.msra.mxu0 %v4342
    %4993 = vmatprep.subr.bf16.mxu0 %v4347
    %4994 = vmatpush1.bf16.msra.mxu0 %v4346
    %4995 = vmatprep.subr.bf16.mxu0 %v4351
    %4996 = vmatpush1.bf16.msra.mxu0 %v4350
    %4997 = vmatprep.subr.bf16.mxu0 %v4355
    %4998 = vmatpush1.bf16.msra.mxu0 %v4354
    %4999 = vmatprep.subr.bf16.mxu0 %v4359
    %5000 = vmatpush1.bf16.msra.mxu0 %v4358
    %5001 = vmatprep.subr.bf16.mxu0 %v4363
    %5002 = vmatpush1.bf16.msra.mxu0 %v4362
    %5003 = vmatprep.subr.bf16.mxu0 %v4367
    %5004 = vmatpush1.bf16.msra.mxu0 %v4366
    %5005 = vmatprep.subr.bf16.mxu0 %v4371
    %5006 = vmatpush1.bf16.msra.mxu0 %v4370
    %5007 = vmatprep.subr.bf16.mxu0 %v4375
    %5008 = vmatpush1.bf16.msra.mxu0 %v4374
    %5009 = vmatprep.subr.bf16.mxu0 %v4379
    %5010 = vmatpush1.bf16.msra.mxu0 %v4378
    %5011 = vmatprep.subr.bf16.mxu0 %v4383
    %5012 = vmatpush1.bf16.msra.mxu0 %v4382
    %5013 = vmatprep.subr.bf16.mxu0 %v4387
    %5014 = vmatpush1.bf16.msra.mxu0 %v4386
    %5015 = vmatprep.subr.bf16.mxu0 %v4391
    %5016 = vmatpush1.bf16.msra.mxu0 %v4390
    %5017 = vmatprep.subr.bf16.mxu0 %v4395
    %5018 = vmatpush1.bf16.msra.mxu0 %v4394
    %5019 = vmatprep.subr.bf16.mxu0 %v4399
    %5020 = vmatpush1.bf16.msra.mxu0 %v4398
    %5021 = vmatprep.mubr.bf16.mxu0 %v3221
    %5022 = vmatmul.mubr.bf16.gmra.mrb[0].mxu0 %v3220
    %v5023 = vpop.f32.mrb[0].mxu0
    %v5024 = vadd.f32 %v4983, %v5023
    %v5025 = vpop.f32.mrb[0].mxu0
    %v5026 = vadd.f32 %v4985, %v5025
    %v5027 = vpop.f32.mrb[0].mxu0
    %v5028 = vpop.f32.mrb[0].mxu0
    %5029 = vdwg.mxu0
    %5030 = vmatprep.subr.bf16.mxu0 %v4403
    %5031 = vmatpush1.bf16.msra.mxu0 %v4402
    %5032 = vmatprep.subr.bf16.mxu0 %v4407
    %5033 = vmatpush1.bf16.msra.mxu0 %v4406
    %5034 = vmatprep.subr.bf16.mxu0 %v4411
    %5035 = vmatpush1.bf16.msra.mxu0 %v4410
    %5036 = vmatprep.subr.bf16.mxu0 %v4415
    %5037 = vmatpush1.bf16.msra.mxu0 %v4414
    %5038 = vmatprep.subr.bf16.mxu0 %v4419
    %5039 = vmatpush1.bf16.msra.mxu0 %v4418
    %5040 = vmatprep.subr.bf16.mxu0 %v4423
    %5041 = vmatpush1.bf16.msra.mxu0 %v4422
    %5042 = vmatprep.subr.bf16.mxu0 %v4427
    %5043 = vmatpush1.bf16.msra.mxu0 %v4426
    %5044 = vmatprep.subr.bf16.mxu0 %v4431
    %5045 = vmatpush1.bf16.msra.mxu0 %v4430
    %5046 = vmatprep.subr.bf16.mxu0 %v4435
    %5047 = vmatpush1.bf16.msra.mxu0 %v4434
    %5048 = vmatprep.subr.bf16.mxu0 %v4439
    %5049 = vmatpush1.bf16.msra.mxu0 %v4438
    %5050 = vmatprep.subr.bf16.mxu0 %v4443
    %5051 = vmatpush1.bf16.msra.mxu0 %v4442
    %5052 = vmatprep.subr.bf16.mxu0 %v4447
    %5053 = vmatpush1.bf16.msra.mxu0 %v4446
    %5054 = vmatprep.subr.bf16.mxu0 %v4451
    %5055 = vmatpush1.bf16.msra.mxu0 %v4450
    %5056 = vmatprep.subr.bf16.mxu0 %v4455
    %5057 = vmatpush1.bf16.msra.mxu0 %v4454
    %5058 = vmatprep.subr.bf16.mxu0 %v4459
    %5059 = vmatpush1.bf16.msra.mxu0 %v4458
    %5060 = vmatprep.subr.bf16.mxu0 %v4463
    %5061 = vmatpush1.bf16.msra.mxu0 %v4462
    %5062 = vmatprep.mubr.bf16.mxu0 %v3223
    %5063 = vmatmul.mubr.bf16.gmra.mrb[0].mxu0 %v3222
    %v5064 = vpop.f32.mrb[0].mxu0
    %v5065 = vadd.f32 %v5024, %v5064
    %v5066 = vpop.f32.mrb[0].mxu0
    %v5067 = vadd.f32 %v5026, %v5066
    %v5068 = vpop.f32.mrb[0].mxu0
    %v5069 = vpop.f32.mrb[0].mxu0
    %5070 = vdwg.mxu0
    %5071 = vmatprep.subr.bf16.mxu0 %v4467
    %5072 = vmatpush1.bf16.msra.mxu0 %v4466
    %5073 = vmatprep.subr.bf16.mxu0 %v4471
    %5074 = vmatpush1.bf16.msra.mxu0 %v4470
    %5075 = vmatprep.subr.bf16.mxu0 %v4475
    %5076 = vmatpush1.bf16.msra.mxu0 %v4474
    %5077 = vmatprep.subr.bf16.mxu0 %v4479
    %5078 = vmatpush1.bf16.msra.mxu0 %v4478
    %5079 = vmatprep.subr.bf16.mxu0 %v4483
    %5080 = vmatpush1.bf16.msra.mxu0 %v4482
    %5081 = vmatprep.subr.bf16.mxu0 %v4487
    %5082 = vmatpush1.bf16.msra.mxu0 %v4486
    %5083 = vmatprep.subr.bf16.mxu0 %v4491
    %5084 = vmatpush1.bf16.msra.mxu0 %v4490
    %5085 = vmatprep.subr.bf16.mxu0 %v4495
    %5086 = vmatpush1.bf16.msra.mxu0 %v4494
    %5087 = vmatprep.subr.bf16.mxu0 %v4499
    %5088 = vmatpush1.bf16.msra.mxu0 %v4498
    %5089 = vmatprep.subr.bf16.mxu0 %v4503
    %5090 = vmatpush1.bf16.msra.mxu0 %v4502
    %5091 = vmatprep.subr.bf16.mxu0 %v4507
    %5092 = vmatpush1.bf16.msra.mxu0 %v4506
    %5093 = vmatprep.subr.bf16.mxu0 %v4511
    %5094 = vmatpush1.bf16.msra.mxu0 %v4510
    %5095 = vmatprep.subr.bf16.mxu0 %v4515
    %5096 = vmatpush1.bf16.msra.mxu0 %v4514
    %5097 = vmatprep.subr.bf16.mxu0 %v4519
    %5098 = vmatpush1.bf16.msra.mxu0 %v4518
    %5099 = vmatprep.subr.bf16.mxu0 %v4523
    %5100 = vmatpush1.bf16.msra.mxu0 %v4522
    %5101 = vmatprep.subr.bf16.mxu0 %v4527
    %5102 = vmatpush1.bf16.msra.mxu0 %v4526
    %5103 = vmatprep.mubr.bf16.mxu0 %v3225
    %5104 = vmatmul.mubr.bf16.gmra.mrb[0].mxu0 %v3224
    %v5105 = vpop.f32.mrb[0].mxu0
    %v5106 = vadd.f32 %v5065, %v5105
    %v5107 = vpop.f32.mrb[0].mxu0
    %v5108 = vadd.f32 %v5067, %v5107
    %v5109 = vpop.f32.mrb[0].mxu0
    %v5110 = vpop.f32.mrb[0].mxu0
    %5111 = vdwg.mxu0
    %v5112 = vmul.f32 %v4942, 0.2
    %v5113 = vmul.f32 %v4944, 0.2
    %v5114 = vmul.f32 %v5106, 0.2
    %v5115 = vmul.f32 %v5108, 0.2
    %v5116 = vmax.f32 %v4942, %v5112
    %v5117 = vmax.f32 %v4944, %v5113
    %v5118 = vmax.f32 %v5106, %v5114
    %v5119 = vmax.f32 %v5108, %v5115
    %v5120 = vpack.c.bf16 %v5116, %v5116
    %v5121 = vpack.c.bf16 %v5117, %v5117
    %v5122 = vpack.c.bf16 %v5118, %v5118
    %v5123 = vpack.c.bf16 %v5119, %v5119
    %v5124 = vld [vmem:[#allocation11] sm:$0xff]
    %v5125 = vld [vmem:[#allocation11 + $0x8] sm:$0xff]
    %v5126 = vld [vmem:[#allocation11 + $0x10] sm:$0xff]
    %v5127 = vld [vmem:[#allocation11 + $0x18] sm:$0xff]
    %v5128 = vld [vmem:[#allocation11 + $0x20] sm:$0xff]
    %v5129 = vld [vmem:[#allocation11 + $0x28] sm:$0xff]
    %v5130 = vld [vmem:[#allocation11 + $0x30] sm:$0xff]
    %v5131 = vld [vmem:[#allocation11 + $0x38] sm:$0xff]
    %v5132 = vld [vmem:[#allocation11 + $0x40] sm:$0xff]
    %v5133 = vld [vmem:[#allocation11 + $0x48] sm:$0xff]
    %v5134 = vld [vmem:[#allocation11 + $0x50] sm:$0xff]
    %v5135 = vld [vmem:[#allocation11 + $0x58] sm:$0xff]
    %v5136 = vld [vmem:[#allocation11 + $0x60] sm:$0xff]
    %v5137 = vld [vmem:[#allocation11 + $0x68] sm:$0xff]
    %v5138 = vld [vmem:[#allocation11 + $0x70] sm:$0xff]
    %v5139 = vld [vmem:[#allocation11 + $0x78] sm:$0xff]
    %v5140 = vld [vmem:[#allocation11 + $0x80] sm:$0xff]
    %v5141 = vld [vmem:[#allocation11 + $0x88] sm:$0xff]
    %v5142 = vld [vmem:[#allocation11 + $0x90] sm:$0xff]
    %v5143 = vld [vmem:[#allocation11 + $0x98] sm:$0xff]
    %v5144 = vld [vmem:[#allocation11 + $0xa0] sm:$0xff]
    %v5145 = vld [vmem:[#allocation11 + $0xa8] sm:$0xff]
    %v5146 = vld [vmem:[#allocation11 + $0xb0] sm:$0xff]
    %v5147 = vld [vmem:[#allocation11 + $0xb8] sm:$0xff]
    %v5148 = vld [vmem:[#allocation11 + $0xc0] sm:$0xff]
    %v5149 = vld [vmem:[#allocation11 + $0xc8] sm:$0xff]
    %v5150 = vld [vmem:[#allocation11 + $0xd0] sm:$0xff]
    %v5151 = vld [vmem:[#allocation11 + $0xd8] sm:$0xff]
    %v5152 = vld [vmem:[#allocation11 + $0xe0] sm:$0xff]
    %v5153 = vld [vmem:[#allocation11 + $0xe8] sm:$0xff]
    %v5154 = vld [vmem:[#allocation11 + $0xf0] sm:$0xff]
    %v5155 = vld [vmem:[#allocation11 + $0xf8] sm:$0xff]
    %v5156 = vld [vmem:[#allocation11 + $0x100] sm:$0xff]
    %v5157 = vld [vmem:[#allocation11 + $0x108] sm:$0xff]
    %v5158 = vld [vmem:[#allocation11 + $0x110] sm:$0xff]
    %v5159 = vld [vmem:[#allocation11 + $0x118] sm:$0xff]
    %v5160 = vld [vmem:[#allocation11 + $0x120] sm:$0xff]
    %v5161 = vld [vmem:[#allocation11 + $0x128] sm:$0xff]
    %v5162 = vld [vmem:[#allocation11 + $0x130] sm:$0xff]
    %v5163 = vld [vmem:[#allocation11 + $0x138] sm:$0xff]
    %v5164 = vld [vmem:[#allocation11 + $0x140] sm:$0xff]
    %v5165 = vld [vmem:[#allocation11 + $0x148] sm:$0xff]
    %v5166 = vld [vmem:[#allocation11 + $0x150] sm:$0xff]
    %v5167 = vld [vmem:[#allocation11 + $0x158] sm:$0xff]
    %v5168 = vld [vmem:[#allocation11 + $0x160] sm:$0xff]
    %v5169 = vld [vmem:[#allocation11 + $0x168] sm:$0xff]
    %v5170 = vld [vmem:[#allocation11 + $0x170] sm:$0xff]
    %v5171 = vld [vmem:[#allocation11 + $0x178] sm:$0xff]
    %v5172 = vld [vmem:[#allocation11 + $0x180] sm:$0xff]
    %v5173 = vld [vmem:[#allocation11 + $0x188] sm:$0xff]
    %v5174 = vld [vmem:[#allocation11 + $0x190] sm:$0xff]
    %v5175 = vld [vmem:[#allocation11 + $0x198] sm:$0xff]
    %v5176 = vld [vmem:[#allocation11 + $0x1a0] sm:$0xff]
    %v5177 = vld [vmem:[#allocation11 + $0x1a8] sm:$0xff]
    %v5178 = vld [vmem:[#allocation11 + $0x1b0] sm:$0xff]
    %v5179 = vld [vmem:[#allocation11 + $0x1b8] sm:$0xff]
    %v5180 = vld [vmem:[#allocation11 + $0x1c0] sm:$0xff]
    %v5181 = vld [vmem:[#allocation11 + $0x1c8] sm:$0xff]
    %v5182 = vld [vmem:[#allocation11 + $0x1d0] sm:$0xff]
    %v5183 = vld [vmem:[#allocation11 + $0x1d8] sm:$0xff]
    %v5184 = vld [vmem:[#allocation11 + $0x1e0] sm:$0xff]
    %v5185 = vld [vmem:[#allocation11 + $0x1e8] sm:$0xff]
    %v5186 = vld [vmem:[#allocation11 + $0x1f0] sm:$0xff]
    %v5187 = vld [vmem:[#allocation11 + $0x1f8] sm:$0xff]
    %v5188 = vld [vmem:[#allocation13] sm:$0x3]
    %v5190 = vlaneseq
    %v5191 = vshrl.u32 %v5190, 7
    %v5192 = vsub.s32 0, %v5191
    %v5193 = vrot.slane %v5188, %v5192
    %v5194 = vlaneseq
    %v5195 = vshrl.u32 %v5194, 7
    %v5196 = vsub.s32 1, %v5195
    %v5197 = vrot.slane %v5188, %v5196
    %v5264 = vunpack.c.l.b16 %v5124
    %v5265 = vunpack.c.h.b16 %v5124
    %v5266 = vunpack.c.l.b16 %v5125
    %v5267 = vunpack.c.h.b16 %v5125
    %v5268 = vunpack.c.l.b16 %v5126
    %v5269 = vunpack.c.h.b16 %v5126
    %v5270 = vunpack.c.l.b16 %v5127
    %v5271 = vunpack.c.h.b16 %v5127
    %v5272 = vunpack.c.l.b16 %v5128
    %v5273 = vunpack.c.h.b16 %v5128
    %v5274 = vunpack.c.l.b16 %v5129
    %v5275 = vunpack.c.h.b16 %v5129
    %v5276 = vunpack.c.l.b16 %v5130
    %v5277 = vunpack.c.h.b16 %v5130
    %v5278 = vunpack.c.l.b16 %v5131
    %v5279 = vunpack.c.h.b16 %v5131
    %v5280 = vunpack.c.l.b16 %v5132
    %v5281 = vunpack.c.h.b16 %v5132
    %v5282 = vunpack.c.l.b16 %v5133
    %v5283 = vunpack.c.h.b16 %v5133
    %v5284 = vunpack.c.l.b16 %v5134
    %v5285 = vunpack.c.h.b16 %v5134
    %v5286 = vunpack.c.l.b16 %v5135
    %v5287 = vunpack.c.h.b16 %v5135
    %v5288 = vunpack.c.l.b16 %v5136
    %v5289 = vunpack.c.h.b16 %v5136
    %v5290 = vunpack.c.l.b16 %v5137
    %v5291 = vunpack.c.h.b16 %v5137
    %v5292 = vunpack.c.l.b16 %v5138
    %v5293 = vunpack.c.h.b16 %v5138
    %v5294 = vunpack.c.l.b16 %v5139
    %v5295 = vunpack.c.h.b16 %v5139
    %v5296 = vunpack.c.l.b16 %v5140
    %v5297 = vunpack.c.h.b16 %v5140
    %v5298 = vunpack.c.l.b16 %v5141
    %v5299 = vunpack.c.h.b16 %v5141
    %v5300 = vunpack.c.l.b16 %v5142
    %v5301 = vunpack.c.h.b16 %v5142
    %v5302 = vunpack.c.l.b16 %v5143
    %v5303 = vunpack.c.h.b16 %v5143
    %v5304 = vunpack.c.l.b16 %v5144
    %v5305 = vunpack.c.h.b16 %v5144
    %v5306 = vunpack.c.l.b16 %v5145
    %v5307 = vunpack.c.h.b16 %v5145
    %v5308 = vunpack.c.l.b16 %v5146
    %v5309 = vunpack.c.h.b16 %v5146
    %v5310 = vunpack.c.l.b16 %v5147
    %v5311 = vunpack.c.h.b16 %v5147
    %v5312 = vunpack.c.l.b16 %v5148
    %v5313 = vunpack.c.h.b16 %v5148
    %v5314 = vunpack.c.l.b16 %v5149
    %v5315 = vunpack.c.h.b16 %v5149
    %v5316 = vunpack.c.l.b16 %v5150
    %v5317 = vunpack.c.h.b16 %v5150
    %v5318 = vunpack.c.l.b16 %v5151
    %v5319 = vunpack.c.h.b16 %v5151
    %v5320 = vunpack.c.l.b16 %v5152
    %v5321 = vunpack.c.h.b16 %v5152
    %v5322 = vunpack.c.l.b16 %v5153
    %v5323 = vunpack.c.h.b16 %v5153
    %v5324 = vunpack.c.l.b16 %v5154
    %v5325 = vunpack.c.h.b16 %v5154
    %v5326 = vunpack.c.l.b16 %v5155
    %v5327 = vunpack.c.h.b16 %v5155
    %v5328 = vunpack.c.l.b16 %v5156
    %v5329 = vunpack.c.h.b16 %v5156
    %v5330 = vunpack.c.l.b16 %v5157
    %v5331 = vunpack.c.h.b16 %v5157
    %v5332 = vunpack.c.l.b16 %v5158
    %v5333 = vunpack.c.h.b16 %v5158
    %v5334 = vunpack.c.l.b16 %v5159
    %v5335 = vunpack.c.h.b16 %v5159
    %v5336 = vunpack.c.l.b16 %v5160
    %v5337 = vunpack.c.h.b16 %v5160
    %v5338 = vunpack.c.l.b16 %v5161
    %v5339 = vunpack.c.h.b16 %v5161
    %v5340 = vunpack.c.l.b16 %v5162
    %v5341 = vunpack.c.h.b16 %v5162
    %v5342 = vunpack.c.l.b16 %v5163
    %v5343 = vunpack.c.h.b16 %v5163
    %v5344 = vunpack.c.l.b16 %v5164
    %v5345 = vunpack.c.h.b16 %v5164
    %v5346 = vunpack.c.l.b16 %v5165
    %v5347 = vunpack.c.h.b16 %v5165
    %v5348 = vunpack.c.l.b16 %v5166
    %v5349 = vunpack.c.h.b16 %v5166
    %v5350 = vunpack.c.l.b16 %v5167
    %v5351 = vunpack.c.h.b16 %v5167
    %v5352 = vunpack.c.l.b16 %v5168
    %v5353 = vunpack.c.h.b16 %v5168
    %v5354 = vunpack.c.l.b16 %v5169
    %v5355 = vunpack.c.h.b16 %v5169
    %v5356 = vunpack.c.l.b16 %v5170
    %v5357 = vunpack.c.h.b16 %v5170
    %v5358 = vunpack.c.l.b16 %v5171
    %v5359 = vunpack.c.h.b16 %v5171
    %v5360 = vunpack.c.l.b16 %v5172
    %v5361 = vunpack.c.h.b16 %v5172
    %v5362 = vunpack.c.l.b16 %v5173
    %v5363 = vunpack.c.h.b16 %v5173
    %v5364 = vunpack.c.l.b16 %v5174
    %v5365 = vunpack.c.h.b16 %v5174
    %v5366 = vunpack.c.l.b16 %v5175
    %v5367 = vunpack.c.h.b16 %v5175
    %v5368 = vunpack.c.l.b16 %v5176
    %v5369 = vunpack.c.h.b16 %v5176
    %v5370 = vunpack.c.l.b16 %v5177
    %v5371 = vunpack.c.h.b16 %v5177
    %v5372 = vunpack.c.l.b16 %v5178
    %v5373 = vunpack.c.h.b16 %v5178
    %v5374 = vunpack.c.l.b16 %v5179
    %v5375 = vunpack.c.h.b16 %v5179
    %v5376 = vunpack.c.l.b16 %v5180
    %v5377 = vunpack.c.h.b16 %v5180
    %v5378 = vunpack.c.l.b16 %v5181
    %v5379 = vunpack.c.h.b16 %v5181
    %v5380 = vunpack.c.l.b16 %v5182
    %v5381 = vunpack.c.h.b16 %v5182
    %v5382 = vunpack.c.l.b16 %v5183
    %v5383 = vunpack.c.h.b16 %v5183
    %v5384 = vunpack.c.l.b16 %v5184
    %v5385 = vunpack.c.h.b16 %v5184
    %v5386 = vunpack.c.l.b16 %v5185
    %v5387 = vunpack.c.h.b16 %v5185
    %v5388 = vunpack.c.l.b16 %v5186
    %v5389 = vunpack.c.h.b16 %v5186
    %v5390 = vunpack.c.l.b16 %v5187
    %v5391 = vunpack.c.h.b16 %v5187
    %v5392 = vpack.c.b16 %v5266, %v5264
    %v5393 = vpack.c.b16 %v5267, %v5265
    %v5394 = vpack.c.b16 %v5270, %v5268
    %v5395 = vpack.c.b16 %v5271, %v5269
    %v5396 = vpack.c.b16 %v5274, %v5272
    %v5397 = vpack.c.b16 %v5275, %v5273
    %v5398 = vpack.c.b16 %v5278, %v5276
    %v5399 = vpack.c.b16 %v5279, %v5277
    %v5400 = vpack.c.b16 %v5282, %v5280
    %v5401 = vpack.c.b16 %v5283, %v5281
    %v5402 = vpack.c.b16 %v5286, %v5284
    %v5403 = vpack.c.b16 %v5287, %v5285
    %v5404 = vpack.c.b16 %v5290, %v5288
    %v5405 = vpack.c.b16 %v5291, %v5289
    %v5406 = vpack.c.b16 %v5294, %v5292
    %v5407 = vpack.c.b16 %v5295, %v5293
    %v5408 = vpack.c.b16 %v5298, %v5296
    %v5409 = vpack.c.b16 %v5299, %v5297
    %v5410 = vpack.c.b16 %v5302, %v5300
    %v5411 = vpack.c.b16 %v5303, %v5301
    %v5412 = vpack.c.b16 %v5306, %v5304
    %v5413 = vpack.c.b16 %v5307, %v5305
    %v5414 = vpack.c.b16 %v5310, %v5308
    %v5415 = vpack.c.b16 %v5311, %v5309
    %v5416 = vpack.c.b16 %v5314, %v5312
    %v5417 = vpack.c.b16 %v5315, %v5313
    %v5418 = vpack.c.b16 %v5318, %v5316
    %v5419 = vpack.c.b16 %v5319, %v5317
    %v5420 = vpack.c.b16 %v5322, %v5320
    %v5421 = vpack.c.b16 %v5323, %v5321
    %v5422 = vpack.c.b16 %v5326, %v5324
    %v5423 = vpack.c.b16 %v5327, %v5325
    %v5424 = vpack.c.b16 %v5330, %v5328
    %v5425 = vpack.c.b16 %v5331, %v5329
    %v5426 = vpack.c.b16 %v5334, %v5332
    %v5427 = vpack.c.b16 %v5335, %v5333
    %v5428 = vpack.c.b16 %v5338, %v5336
    %v5429 = vpack.c.b16 %v5339, %v5337
    %v5430 = vpack.c.b16 %v5342, %v5340
    %v5431 = vpack.c.b16 %v5343, %v5341
    %v5432 = vpack.c.b16 %v5346, %v5344
    %v5433 = vpack.c.b16 %v5347, %v5345
    %v5434 = vpack.c.b16 %v5350, %v5348
    %v5435 = vpack.c.b16 %v5351, %v5349
    %v5436 = vpack.c.b16 %v5354, %v5352
    %v5437 = vpack.c.b16 %v5355, %v5353
    %v5438 = vpack.c.b16 %v5358, %v5356
    %v5439 = vpack.c.b16 %v5359, %v5357
    %v5440 = vpack.c.b16 %v5362, %v5360
    %v5441 = vpack.c.b16 %v5363, %v5361
    %v5442 = vpack.c.b16 %v5366, %v5364
    %v5443 = vpack.c.b16 %v5367, %v5365
    %v5444 = vpack.c.b16 %v5370, %v5368
    %v5445 = vpack.c.b16 %v5371, %v5369
    %v5446 = vpack.c.b16 %v5374, %v5372
    %v5447 = vpack.c.b16 %v5375, %v5373
    %v5448 = vpack.c.b16 %v5378, %v5376
    %v5449 = vpack.c.b16 %v5379, %v5377
    %v5450 = vpack.c.b16 %v5382, %v5380
    %v5451 = vpack.c.b16 %v5383, %v5381
    %v5452 = vpack.c.b16 %v5386, %v5384
    %v5453 = vpack.c.b16 %v5387, %v5385
    %v5454 = vpack.c.b16 %v5390, %v5388
    %v5455 = vpack.c.b16 %v5391, %v5389
    %5520 = vmatprep.subr.bf16.mxu0 %v5393
    %5521 = vmatpush1.bf16.msra.mxu0 %v5392
    %5522 = vmatprep.subr.bf16.mxu0 %v5395
    %5523 = vmatpush1.bf16.msra.mxu0 %v5394
    %5524 = vmatprep.subr.bf16.mxu0 %v5397
    %5525 = vmatpush1.bf16.msra.mxu0 %v5396
    %5526 = vmatprep.subr.bf16.mxu0 %v5399
    %5527 = vmatpush1.bf16.msra.mxu0 %v5398
    %5528 = vmatprep.subr.bf16.mxu0 %v5401
    %5529 = vmatpush1.bf16.msra.mxu0 %v5400
    %5530 = vmatprep.subr.bf16.mxu0 %v5403
    %5531 = vmatpush1.bf16.msra.mxu0 %v5402
    %5532 = vmatprep.subr.bf16.mxu0 %v5405
    %5533 = vmatpush1.bf16.msra.mxu0 %v5404
    %5534 = vmatprep.subr.bf16.mxu0 %v5407
    %5535 = vmatpush1.bf16.msra.mxu0 %v5406
    %5536 = vmatprep.subr.bf16.mxu0 %v5409
    %5537 = vmatpush1.bf16.msra.mxu0 %v5408
    %5538 = vmatprep.subr.bf16.mxu0 %v5411
    %5539 = vmatpush1.bf16.msra.mxu0 %v5410
    %5540 = vmatprep.subr.bf16.mxu0 %v5413
    %5541 = vmatpush1.bf16.msra.mxu0 %v5412
    %5542 = vmatprep.subr.bf16.mxu0 %v5415
    %5543 = vmatpush1.bf16.msra.mxu0 %v5414
    %5544 = vmatprep.subr.bf16.mxu0 %v5417
    %5545 = vmatpush1.bf16.msra.mxu0 %v5416
    %5546 = vmatprep.subr.bf16.mxu0 %v5419
    %5547 = vmatpush1.bf16.msra.mxu0 %v5418
    %5548 = vmatprep.subr.bf16.mxu0 %v5421
    %5549 = vmatpush1.bf16.msra.mxu0 %v5420
    %5550 = vmatprep.subr.bf16.mxu0 %v5423
    %5551 = vmatpush1.bf16.msra.mxu0 %v5422
    %5552 = vmatprep.mubr.bf16.mxu0 %v5121
    %5553 = vmatmul.mubr.bf16.gmra.mrb[0].mxu0 %v5120
    %v5554 = vpop.f32.mrb[0].mxu0
    %v5555 = vadd.f32 %v5193, %v5554
    %v5556 = vpop.f32.mrb[0].mxu0
    %v5557 = vadd.f32 %v5197, %v5556
    %v5558 = vpop.f32.mrb[0].mxu0
    %v5559 = vpop.f32.mrb[0].mxu0
    %5560 = vdwg.mxu0
    %5561 = vmatprep.subr.bf16.mxu0 %v5425
    %5562 = vmatpush1.bf16.msra.mxu0 %v5424
    %5563 = vmatprep.subr.bf16.mxu0 %v5427
    %5564 = vmatpush1.bf16.msra.mxu0 %v5426
    %5565 = vmatprep.subr.bf16.mxu0 %v5429
    %5566 = vmatpush1.bf16.msra.mxu0 %v5428
    %5567 = vmatprep.subr.bf16.mxu0 %v5431
    %5568 = vmatpush1.bf16.msra.mxu0 %v5430
    %5569 = vmatprep.subr.bf16.mxu0 %v5433
    %5570 = vmatpush1.bf16.msra.mxu0 %v5432
    %5571 = vmatprep.subr.bf16.mxu0 %v5435
    %5572 = vmatpush1.bf16.msra.mxu0 %v5434
    %5573 = vmatprep.subr.bf16.mxu0 %v5437
    %5574 = vmatpush1.bf16.msra.mxu0 %v5436
    %5575 = vmatprep.subr.bf16.mxu0 %v5439
    %5576 = vmatpush1.bf16.msra.mxu0 %v5438
    %5577 = vmatprep.subr.bf16.mxu0 %v5441
    %5578 = vmatpush1.bf16.msra.mxu0 %v5440
    %5579 = vmatprep.subr.bf16.mxu0 %v5443
    %5580 = vmatpush1.bf16.msra.mxu0 %v5442
    %5581 = vmatprep.subr.bf16.mxu0 %v5445
    %5582 = vmatpush1.bf16.msra.mxu0 %v5444
    %5583 = vmatprep.subr.bf16.mxu0 %v5447
    %5584 = vmatpush1.bf16.msra.mxu0 %v5446
    %5585 = vmatprep.subr.bf16.mxu0 %v5449
    %5586 = vmatpush1.bf16.msra.mxu0 %v5448
    %5587 = vmatprep.subr.bf16.mxu0 %v5451
    %5588 = vmatpush1.bf16.msra.mxu0 %v5450
    %5589 = vmatprep.subr.bf16.mxu0 %v5453
    %5590 = vmatpush1.bf16.msra.mxu0 %v5452
    %5591 = vmatprep.subr.bf16.mxu0 %v5455
    %5592 = vmatpush1.bf16.msra.mxu0 %v5454
    %5593 = vmatprep.mubr.bf16.mxu0 %v5123
    %5594 = vmatmul.mubr.bf16.gmra.mrb[0].mxu0 %v5122
    %v5595 = vpop.f32.mrb[0].mxu0
    %v5596 = vadd.f32 %v5555, %v5595
    %v5597 = vpop.f32.mrb[0].mxu0
    %v5598 = vadd.f32 %v5557, %v5597
    %v5599 = vpop.f32.mrb[0].mxu0
    %v5600 = vpop.f32.mrb[0].mxu0
    %5601 = vdwg.mxu0
    %v5602 = vmul.f32 %v5596, 0.2
    %v5603 = vmul.f32 %v5598, 0.2
    %v5604 = vmax.f32 %v5596, %v5602
    %v5605 = vmax.f32 %v5598, %v5603
    %v5606 = vpack.c.bf16 %v5604, %v5604
    %v5607 = vpack.c.bf16 %v5605, %v5605
    %v5608 = vunpack.c.l.bf16 %v5606
    %v5609 = vunpack.c.l.bf16 %v5607
    %v5610 = vld [vmem:[#allocation14] sm:$0x3]
    %v5611 = vunpack.c.l.bf16 %v5610
    %v5613 = vlaneseq
    %v5614 = vshrl.u32 %v5613, 7
    %v5615 = vsub.s32 0, %v5614
    %v5616 = vrot.slane %v5611, %v5615
    %v5617 = vlaneseq
    %v5618 = vshrl.u32 %v5617, 7
    %v5619 = vsub.s32 2, %v5618
    %v5620 = vrot.slane %v5611, %v5619
    %v5623 = vlaneseq
    %v5624 = vshrl.u32 %v5623, 7
    %v5625 = vsub.s32 0, %v5624
    %v5626 = vrot.slane %v5616, %v5625
    %v5627 = vlaneseq
    %v5628 = vshrl.u32 %v5627, 7
    %v5629 = vsub.s32 0, %v5628
    %v5630 = vrot.slane %v5620, %v5629
    %v5631 = vmul.f32 %v5608, %v5626
    %v5632 = vmul.f32 %v5609, %v5630
    %v5633 = vadd.f32 %v5631, %v5632
    %5634 = vadd.xlane.f32.xlu0 %v5633
    %v5635 = vpop.xlane.xlu0 %5634
    %v5636 = vld [vmem:[#allocation2] sm:$0x1]
    %v5638 = vlaneseq
    %v5639 = vshrl.u32 %v5638, 7
    %v5640 = vsub.s32 0, %v5639
    %v5641 = vrot.slane %v5636, %v5640
    %v5643 = vadd.f32 %v5635, %v5641
    %v5644 = vxor.u32 %v5643, 2147483648
    %v5645 = vmul.f32 %v5644, 1.442695
    %v5646 = vpow.pop %v5645
    %v5647 = vadd.f32 %v5646, 1.0
    %v5648 = vrcp.pop %v5647
    %v5649 = vmul.f32 1.0, %v5648
    %vm5650 = vcmask 7168
    %5651 = vst.msk [vmem:[%s9] sm:$0xff] %vm5650, %v5649
    // Predicated region
    $region70: #{tpu_custom_call.1} parent=1 // pred_check
      _
    $region71: #{tpu_custom_call.1} parent=1 // pred_check_branch
      %5653 = sbr.rel (0) target = $region73
    $region72: #{tpu_custom_call.1} parent=1 // pred_region
      _
    $region73: #{tpu_custom_call.1} parent=1 // pred_fallthru
      _
    // Predicated region
    $region74: #{tpu_custom_call.1} parent=1 // pred_check
      _
    $region75: #{tpu_custom_call.1} parent=1 // pred_check_branch
      %5655 = sbr.rel (0) target = $region77
    $region76: #{tpu_custom_call.1} parent=1 // pred_region
      _
    $region77: #{tpu_custom_call.1} parent=1 // pred_fallthru
      _
    %5656 = vsyncpa [#allocation4], 1
    %5657 = vsyncpa [#allocation6], 1
    %5658 = vsyncpa [#allocation9], 1
    %5659 = vsyncpa [#allocation12], 1
    %5660 = vsyncpa [#allocation15], 1

</llo_original>
